<compile_context>
chip_gen: v7x
topology: tpu7x:2x2x1
jax: 0.10.0
libtpu: 0.0.40
codegen_flags: <defaults>
</compile_context>

<pallas_src>
import jax
import jax.numpy as jnp
from jax import lax
from jax.experimental import pallas as pl
from jax.experimental.pallas import tpu as pltpu

BIDIRECTIONAL = True
NUM_LAYERS = 2
NUM_CLASSES = 2

_UNROLL = 2  # time steps per visible loop body


# ----------------------------------------------------------------------------
# Helpers
# ----------------------------------------------------------------------------
def _nbytes(shape, dtype):
    n = 1
    for s in shape:
        n *= int(s)
    return n * jnp.dtype(dtype).itemsize


def _vmem_limit_bytes(io_bytes, scratch_bytes):
    # double-buffered pipeline buffers for I/O tiles + resident scratch + slack
    need = 2 * io_bytes + scratch_bytes + (2 << 20)
    return int(min(max(need, 16 << 20), 64 << 20))


def _pick_batch_tile(batch, batch_tile):
    # block_shape second-to-last dim must be a multiple of 8 or the full dim
    if batch_tile <= batch and batch % batch_tile == 0 and batch_tile % 8 == 0:
        return batch_tile
    return batch


def _cell(gates, c, H):
    """LSTM cell with gate columns ordered (i, f, o, g). gates: (tB, 4H) f32."""
    sig = jax.nn.sigmoid(gates[:, : 3 * H])      # one wide EUP launch
    i = sig[:, 0 * H:1 * H]
    f = sig[:, 1 * H:2 * H]
    o = sig[:, 2 * H:3 * H]
    g = jnp.tanh(gates[:, 3 * H:])
    c_new = f * c + i * g
    h_new = o * jnp.tanh(c_new)
    return h_new, c_new


# ----------------------------------------------------------------------------
# Kernels
# ----------------------------------------------------------------------------
def bilstm_layer_kernel(x_ref, wih_ref, whh_f_ref, whh_b_ref, b_ref,
                        out_ref, gx_scr, hf_scr, cf_scr, hb_scr, cb_scr):
    """Fused forward+backward LSTM layer over a full sequence (one batch tile).

    x_ref:     (T, tB, In)  bf16  time-major input
    wih_ref:   (In, 8H)     bf16  [fwd 4H | bwd 4H], gate order (i,f,o,g)
    whh_*_ref: (H, 4H)      bf16
    b_ref:     (1, 8H)      f32   b_ih + b_hh, both directions
    out_ref:   (T, tB, 2H)  bf16  [fwd | bwd] hidden sequence
    gx_scr:    (T, tB, 8H)  f32   hoisted input projection
    h*/c*:     (tB, H)      f32   recurrent state
    """
    T, tB, In = x_ref.shape
    H = hf_scr.shape[1]

    # ---- hoisted input projection: one big MXU matmul for the whole tile ----
    x_flat = x_ref[...].reshape(T * tB, In)
    gx = jnp.dot(x_flat, wih_ref[...], preferred_element_type=jnp.float32)
    gx_scr[...] = (gx + b_ref[...]).reshape(T, tB, 8 * H)

    hf_scr[...] = jnp.zeros_like(hf_scr)
    cf_scr[...] = jnp.zeros_like(cf_scr)
    hb_scr[...] = jnp.zeros_like(hb_scr)
    cb_scr[...] = jnp.zeros_like(cb_scr)

    def step(s):
        tb = T - 1 - s
        # Interleave the two independent recurrent matmuls (fills MXU bubbles).
        gf = gx_scr[s, :, : 4 * H] + jnp.dot(
            hf_scr[...].astype(jnp.bfloat16), whh_f_ref[...],
            preferred_element_type=jnp.float32)
        gb = gx_scr[tb, :, 4 * H:] + jnp.dot(
            hb_scr[...].astype(jnp.bfloat16), whh_b_ref[...],
            preferred_element_type=jnp.float32)
        hf, cf = _cell(gf, cf_scr[...], H)
        hb, cb = _cell(gb, cb_scr[...], H)
        hf_scr[...] = hf
        cf_scr[...] = cf
        hb_scr[...] = hb
        cb_scr[...] = cb
        out_ref[s, :, :H] = hf.astype(out_ref.dtype)
        out_ref[tb, :, H:] = hb.astype(out_ref.dtype)

    def body(si, carry):
        for u in range(_UNROLL):
            step(si * _UNROLL + u)
        return carry

    n_blocks = T // _UNROLL
    lax.fori_loop(0, n_blocks, body, 0)
    for s in range(n_blocks * _UNROLL, T):   # static remainder
        step(s)


def bilstm_head_kernel(x_ref, wih_ref, whh_f_ref, whh_b_ref, b_ref,
                       wclf_ref, bclf_ref, out_ref,
                       gx_scr, hf_scr, cf_scr, hb_scr, cb_scr, mx_scr):
    """Last bidirectional LSTM layer fused with max-over-time, ReLU, Linear.

    x_ref:    (T, tB, 2H) bf16
    wclf_ref: (2H, C)     bf16   transposed classifier weight
    bclf_ref: (1, C)      f32
    out_ref:  (tB, C)     f32    logits
    mx_scr:   (tB, 2H)    f32    running max over time
    """
    T, tB, In = x_ref.shape
    H = hf_scr.shape[1]

    x_flat = x_ref[...].reshape(T * tB, In)
    gx = jnp.dot(x_flat, wih_ref[...], preferred_element_type=jnp.float32)
    gx_scr[...] = (gx + b_ref[...]).reshape(T, tB, 8 * H)

    hf_scr[...] = jnp.zeros_like(hf_scr)
    cf_scr[...] = jnp.zeros_like(cf_scr)
    hb_scr[...] = jnp.zeros_like(hb_scr)
    cb_scr[...] = jnp.zeros_like(cb_scr)
    mx_scr[...] = jnp.full_like(mx_scr, -jnp.inf)

    def step(s):
        tb = T - 1 - s
        gf = gx_scr[s, :, : 4 * H] + jnp.dot(
            hf_scr[...].astype(jnp.bfloat16), whh_f_ref[...],
            preferred_element_type=jnp.float32)
        gb = gx_scr[tb, :, 4 * H:] + jnp.dot(
            hb_scr[...].astype(jnp.bfloat16), whh_b_ref[...],
            preferred_element_type=jnp.float32)
        hf, cf = _cell(gf, cf_scr[...], H)
        hb, cb = _cell(gb, cb_scr[...], H)
        hf_scr[...] = hf
        cf_scr[...] = cf
        hb_scr[...] = hb
        cb_scr[...] = cb
        # Running max over time (time order irrelevant for max) -> no (T,B,2H)
        # sequence writeback for the last layer.
        mx_scr[:, :H] = jnp.maximum(mx_scr[:, :H], hf)
        mx_scr[:, H:] = jnp.maximum(mx_scr[:, H:], hb)

    def body(si, carry):
        for u in range(_UNROLL):
            step(si * _UNROLL + u)
        return carry

    n_blocks = T // _UNROLL
    lax.fori_loop(0, n_blocks, body, 0)
    for s in range(n_blocks * _UNROLL, T):
        step(s)

    # MaxPool1d(T) (+ trivial sum over the length-1 result) -> ReLU -> Linear
    pooled = jnp.maximum(mx_scr[...], 0.0)
    out_ref[...] = (
        jnp.dot(pooled.astype(jnp.bfloat16), wclf_ref[...],
                preferred_element_type=jnp.float32)
        + bclf_ref[...]
    )


# ----------------------------------------------------------------------------
# pallas_call wrappers (batch-tiled grid, parallel across TensorCores)
# ----------------------------------------------------------------------------
def run_bilstm_layer(x_tm, p, tB):
    T, B, In = x_tm.shape
    H = p["whh_f"].shape[0]
    nB = B // tB

    io_bytes = (_nbytes((T, tB, In), jnp.bfloat16)
                + _nbytes((In, 8 * H), jnp.bfloat16)
                + 2 * _nbytes((H, 4 * H), jnp.bfloat16)
                + _nbytes((1, 8 * H), jnp.float32)
                + _nbytes((T, tB, 2 * H), jnp.bfloat16))
    scratch_bytes = (_nbytes((T, tB, 8 * H), jnp.float32)
                     + 4 * _nbytes((tB, H), jnp.float32))

    return pl.pallas_call(
        bilstm_layer_kernel,
        out_shape=jax.ShapeDtypeStruct((T, B, 2 * H), jnp.bfloat16),
        grid=(nB,),
        in_specs=[
            pl.BlockSpec((T, tB, In), lambda b: (0, b, 0)),
            pl.BlockSpec((In, 8 * H), lambda b: (0, 0)),
            pl.BlockSpec((H, 4 * H), lambda b: (0, 0)),
            pl.BlockSpec((H, 4 * H), lambda b: (0, 0)),
            pl.BlockSpec((1, 8 * H), lambda b: (0, 0)),
        ],
        out_specs=pl.BlockSpec((T, tB, 2 * H), lambda b: (0, b, 0)),
        scratch_shapes=[
            pltpu.VMEM((T, tB, 8 * H), jnp.float32),   # hoisted input projection
            pltpu.VMEM((tB, H), jnp.float32),          # h fwd
            pltpu.VMEM((tB, H), jnp.float32),          # c fwd
            pltpu.VMEM((tB, H), jnp.float32),          # h bwd
            pltpu.VMEM((tB, H), jnp.float32),          # c bwd
        ],
        compiler_params=pltpu.CompilerParams(
            dimension_semantics=("parallel",),
            vmem_limit_bytes=_vmem_limit_bytes(io_bytes, scratch_bytes)),
    )(x_tm, p["wih_t"], p["whh_f"], p["whh_b"], p["b"])


def run_bilstm_head(x_tm, p, wclf_t, bclf, tB):
    T, B, In = x_tm.shape
    H = p["whh_f"].shape[0]
    C = wclf_t.shape[1]
    nB = B // tB

    io_bytes = (_nbytes((T, tB, In), jnp.bfloat16)
                + _nbytes((In, 8 * H), jnp.bfloat16)
                + 2 * _nbytes((H, 4 * H), jnp.bfloat16)
                + _nbytes((1, 8 * H), jnp.float32)
                + _nbytes((2 * H, C), jnp.bfloat16)
                + _nbytes((1, C), jnp.float32)
                + _nbytes((tB, C), jnp.float32))
    scratch_bytes = (_nbytes((T, tB, 8 * H), jnp.float32)
                     + 4 * _nbytes((tB, H), jnp.float32)
                     + _nbytes((tB, 2 * H), jnp.float32))

    return pl.pallas_call(
        bilstm_head_kernel,
        out_shape=jax.ShapeDtypeStruct((B, C), jnp.float32),
        grid=(nB,),
        in_specs=[
            pl.BlockSpec((T, tB, In), lambda b: (0, b, 0)),
            pl.BlockSpec((In, 8 * H), lambda b: (0, 0)),
            pl.BlockSpec((H, 4 * H), lambda b: (0, 0)),
            pl.BlockSpec((H, 4 * H), lambda b: (0, 0)),
            pl.BlockSpec((1, 8 * H), lambda b: (0, 0)),
            pl.BlockSpec((2 * H, C), lambda b: (0, 0)),
            pl.BlockSpec((1, C), lambda b: (0, 0)),
        ],
        out_specs=pl.BlockSpec((tB, C), lambda b: (b, 0)),
        scratch_shapes=[
            pltpu.VMEM((T, tB, 8 * H), jnp.float32),
            pltpu.VMEM((tB, H), jnp.float32),
            pltpu.VMEM((tB, H), jnp.float32),
            pltpu.VMEM((tB, H), jnp.float32),
            pltpu.VMEM((tB, H), jnp.float32),
            pltpu.VMEM((tB, 2 * H), jnp.float32),      # running time-max
        ],
        compiler_params=pltpu.CompilerParams(
            dimension_semantics=("parallel",),
            vmem_limit_bytes=_vmem_limit_bytes(io_bytes, scratch_bytes)),
    )(x_tm, p["wih_t"], p["whh_f"], p["whh_b"], p["b"], wclf_t, bclf)


# ----------------------------------------------------------------------------
# Full forward pass
# ----------------------------------------------------------------------------
def lstm_classifier_forward(tokens, params, *, batch_tile=8):
    B, T = tokens.shape
    tB = _pick_batch_tile(B, batch_tile)

    # Embedding gather directly into the time-major (T, B, E) layout the
    # kernels use (tokens.T is a tiny int transpose; avoids a (B,T,E) HBM pass).
    x = jnp.take(params["embeddings"], tokens.T, axis=0)       # (T, B, E) bf16

    # All but the last layer: full bidirectional output sequence.
    for layer in range(NUM_LAYERS - 1):
        x = run_bilstm_layer(x, params["lstm"][layer], tB)     # (T, B, 2H)

    # Last layer fused with max-over-time + ReLU + Linear.
    logits = run_bilstm_head(x, params["lstm"][NUM_LAYERS - 1],
                             params["clf_w_t"], params["clf_b"], tB)
    return logits                                              # (B, C) f32


# ----------------------------------------------------------------------------
# Deterministic parameter construction (shapes per nn.LSTM / nn.Linear)
# ----------------------------------------------------------------------------
def _reorder_gates(w):
    """Permute PyTorch gate blocks (i, f, g, o) -> kernel order (i, f, o, g)."""
    i, f, g, o = jnp.split(w, 4, axis=0)
    return jnp.concatenate([i, f, o, g], axis=0)


def init_params(key, vocab, emb_dim, hidden, layers, bidir, classes):
    assert bidir, "kernels are specialized for the module's bidirectional=True"
    num_dir = 2
    k = 1.0 / float(hidden) ** 0.5
    params = {}

    key, sub = jax.random.split(key)
    # "Pretrained" embeddings; stored bf16 so the gather streams bf16 directly.
    params["embeddings"] = jax.random.normal(
        sub, (vocab, emb_dim), jnp.float32).astype(jnp.bfloat16)

    lstm = []
    for layer in range(layers):
        in_dim = emb_dim if layer == 0 else num_dir * hidden
        wih_cols, b_cols, whh_dirs = [], [], []
        for _d in range(num_dir):
            key, k1, k2, k3, k4 = jax.random.split(key, 5)
            wih = jax.random.uniform(k1, (4 * hidden, in_dim), jnp.float32, -k, k)
            whh = jax.random.uniform(k2, (4 * hidden, hidden), jnp.float32, -k, k)
            bih = jax.random.uniform(k3, (4 * hidden,), jnp.float32, -k, k)
            bhh = jax.random.uniform(k4, (4 * hidden,), jnp.float32, -k, k)
            wih_cols.append(_reorder_gates(wih).T)             # (In, 4H)
            whh_dirs.append(_reorder_gates(whh).T)             # (H, 4H)
            b_cols.append(_reorder_gates(bih + bhh))           # (4H,)
        lstm.append(dict(
            wih_t=jnp.concatenate(wih_cols, axis=1).astype(jnp.bfloat16),  # (In, 8H)
            whh_f=whh_dirs[0].astype(jnp.bfloat16),                        # (H, 4H)
            whh_b=whh_dirs[1].astype(jnp.bfloat16),                        # (H, 4H)
            b=jnp.concatenate(b_cols).reshape(1, 8 * hidden)
                .astype(jnp.float32),                                      # (1, 8H)
        ))
    params["lstm"] = lstm

    key, k5, k6 = jax.random.split(key, 3)
    kc = 1.0 / float(num_dir * hidden) ** 0.5
    w_clf = jax.random.uniform(k5, (classes, num_dir * hidden), jnp.float32, -kc, kc)
    b_clf = jax.random.uniform(k6, (classes,), jnp.float32, -kc, kc)
    params["clf_w_t"] = w_clf.T.astype(jnp.bfloat16)           # (2H, C)
    params["clf_b"] = b_clf.reshape(1, classes)                # (1, C) f32
    return params


# TODO(synk): nn.Dropout / LSTM inter-layer dropout are train-time only and not
# applied in this eval-mode forward (self.dropout is also unused in forward).
# TODO(synk): padded/variable-length sequences would need per-example length
# masking (scalar prefetch) — the PyTorch reference also ignores padding here.

if __name__ == "__main__":
    B, T = 16, 16
    VOCAB, EMB_DIM = 50, 64
    HIDDEN = 32   # small test size; module default is 128 (fully parametric;
                  # multiples of 128 give lane-aligned gate slices/stores)

    key = jax.random.PRNGKey(0)
    key, ktok = jax.random.split(key)
    params = init_params(key, VOCAB, EMB_DIM, HIDDEN, NUM_LAYERS, BIDIRECTIONAL,
                         NUM_CLASSES)
    tokens = jax.random.randint(ktok, (B, T), 0, VOCAB)        # (B, T) int32

    fwd = jax.jit(lambda t: lstm_classifier_forward(t, params, batch_tile=8))
    logits = fwd(tokens)
    jax.block_until_ready(logits)
    assert logits.shape == (B, NUM_CLASSES)
    assert logits.dtype == jnp.float32
    print("KERNEL_OK")
</pallas_src>

<mosaic_0001>
module attributes {stable_mosaic.version = 11 : i64} {
  func.func @bilstm_layer_kernel(%arg0: i32, %arg1: memref<16x8x64xbf16, #tpu.memory_space<vmem>>, %arg2: memref<64x256xbf16, #tpu.memory_space<vmem>>, %arg3: memref<32x128xbf16, #tpu.memory_space<vmem>>, %arg4: memref<32x128xbf16, #tpu.memory_space<vmem>>, %arg5: memref<1x256xf32, #tpu.memory_space<vmem>>, %arg6: memref<16x8x64xbf16, #tpu.memory_space<vmem>>, %arg7: memref<16x8x256xf32, #tpu.memory_space<vmem>>, %arg8: memref<8x32xf32, #tpu.memory_space<vmem>>, %arg9: memref<8x32xf32, #tpu.memory_space<vmem>>, %arg10: memref<8x32xf32, #tpu.memory_space<vmem>>, %arg11: memref<8x32xf32, #tpu.memory_space<vmem>>) attributes {dimension_semantics = [#tpu.dimension_semantics<parallel>], iteration_bounds = array<i64: 2>, scalar_prefetch = 0 : i64, scratch_operands = 5 : i64, tpu.core_type = #tpu.core_type<tc>, window_params = [{transform_indices = @transform_0, window_bounds = array<i64: 16, 8, 64>}, {pipeline_mode = #tpu.pipeline_mode<synchronous>, transform_indices = @transform_1, window_bounds = array<i64: 64, 256>}, {pipeline_mode = #tpu.pipeline_mode<synchronous>, transform_indices = @transform_2, window_bounds = array<i64: 32, 128>}, {pipeline_mode = #tpu.pipeline_mode<synchronous>, transform_indices = @transform_3, window_bounds = array<i64: 32, 128>}, {pipeline_mode = #tpu.pipeline_mode<synchronous>, transform_indices = @transform_4, window_bounds = array<i64: 1, 256>}, {transform_indices = @transform_5, window_bounds = array<i64: 16, 8, 64>}]} {
    %c0 = arith.constant 0 : index
    %c0_0 = arith.constant 0 : index
    %c0_1 = arith.constant 0 : index
    %0 = vector.load %arg1[%c0, %c0_0, %c0_1] : memref<16x8x64xbf16, #tpu.memory_space<vmem>>, vector<16x8x64xbf16>
    %1 = vector.shape_cast %0 : vector<16x8x64xbf16> to vector<128x64xbf16>
    %c0_2 = arith.constant 0 : index
    %c0_3 = arith.constant 0 : index
    %2 = vector.load %arg2[%c0_2, %c0_3] : memref<64x256xbf16, #tpu.memory_space<vmem>>, vector<64x256xbf16>
    %cst = arith.constant dense<0.000000e+00> : vector<128x256xf32>
    %3 = tpu.matmul %1, %2, %cst {dimension_numbers = #tpu.dot_dimension_numbers<[1], [0], [0], [1], [0, 0, 1, 1], [], []>} : vector<128x64xbf16>, vector<64x256xbf16>, vector<128x256xf32> -> vector<128x256xf32>
    %c0_4 = arith.constant 0 : index
    %c0_5 = arith.constant 0 : index
    %4 = vector.load %arg5[%c0_4, %c0_5] : memref<1x256xf32, #tpu.memory_space<vmem>>, vector<1x256xf32>
    %5 = vector.broadcast %4 : vector<1x256xf32> to vector<128x256xf32>
    %6 = arith.addf %3, %5 : vector<128x256xf32>
    %7 = vector.shape_cast %6 : vector<128x256xf32> to vector<16x8x256xf32>
    %c0_6 = arith.constant 0 : index
    %c0_7 = arith.constant 0 : index
    %c0_8 = arith.constant 0 : index
    %8 = vector.load %arg7[%c0_6, %c0_7, %c0_8] : memref<16x8x256xf32, #tpu.memory_space<vmem>>, vector<16x8x256xf32>
    tpu.vector_store %arg7[%c0_6, %c0_7, %c0_8], %7 {strides = array<i32>} : memref<16x8x256xf32, #tpu.memory_space<vmem>>, vector<16x8x256xf32>,
    %cst_9 = arith.constant 0.000000e+00 : f32
    %9 = vector.broadcast %cst_9 : f32 to vector<8x32xf32>
    %c0_10 = arith.constant 0 : index
    %c0_11 = arith.constant 0 : index
    %10 = vector.load %arg8[%c0_10, %c0_11] : memref<8x32xf32, #tpu.memory_space<vmem>>, vector<8x32xf32>
    tpu.vector_store %arg8[%c0_10, %c0_11], %9 {strides = array<i32>} : memref<8x32xf32, #tpu.memory_space<vmem>>, vector<8x32xf32>,
    %cst_12 = arith.constant 0.000000e+00 : f32
    %11 = vector.broadcast %cst_12 : f32 to vector<8x32xf32>
    %c0_13 = arith.constant 0 : index
    %c0_14 = arith.constant 0 : index
    %12 = vector.load %arg9[%c0_13, %c0_14] : memref<8x32xf32, #tpu.memory_space<vmem>>, vector<8x32xf32>
    tpu.vector_store %arg9[%c0_13, %c0_14], %11 {strides = array<i32>} : memref<8x32xf32, #tpu.memory_space<vmem>>, vector<8x32xf32>,
    %cst_15 = arith.constant 0.000000e+00 : f32
    %13 = vector.broadcast %cst_15 : f32 to vector<8x32xf32>
    %c0_16 = arith.constant 0 : index
    %c0_17 = arith.constant 0 : index
    %14 = vector.load %arg10[%c0_16, %c0_17] : memref<8x32xf32, #tpu.memory_space<vmem>>, vector<8x32xf32>
    tpu.vector_store %arg10[%c0_16, %c0_17], %13 {strides = array<i32>} : memref<8x32xf32, #tpu.memory_space<vmem>>, vector<8x32xf32>,
    %cst_18 = arith.constant 0.000000e+00 : f32
    %15 = vector.broadcast %cst_18 : f32 to vector<8x32xf32>
    %c0_19 = arith.constant 0 : index
    %c0_20 = arith.constant 0 : index
    %16 = vector.load %arg11[%c0_19, %c0_20] : memref<8x32xf32, #tpu.memory_space<vmem>>, vector<8x32xf32>
    tpu.vector_store %arg11[%c0_19, %c0_20], %15 {strides = array<i32>} : memref<8x32xf32, #tpu.memory_space<vmem>>, vector<8x32xf32>,
    %c0_i32 = arith.constant 0 : i32
    %c8_i32 = arith.constant 8 : i32
    %17 = arith.addi %c0_i32, %c8_i32 : i32
    %c1_i32 = arith.constant 1 : i32
    scf.for %arg12 = %c0_i32 to %17 step %c1_i32  : i32 {
      %c2_i32 = arith.constant 2 : i32
      %18 = arith.muli %arg12, %c2_i32 : i32
      %c0_i32_22 = arith.constant 0 : i32
      %19 = arith.addi %18, %c0_i32_22 : i32
      %c15_i32 = arith.constant 15 : i32
      %20 = arith.subi %c15_i32, %19 : i32
      %21 = arith.index_cast %19 : i32 to index
      %c0_23 = arith.constant 0 : index
      %c0_24 = arith.constant 0 : index
      %22 = vector.load %arg7[%21, %c0_23, %c0_24] : memref<16x8x256xf32, #tpu.memory_space<vmem>>, vector<1x8x128xf32>
      %23 = vector.shape_cast %22 : vector<1x8x128xf32> to vector<8x128xf32>
      %c0_25 = arith.constant 0 : index
      %c0_26 = arith.constant 0 : index
      %24 = vector.load %arg8[%c0_25, %c0_26] : memref<8x32xf32, #tpu.memory_space<vmem>>, vector<8x32xf32>
      %25 = arith.truncf %24 : vector<8x32xf32> to vector<8x32xbf16>
      %c0_27 = arith.constant 0 : index
      %c0_28 = arith.constant 0 : index
      %26 = vector.load %arg3[%c0_27, %c0_28] : memref<32x128xbf16, #tpu.memory_space<vmem>>, vector<32x128xbf16>
      %cst_29 = arith.constant dense<0.000000e+00> : vector<8x128xf32>
      %27 = tpu.matmul %25, %26, %cst_29 {dimension_numbers = #tpu.dot_dimension_numbers<[1], [0], [0], [1], [0, 0, 1, 1], [], []>} : vector<8x32xbf16>, vector<32x128xbf16>, vector<8x128xf32> -> vector<8x128xf32>
      %28 = arith.addf %23, %27 : vector<8x128xf32>
      %29 = arith.index_cast %20 : i32 to index
      %c0_30 = arith.constant 0 : index
      %c128 = arith.constant 128 : index
      %30 = vector.load %arg7[%29, %c0_30, %c128] : memref<16x8x256xf32, #tpu.memory_space<vmem>>, vector<1x8x128xf32>
      %31 = vector.shape_cast %30 : vector<1x8x128xf32> to vector<8x128xf32>
      %c0_31 = arith.constant 0 : index
      %c0_32 = arith.constant 0 : index
      %32 = vector.load %arg10[%c0_31, %c0_32] : memref<8x32xf32, #tpu.memory_space<vmem>>, vector<8x32xf32>
      %33 = arith.truncf %32 : vector<8x32xf32> to vector<8x32xbf16>
      %c0_33 = arith.constant 0 : index
      %c0_34 = arith.constant 0 : index
      %34 = vector.load %arg4[%c0_33, %c0_34] : memref<32x128xbf16, #tpu.memory_space<vmem>>, vector<32x128xbf16>
      %cst_35 = arith.constant dense<0.000000e+00> : vector<8x128xf32>
      %35 = tpu.matmul %33, %34, %cst_35 {dimension_numbers = #tpu.dot_dimension_numbers<[1], [0], [0], [1], [0, 0, 1, 1], [], []>} : vector<8x32xbf16>, vector<32x128xbf16>, vector<8x128xf32> -> vector<8x128xf32>
      %36 = arith.addf %31, %35 : vector<8x128xf32>
      %c0_36 = arith.constant 0 : index
      %c0_37 = arith.constant 0 : index
      %37 = vector.load %arg9[%c0_36, %c0_37] : memref<8x32xf32, #tpu.memory_space<vmem>>, vector<8x32xf32>
      %38 = vector.extract_strided_slice %28 {offsets = [0, 0], sizes = [8, 96], strides = [1, 1]} : vector<8x128xf32> to vector<8x96xf32>
      %39 = arith.negf %38 : vector<8x96xf32>
      %40 = math.exp %39 : vector<8x96xf32>
      %cst_38 = arith.constant 1.000000e+00 : f32
      %41 = vector.broadcast %cst_38 : f32 to vector<8x96xf32>
      %42 = arith.addf %41, %40 : vector<8x96xf32>
      %43 = arith.divf %41, %42 : vector<8x96xf32>
      %44 = vector.extract_strided_slice %43 {offsets = [0, 0], sizes = [8, 32], strides = [1, 1]} : vector<8x96xf32> to vector<8x32xf32>
      %45 = vector.extract_strided_slice %43 {offsets = [0, 32], sizes = [8, 32], strides = [1, 1]} : vector<8x96xf32> to vector<8x32xf32>
      %46 = vector.extract_strided_slice %43 {offsets = [0, 64], sizes = [8, 32], strides = [1, 1]} : vector<8x96xf32> to vector<8x32xf32>
      %47 = vector.extract_strided_slice %28 {offsets = [0, 96], sizes = [8, 32], strides = [1, 1]} : vector<8x128xf32> to vector<8x32xf32>
      %48 = math.tanh %47 : vector<8x32xf32>
      %49 = arith.mulf %45, %37 : vector<8x32xf32>
      %50 = arith.mulf %44, %48 : vector<8x32xf32>
      %51 = arith.addf %49, %50 : vector<8x32xf32>
      %52 = math.tanh %51 : vector<8x32xf32>
      %53 = arith.mulf %46, %52 : vector<8x32xf32>
      %c0_39 = arith.constant 0 : index
      %c0_40 = arith.constant 0 : index
      %54 = vector.load %arg11[%c0_39, %c0_40] : memref<8x32xf32, #tpu.memory_space<vmem>>, vector<8x32xf32>
      %55 = vector.extract_strided_slice %36 {offsets = [0, 0], sizes = [8, 96], strides = [1, 1]} : vector<8x128xf32> to vector<8x96xf32>
      %56 = arith.negf %55 : vector<8x96xf32>
      %57 = math.exp %56 : vector<8x96xf32>
      %cst_41 = arith.constant 1.000000e+00 : f32
      %58 = vector.broadcast %cst_41 : f32 to vector<8x96xf32>
      %59 = arith.addf %58, %57 : vector<8x96xf32>
      %60 = arith.divf %58, %59 : vector<8x96xf32>
      %61 = vector.extract_strided_slice %60 {offsets = [0, 0], sizes = [8, 32], strides = [1, 1]} : vector<8x96xf32> to vector<8x32xf32>
      %62 = vector.extract_strided_slice %60 {offsets = [0, 32], sizes = [8, 32], strides = [1, 1]} : vector<8x96xf32> to vector<8x32xf32>
      %63 = vector.extract_strided_slice %60 {offsets = [0, 64], sizes = [8, 32], strides = [1, 1]} : vector<8x96xf32> to vector<8x32xf32>
      %64 = vector.extract_strided_slice %36 {offsets = [0, 96], sizes = [8, 32], strides = [1, 1]} : vector<8x128xf32> to vector<8x32xf32>
      %65 = math.tanh %64 : vector<8x32xf32>
      %66 = arith.mulf %62, %54 : vector<8x32xf32>
      %67 = arith.mulf %61, %65 : vector<8x32xf32>
      %68 = arith.addf %66, %67 : vector<8x32xf32>
      %69 = math.tanh %68 : vector<8x32xf32>
      %70 = arith.mulf %63, %69 : vector<8x32xf32>
      %c0_42 = arith.constant 0 : index
      %c0_43 = arith.constant 0 : index
      %71 = vector.load %arg8[%c0_42, %c0_43] : memref<8x32xf32, #tpu.memory_space<vmem>>, vector<8x32xf32>
      tpu.vector_store %arg8[%c0_42, %c0_43], %53 {strides = array<i32>} : memref<8x32xf32, #tpu.memory_space<vmem>>, vector<8x32xf32>,
      %c0_44 = arith.constant 0 : index
      %c0_45 = arith.constant 0 : index
      %72 = vector.load %arg9[%c0_44, %c0_45] : memref<8x32xf32, #tpu.memory_space<vmem>>, vector<8x32xf32>
      tpu.vector_store %arg9[%c0_44, %c0_45], %51 {strides = array<i32>} : memref<8x32xf32, #tpu.memory_space<vmem>>, vector<8x32xf32>,
      %c0_46 = arith.constant 0 : index
      %c0_47 = arith.constant 0 : index
      %73 = vector.load %arg10[%c0_46, %c0_47] : memref<8x32xf32, #tpu.memory_space<vmem>>, vector<8x32xf32>
      tpu.vector_store %arg10[%c0_46, %c0_47], %70 {strides = array<i32>} : memref<8x32xf32, #tpu.memory_space<vmem>>, vector<8x32xf32>,
      %c0_48 = arith.constant 0 : index
      %c0_49 = arith.constant 0 : index
      %74 = vector.load %arg11[%c0_48, %c0_49] : memref<8x32xf32, #tpu.memory_space<vmem>>, vector<8x32xf32>
      tpu.vector_store %arg11[%c0_48, %c0_49], %68 {strides = array<i32>} : memref<8x32xf32, #tpu.memory_space<vmem>>, vector<8x32xf32>,
      %75 = arith.truncf %53 : vector<8x32xf32> to vector<8x32xbf16>
      %76 = arith.index_cast %19 : i32 to index
      %c0_50 = arith.constant 0 : index
      %c0_51 = arith.constant 0 : index
      %77 = vector.load %arg6[%76, %c0_50, %c0_51] : memref<16x8x64xbf16, #tpu.memory_space<vmem>>, vector<1x8x32xbf16>
      %78 = vector.shape_cast %77 : vector<1x8x32xbf16> to vector<8x32xbf16>
      %79 = vector.shape_cast %75 : vector<8x32xbf16> to vector<1x8x32xbf16>
      tpu.vector_store %arg6[%76, %c0_50, %c0_51], %79 {strides = array<i32>} : memref<16x8x64xbf16, #tpu.memory_space<vmem>>, vector<1x8x32xbf16>,
      %80 = arith.truncf %70 : vector<8x32xf32> to vector<8x32xbf16>
      %81 = arith.index_cast %20 : i32 to index
      %c0_52 = arith.constant 0 : index
      %c32 = arith.constant 32 : index
      %82 = vector.load %arg6[%81, %c0_52, %c32] : memref<16x8x64xbf16, #tpu.memory_space<vmem>>, vector<1x8x32xbf16>
      %83 = vector.shape_cast %82 : vector<1x8x32xbf16> to vector<8x32xbf16>
      %84 = vector.shape_cast %80 : vector<8x32xbf16> to vector<1x8x32xbf16>
      tpu.vector_store %arg6[%81, %c0_52, %c32], %84 {strides = array<i32>} : memref<16x8x64xbf16, #tpu.memory_space<vmem>>, vector<1x8x32xbf16>,
      %c2_i32_53 = arith.constant 2 : i32
      %85 = arith.muli %arg12, %c2_i32_53 : i32
      %c1_i32_54 = arith.constant 1 : i32
      %86 = arith.addi %85, %c1_i32_54 : i32
      %c15_i32_55 = arith.constant 15 : i32
      %87 = arith.subi %c15_i32_55, %86 : i32
      %88 = arith.index_cast %86 : i32 to index
      %c0_56 = arith.constant 0 : index
      %c0_57 = arith.constant 0 : index
      %89 = vector.load %arg7[%88, %c0_56, %c0_57] : memref<16x8x256xf32, #tpu.memory_space<vmem>>, vector<1x8x128xf32>
      %90 = vector.shape_cast %89 : vector<1x8x128xf32> to vector<8x128xf32>
      %c0_58 = arith.constant 0 : index
      %c0_59 = arith.constant 0 : index
      %91 = vector.load %arg8[%c0_58, %c0_59] : memref<8x32xf32, #tpu.memory_space<vmem>>, vector<8x32xf32>
      %92 = arith.truncf %91 : vector<8x32xf32> to vector<8x32xbf16>
      %c0_60 = arith.constant 0 : index
      %c0_61 = arith.constant 0 : index
      %93 = vector.load %arg3[%c0_60, %c0_61] : memref<32x128xbf16, #tpu.memory_space<vmem>>, vector<32x128xbf16>
      %cst_62 = arith.constant dense<0.000000e+00> : vector<8x128xf32>
      %94 = tpu.matmul %92, %93, %cst_62 {dimension_numbers = #tpu.dot_dimension_numbers<[1], [0], [0], [1], [0, 0, 1, 1], [], []>} : vector<8x32xbf16>, vector<32x128xbf16>, vector<8x128xf32> -> vector<8x128xf32>
      %95 = arith.addf %90, %94 : vector<8x128xf32>
      %96 = arith.index_cast %87 : i32 to index
      %c0_63 = arith.constant 0 : index
      %c128_64 = arith.constant 128 : index
      %97 = vector.load %arg7[%96, %c0_63, %c128_64] : memref<16x8x256xf32, #tpu.memory_space<vmem>>, vector<1x8x128xf32>
      %98 = vector.shape_cast %97 : vector<1x8x128xf32> to vector<8x128xf32>
      %c0_65 = arith.constant 0 : index
      %c0_66 = arith.constant 0 : index
      %99 = vector.load %arg10[%c0_65, %c0_66] : memref<8x32xf32, #tpu.memory_space<vmem>>, vector<8x32xf32>
      %100 = arith.truncf %99 : vector<8x32xf32> to vector<8x32xbf16>
      %c0_67 = arith.constant 0 : index
      %c0_68 = arith.constant 0 : index
      %101 = vector.load %arg4[%c0_67, %c0_68] : memref<32x128xbf16, #tpu.memory_space<vmem>>, vector<32x128xbf16>
      %cst_69 = arith.constant dense<0.000000e+00> : vector<8x128xf32>
      %102 = tpu.matmul %100, %101, %cst_69 {dimension_numbers = #tpu.dot_dimension_numbers<[1], [0], [0], [1], [0, 0, 1, 1], [], []>} : vector<8x32xbf16>, vector<32x128xbf16>, vector<8x128xf32> -> vector<8x128xf32>
      %103 = arith.addf %98, %102 : vector<8x128xf32>
      %c0_70 = arith.constant 0 : index
      %c0_71 = arith.constant 0 : index
      %104 = vector.load %arg9[%c0_70, %c0_71] : memref<8x32xf32, #tpu.memory_space<vmem>>, vector<8x32xf32>
      %105 = vector.extract_strided_slice %95 {offsets = [0, 0], sizes = [8, 96], strides = [1, 1]} : vector<8x128xf32> to vector<8x96xf32>
      %106 = arith.negf %105 : vector<8x96xf32>
      %107 = math.exp %106 : vector<8x96xf32>
      %cst_72 = arith.constant 1.000000e+00 : f32
      %108 = vector.broadcast %cst_72 : f32 to vector<8x96xf32>
      %109 = arith.addf %108, %107 : vector<8x96xf32>
      %110 = arith.divf %108, %109 : vector<8x96xf32>
      %111 = vector.extract_strided_slice %110 {offsets = [0, 0], sizes = [8, 32], strides = [1, 1]} : vector<8x96xf32> to vector<8x32xf32>
      %112 = vector.extract_strided_slice %110 {offsets = [0, 32], sizes = [8, 32], strides = [1, 1]} : vector<8x96xf32> to vector<8x32xf32>
      %113 = vector.extract_strided_slice %110 {offsets = [0, 64], sizes = [8, 32], strides = [1, 1]} : vector<8x96xf32> to vector<8x32xf32>
      %114 = vector.extract_strided_slice %95 {offsets = [0, 96], sizes = [8, 32], strides = [1, 1]} : vector<8x128xf32> to vector<8x32xf32>
      %115 = math.tanh %114 : vector<8x32xf32>
      %116 = arith.mulf %112, %104 : vector<8x32xf32>
      %117 = arith.mulf %111, %115 : vector<8x32xf32>
      %118 = arith.addf %116, %117 : vector<8x32xf32>
      %119 = math.tanh %118 : vector<8x32xf32>
      %120 = arith.mulf %113, %119 : vector<8x32xf32>
      %c0_73 = arith.constant 0 : index
      %c0_74 = arith.constant 0 : index
      %121 = vector.load %arg11[%c0_73, %c0_74] : memref<8x32xf32, #tpu.memory_space<vmem>>, vector<8x32xf32>
      %122 = vector.extract_strided_slice %103 {offsets = [0, 0], sizes = [8, 96], strides = [1, 1]} : vector<8x128xf32> to vector<8x96xf32>
      %123 = arith.negf %122 : vector<8x96xf32>
      %124 = math.exp %123 : vector<8x96xf32>
      %cst_75 = arith.constant 1.000000e+00 : f32
      %125 = vector.broadcast %cst_75 : f32 to vector<8x96xf32>
      %126 = arith.addf %125, %124 : vector<8x96xf32>
      %127 = arith.divf %125, %126 : vector<8x96xf32>
      %128 = vector.extract_strided_slice %127 {offsets = [0, 0], sizes = [8, 32], strides = [1, 1]} : vector<8x96xf32> to vector<8x32xf32>
      %129 = vector.extract_strided_slice %127 {offsets = [0, 32], sizes = [8, 32], strides = [1, 1]} : vector<8x96xf32> to vector<8x32xf32>
      %130 = vector.extract_strided_slice %127 {offsets = [0, 64], sizes = [8, 32], strides = [1, 1]} : vector<8x96xf32> to vector<8x32xf32>
      %131 = vector.extract_strided_slice %103 {offsets = [0, 96], sizes = [8, 32], strides = [1, 1]} : vector<8x128xf32> to vector<8x32xf32>
      %132 = math.tanh %131 : vector<8x32xf32>
      %133 = arith.mulf %129, %121 : vector<8x32xf32>
      %134 = arith.mulf %128, %132 : vector<8x32xf32>
      %135 = arith.addf %133, %134 : vector<8x32xf32>
      %136 = math.tanh %135 : vector<8x32xf32>
      %137 = arith.mulf %130, %136 : vector<8x32xf32>
      %c0_76 = arith.constant 0 : index
      %c0_77 = arith.constant 0 : index
      %138 = vector.load %arg8[%c0_76, %c0_77] : memref<8x32xf32, #tpu.memory_space<vmem>>, vector<8x32xf32>
      tpu.vector_store %arg8[%c0_76, %c0_77], %120 {strides = array<i32>} : memref<8x32xf32, #tpu.memory_space<vmem>>, vector<8x32xf32>,
      %c0_78 = arith.constant 0 : index
      %c0_79 = arith.constant 0 : index
      %139 = vector.load %arg9[%c0_78, %c0_79] : memref<8x32xf32, #tpu.memory_space<vmem>>, vector<8x32xf32>
      tpu.vector_store %arg9[%c0_78, %c0_79], %118 {strides = array<i32>} : memref<8x32xf32, #tpu.memory_space<vmem>>, vector<8x32xf32>,
      %c0_80 = arith.constant 0 : index
      %c0_81 = arith.constant 0 : index
      %140 = vector.load %arg10[%c0_80, %c0_81] : memref<8x32xf32, #tpu.memory_space<vmem>>, vector<8x32xf32>
      tpu.vector_store %arg10[%c0_80, %c0_81], %137 {strides = array<i32>} : memref<8x32xf32, #tpu.memory_space<vmem>>, vector<8x32xf32>,
      %c0_82 = arith.constant 0 : index
      %c0_83 = arith.constant 0 : index
      %141 = vector.load %arg11[%c0_82, %c0_83] : memref<8x32xf32, #tpu.memory_space<vmem>>, vector<8x32xf32>
      tpu.vector_store %arg11[%c0_82, %c0_83], %135 {strides = array<i32>} : memref<8x32xf32, #tpu.memory_space<vmem>>, vector<8x32xf32>,
      %142 = arith.truncf %120 : vector<8x32xf32> to vector<8x32xbf16>
      %143 = arith.index_cast %86 : i32 to index
      %c0_84 = arith.constant 0 : index
      %c0_85 = arith.constant 0 : index
      %144 = vector.load %arg6[%143, %c0_84, %c0_85] : memref<16x8x64xbf16, #tpu.memory_space<vmem>>, vector<1x8x32xbf16>
      %145 = vector.shape_cast %144 : vector<1x8x32xbf16> to vector<8x32xbf16>
      %146 = vector.shape_cast %142 : vector<8x32xbf16> to vector<1x8x32xbf16>
      tpu.vector_store %arg6[%143, %c0_84, %c0_85], %146 {strides = array<i32>} : memref<16x8x64xbf16, #tpu.memory_space<vmem>>, vector<1x8x32xbf16>,
      %147 = arith.truncf %137 : vector<8x32xf32> to vector<8x32xbf16>
      %148 = arith.index_cast %87 : i32 to index
      %c0_86 = arith.constant 0 : index
      %c32_87 = arith.constant 32 : index
      %149 = vector.load %arg6[%148, %c0_86, %c32_87] : memref<16x8x64xbf16, #tpu.memory_space<vmem>>, vector<1x8x32xbf16>
      %150 = vector.shape_cast %149 : vector<1x8x32xbf16> to vector<8x32xbf16>
      %151 = vector.shape_cast %147 : vector<8x32xbf16> to vector<1x8x32xbf16>
      tpu.vector_store %arg6[%148, %c0_86, %c32_87], %151 {strides = array<i32>} : memref<16x8x64xbf16, #tpu.memory_space<vmem>>, vector<1x8x32xbf16>,
    }
    %c8_i32_21 = arith.constant 8 : i32
    return
  }
  func.func @transform_0(%arg0: i32) -> (i32, i32, i32) {
    %c0_i32 = arith.constant 0 : i32
    %c0_i32_0 = arith.constant 0 : i32
    %c0_i32_1 = arith.constant 0 : i32
    return %c0_i32, %arg0, %c0_i32_0 : i32, i32, i32
  }
  func.func @transform_1(%arg0: i32) -> (i32, i32) {
    %c0_i32 = arith.constant 0 : i32
    %c0_i32_0 = arith.constant 0 : i32
    %c0_i32_1 = arith.constant 0 : i32
    return %c0_i32, %c0_i32_0 : i32, i32
  }
  func.func @transform_2(%arg0: i32) -> (i32, i32) {
    %c0_i32 = arith.constant 0 : i32
    %c0_i32_0 = arith.constant 0 : i32
    %c0_i32_1 = arith.constant 0 : i32
    return %c0_i32, %c0_i32_0 : i32, i32
  }
  func.func @transform_3(%arg0: i32) -> (i32, i32) {
    %c0_i32 = arith.constant 0 : i32
    %c0_i32_0 = arith.constant 0 : i32
    %c0_i32_1 = arith.constant 0 : i32
    return %c0_i32, %c0_i32_0 : i32, i32
  }
  func.func @transform_4(%arg0: i32) -> (i32, i32) {
    %c0_i32 = arith.constant 0 : i32
    %c0_i32_0 = arith.constant 0 : i32
    %c0_i32_1 = arith.constant 0 : i32
    return %c0_i32, %c0_i32_0 : i32, i32
  }
  func.func @transform_5(%arg0: i32) -> (i32, i32, i32) {
    %c0_i32 = arith.constant 0 : i32
    %c0_i32_0 = arith.constant 0 : i32
    %c0_i32_1 = arith.constant 0 : i32
    return %c0_i32, %arg0, %c0_i32_0 : i32, i32, i32
  }
}

module attributes {stable_mosaic.version = 11 : i64} {
  func.func @bilstm_head_kernel(%arg0: i32, %arg1: memref<16x8x64xbf16, #tpu.memory_space<vmem>>, %arg2: memref<64x256xbf16, #tpu.memory_space<vmem>>, %arg3: memref<32x128xbf16, #tpu.memory_space<vmem>>, %arg4: memref<32x128xbf16, #tpu.memory_space<vmem>>, %arg5: memref<1x256xf32, #tpu.memory_space<vmem>>, %arg6: memref<64x2xbf16, #tpu.memory_space<vmem>>, %arg7: memref<1x2xf32, #tpu.memory_space<vmem>>, %arg8: memref<8x2xf32, #tpu.memory_space<vmem>>, %arg9: memref<16x8x256xf32, #tpu.memory_space<vmem>>, %arg10: memref<8x32xf32, #tpu.memory_space<vmem>>, %arg11: memref<8x32xf32, #tpu.memory_space<vmem>>, %arg12: memref<8x32xf32, #tpu.memory_space<vmem>>, %arg13: memref<8x32xf32, #tpu.memory_space<vmem>>, %arg14: memref<8x64xf32, #tpu.memory_space<vmem>>) attributes {dimension_semantics = [#tpu.dimension_semantics<parallel>], iteration_bounds = array<i64: 2>, scalar_prefetch = 0 : i64, scratch_operands = 6 : i64, tpu.core_type = #tpu.core_type<tc>, window_params = [{transform_indices = @transform_0, window_bounds = array<i64: 16, 8, 64>}, {pipeline_mode = #tpu.pipeline_mode<synchronous>, transform_indices = @transform_1, window_bounds = array<i64: 64, 256>}, {pipeline_mode = #tpu.pipeline_mode<synchronous>, transform_indices = @transform_2, window_bounds = array<i64: 32, 128>}, {pipeline_mode = #tpu.pipeline_mode<synchronous>, transform_indices = @transform_3, window_bounds = array<i64: 32, 128>}, {pipeline_mode = #tpu.pipeline_mode<synchronous>, transform_indices = @transform_4, window_bounds = array<i64: 1, 256>}, {pipeline_mode = #tpu.pipeline_mode<synchronous>, transform_indices = @transform_5, window_bounds = array<i64: 64, 2>}, {pipeline_mode = #tpu.pipeline_mode<synchronous>, transform_indices = @transform_6, window_bounds = array<i64: 1, 2>}, {transform_indices = @transform_7, window_bounds = array<i64: 8, 2>}]} {
    %c0 = arith.constant 0 : index
    %c0_0 = arith.constant 0 : index
    %c0_1 = arith.constant 0 : index
    %0 = vector.load %arg1[%c0, %c0_0, %c0_1] : memref<16x8x64xbf16, #tpu.memory_space<vmem>>, vector<16x8x64xbf16>
    %1 = vector.shape_cast %0 : vector<16x8x64xbf16> to vector<128x64xbf16>
    %c0_2 = arith.constant 0 : index
    %c0_3 = arith.constant 0 : index
    %2 = vector.load %arg2[%c0_2, %c0_3] : memref<64x256xbf16, #tpu.memory_space<vmem>>, vector<64x256xbf16>
    %cst = arith.constant dense<0.000000e+00> : vector<128x256xf32>
    %3 = tpu.matmul %1, %2, %cst {dimension_numbers = #tpu.dot_dimension_numbers<[1], [0], [0], [1], [0, 0, 1, 1], [], []>} : vector<128x64xbf16>, vector<64x256xbf16>, vector<128x256xf32> -> vector<128x256xf32>
    %c0_4 = arith.constant 0 : index
    %c0_5 = arith.constant 0 : index
    %4 = vector.load %arg5[%c0_4, %c0_5] : memref<1x256xf32, #tpu.memory_space<vmem>>, vector<1x256xf32>
    %5 = vector.broadcast %4 : vector<1x256xf32> to vector<128x256xf32>
    %6 = arith.addf %3, %5 : vector<128x256xf32>
    %7 = vector.shape_cast %6 : vector<128x256xf32> to vector<16x8x256xf32>
    %c0_6 = arith.constant 0 : index
    %c0_7 = arith.constant 0 : index
    %c0_8 = arith.constant 0 : index
    %8 = vector.load %arg9[%c0_6, %c0_7, %c0_8] : memref<16x8x256xf32, #tpu.memory_space<vmem>>, vector<16x8x256xf32>
    tpu.vector_store %arg9[%c0_6, %c0_7, %c0_8], %7 {strides = array<i32>} : memref<16x8x256xf32, #tpu.memory_space<vmem>>, vector<16x8x256xf32>,
    %cst_9 = arith.constant 0.000000e+00 : f32
    %9 = vector.broadcast %cst_9 : f32 to vector<8x32xf32>
    %c0_10 = arith.constant 0 : index
    %c0_11 = arith.constant 0 : index
    %10 = vector.load %arg10[%c0_10, %c0_11] : memref<8x32xf32, #tpu.memory_space<vmem>>, vector<8x32xf32>
    tpu.vector_store %arg10[%c0_10, %c0_11], %9 {strides = array<i32>} : memref<8x32xf32, #tpu.memory_space<vmem>>, vector<8x32xf32>,
    %cst_12 = arith.constant 0.000000e+00 : f32
    %11 = vector.broadcast %cst_12 : f32 to vector<8x32xf32>
    %c0_13 = arith.constant 0 : index
    %c0_14 = arith.constant 0 : index
    %12 = vector.load %arg11[%c0_13, %c0_14] : memref<8x32xf32, #tpu.memory_space<vmem>>, vector<8x32xf32>
    tpu.vector_store %arg11[%c0_13, %c0_14], %11 {strides = array<i32>} : memref<8x32xf32, #tpu.memory_space<vmem>>, vector<8x32xf32>,
    %cst_15 = arith.constant 0.000000e+00 : f32
    %13 = vector.broadcast %cst_15 : f32 to vector<8x32xf32>
    %c0_16 = arith.constant 0 : index
    %c0_17 = arith.constant 0 : index
    %14 = vector.load %arg12[%c0_16, %c0_17] : memref<8x32xf32, #tpu.memory_space<vmem>>, vector<8x32xf32>
    tpu.vector_store %arg12[%c0_16, %c0_17], %13 {strides = array<i32>} : memref<8x32xf32, #tpu.memory_space<vmem>>, vector<8x32xf32>,
    %cst_18 = arith.constant 0.000000e+00 : f32
    %15 = vector.broadcast %cst_18 : f32 to vector<8x32xf32>
    %c0_19 = arith.constant 0 : index
    %c0_20 = arith.constant 0 : index
    %16 = vector.load %arg13[%c0_19, %c0_20] : memref<8x32xf32, #tpu.memory_space<vmem>>, vector<8x32xf32>
    tpu.vector_store %arg13[%c0_19, %c0_20], %15 {strides = array<i32>} : memref<8x32xf32, #tpu.memory_space<vmem>>, vector<8x32xf32>,
    %cst_21 = arith.constant 0xFF800000 : f32
    %17 = vector.broadcast %cst_21 : f32 to vector<8x64xf32>
    %c0_22 = arith.constant 0 : index
    %c0_23 = arith.constant 0 : index
    %18 = vector.load %arg14[%c0_22, %c0_23] : memref<8x64xf32, #tpu.memory_space<vmem>>, vector<8x64xf32>
    tpu.vector_store %arg14[%c0_22, %c0_23], %17 {strides = array<i32>} : memref<8x64xf32, #tpu.memory_space<vmem>>, vector<8x64xf32>,
    %c0_i32 = arith.constant 0 : i32
    %c8_i32 = arith.constant 8 : i32
    %19 = arith.addi %c0_i32, %c8_i32 : i32
    %c1_i32 = arith.constant 1 : i32
    scf.for %arg15 = %c0_i32 to %19 step %c1_i32  : i32 {
      %c2_i32 = arith.constant 2 : i32
      %30 = arith.muli %arg15, %c2_i32 : i32
      %c0_i32_35 = arith.constant 0 : i32
      %31 = arith.addi %30, %c0_i32_35 : i32
      %c15_i32 = arith.constant 15 : i32
      %32 = arith.subi %c15_i32, %31 : i32
      %33 = arith.index_cast %31 : i32 to index
      %c0_36 = arith.constant 0 : index
      %c0_37 = arith.constant 0 : index
      %34 = vector.load %arg9[%33, %c0_36, %c0_37] : memref<16x8x256xf32, #tpu.memory_space<vmem>>, vector<1x8x128xf32>
      %35 = vector.shape_cast %34 : vector<1x8x128xf32> to vector<8x128xf32>
      %c0_38 = arith.constant 0 : index
      %c0_39 = arith.constant 0 : index
      %36 = vector.load %arg10[%c0_38, %c0_39] : memref<8x32xf32, #tpu.memory_space<vmem>>, vector<8x32xf32>
      %37 = arith.truncf %36 : vector<8x32xf32> to vector<8x32xbf16>
      %c0_40 = arith.constant 0 : index
      %c0_41 = arith.constant 0 : index
      %38 = vector.load %arg3[%c0_40, %c0_41] : memref<32x128xbf16, #tpu.memory_space<vmem>>, vector<32x128xbf16>
      %cst_42 = arith.constant dense<0.000000e+00> : vector<8x128xf32>
      %39 = tpu.matmul %37, %38, %cst_42 {dimension_numbers = #tpu.dot_dimension_numbers<[1], [0], [0], [1], [0, 0, 1, 1], [], []>} : vector<8x32xbf16>, vector<32x128xbf16>, vector<8x128xf32> -> vector<8x128xf32>
      %40 = arith.addf %35, %39 : vector<8x128xf32>
      %41 = arith.index_cast %32 : i32 to index
      %c0_43 = arith.constant 0 : index
      %c128 = arith.constant 128 : index
      %42 = vector.load %arg9[%41, %c0_43, %c128] : memref<16x8x256xf32, #tpu.memory_space<vmem>>, vector<1x8x128xf32>
      %43 = vector.shape_cast %42 : vector<1x8x128xf32> to vector<8x128xf32>
      %c0_44 = arith.constant 0 : index
      %c0_45 = arith.constant 0 : index
      %44 = vector.load %arg12[%c0_44, %c0_45] : memref<8x32xf32, #tpu.memory_space<vmem>>, vector<8x32xf32>
      %45 = arith.truncf %44 : vector<8x32xf32> to vector<8x32xbf16>
      %c0_46 = arith.constant 0 : index
      %c0_47 = arith.constant 0 : index
      %46 = vector.load %arg4[%c0_46, %c0_47] : memref<32x128xbf16, #tpu.memory_space<vmem>>, vector<32x128xbf16>
      %cst_48 = arith.constant dense<0.000000e+00> : vector<8x128xf32>
      %47 = tpu.matmul %45, %46, %cst_48 {dimension_numbers = #tpu.dot_dimension_numbers<[1], [0], [0], [1], [0, 0, 1, 1], [], []>} : vector<8x32xbf16>, vector<32x128xbf16>, vector<8x128xf32> -> vector<8x128xf32>
      %48 = arith.addf %43, %47 : vector<8x128xf32>
      %c0_49 = arith.constant 0 : index
      %c0_50 = arith.constant 0 : index
      %49 = vector.load %arg11[%c0_49, %c0_50] : memref<8x32xf32, #tpu.memory_space<vmem>>, vector<8x32xf32>
      %50 = vector.extract_strided_slice %40 {offsets = [0, 0], sizes = [8, 96], strides = [1, 1]} : vector<8x128xf32> to vector<8x96xf32>
      %51 = arith.negf %50 : vector<8x96xf32>
      %52 = math.exp %51 : vector<8x96xf32>
      %cst_51 = arith.constant 1.000000e+00 : f32
      %53 = vector.broadcast %cst_51 : f32 to vector<8x96xf32>
      %54 = arith.addf %53, %52 : vector<8x96xf32>
      %55 = arith.divf %53, %54 : vector<8x96xf32>
      %56 = vector.extract_strided_slice %55 {offsets = [0, 0], sizes = [8, 32], strides = [1, 1]} : vector<8x96xf32> to vector<8x32xf32>
      %57 = vector.extract_strided_slice %55 {offsets = [0, 32], sizes = [8, 32], strides = [1, 1]} : vector<8x96xf32> to vector<8x32xf32>
      %58 = vector.extract_strided_slice %55 {offsets = [0, 64], sizes = [8, 32], strides = [1, 1]} : vector<8x96xf32> to vector<8x32xf32>
      %59 = vector.extract_strided_slice %40 {offsets = [0, 96], sizes = [8, 32], strides = [1, 1]} : vector<8x128xf32> to vector<8x32xf32>
      %60 = math.tanh %59 : vector<8x32xf32>
      %61 = arith.mulf %57, %49 : vector<8x32xf32>
      %62 = arith.mulf %56, %60 : vector<8x32xf32>
      %63 = arith.addf %61, %62 : vector<8x32xf32>
      %64 = math.tanh %63 : vector<8x32xf32>
      %65 = arith.mulf %58, %64 : vector<8x32xf32>
      %c0_52 = arith.constant 0 : index
      %c0_53 = arith.constant 0 : index
      %66 = vector.load %arg13[%c0_52, %c0_53] : memref<8x32xf32, #tpu.memory_space<vmem>>, vector<8x32xf32>
      %67 = vector.extract_strided_slice %48 {offsets = [0, 0], sizes = [8, 96], strides = [1, 1]} : vector<8x128xf32> to vector<8x96xf32>
      %68 = arith.negf %67 : vector<8x96xf32>
      %69 = math.exp %68 : vector<8x96xf32>
      %cst_54 = arith.constant 1.000000e+00 : f32
      %70 = vector.broadcast %cst_54 : f32 to vector<8x96xf32>
      %71 = arith.addf %70, %69 : vector<8x96xf32>
      %72 = arith.divf %70, %71 : vector<8x96xf32>
      %73 = vector.extract_strided_slice %72 {offsets = [0, 0], sizes = [8, 32], strides = [1, 1]} : vector<8x96xf32> to vector<8x32xf32>
      %74 = vector.extract_strided_slice %72 {offsets = [0, 32], sizes = [8, 32], strides = [1, 1]} : vector<8x96xf32> to vector<8x32xf32>
      %75 = vector.extract_strided_slice %72 {offsets = [0, 64], sizes = [8, 32], strides = [1, 1]} : vector<8x96xf32> to vector<8x32xf32>
      %76 = vector.extract_strided_slice %48 {offsets = [0, 96], sizes = [8, 32], strides = [1, 1]} : vector<8x128xf32> to vector<8x32xf32>
      %77 = math.tanh %76 : vector<8x32xf32>
      %78 = arith.mulf %74, %66 : vector<8x32xf32>
      %79 = arith.mulf %73, %77 : vector<8x32xf32>
      %80 = arith.addf %78, %79 : vector<8x32xf32>
      %81 = math.tanh %80 : vector<8x32xf32>
      %82 = arith.mulf %75, %81 : vector<8x32xf32>
      %c0_55 = arith.constant 0 : index
      %c0_56 = arith.constant 0 : index
      %83 = vector.load %arg10[%c0_55, %c0_56] : memref<8x32xf32, #tpu.memory_space<vmem>>, vector<8x32xf32>
      tpu.vector_store %arg10[%c0_55, %c0_56], %65 {strides = array<i32>} : memref<8x32xf32, #tpu.memory_space<vmem>>, vector<8x32xf32>,
      %c0_57 = arith.constant 0 : index
      %c0_58 = arith.constant 0 : index
      %84 = vector.load %arg11[%c0_57, %c0_58] : memref<8x32xf32, #tpu.memory_space<vmem>>, vector<8x32xf32>
      tpu.vector_store %arg11[%c0_57, %c0_58], %63 {strides = array<i32>} : memref<8x32xf32, #tpu.memory_space<vmem>>, vector<8x32xf32>,
      %c0_59 = arith.constant 0 : index
      %c0_60 = arith.constant 0 : index
      %85 = vector.load %arg12[%c0_59, %c0_60] : memref<8x32xf32, #tpu.memory_space<vmem>>, vector<8x32xf32>
      tpu.vector_store %arg12[%c0_59, %c0_60], %82 {strides = array<i32>} : memref<8x32xf32, #tpu.memory_space<vmem>>, vector<8x32xf32>,
      %c0_61 = arith.constant 0 : index
      %c0_62 = arith.constant 0 : index
      %86 = vector.load %arg13[%c0_61, %c0_62] : memref<8x32xf32, #tpu.memory_space<vmem>>, vector<8x32xf32>
      tpu.vector_store %arg13[%c0_61, %c0_62], %80 {strides = array<i32>} : memref<8x32xf32, #tpu.memory_space<vmem>>, vector<8x32xf32>,
      %c0_63 = arith.constant 0 : index
      %c0_64 = arith.constant 0 : index
      %87 = vector.load %arg14[%c0_63, %c0_64] : memref<8x64xf32, #tpu.memory_space<vmem>>, vector<8x32xf32>
      %88 = arith.maximumf %87, %65 : vector<8x32xf32>
      %c0_65 = arith.constant 0 : index
      %c0_66 = arith.constant 0 : index
      %89 = vector.load %arg14[%c0_65, %c0_66] : memref<8x64xf32, #tpu.memory_space<vmem>>, vector<8x32xf32>
      tpu.vector_store %arg14[%c0_65, %c0_66], %88 {strides = array<i32>} : memref<8x64xf32, #tpu.memory_space<vmem>>, vector<8x32xf32>,
      %c0_67 = arith.constant 0 : index
      %c32 = arith.constant 32 : index
      %90 = vector.load %arg14[%c0_67, %c32] : memref<8x64xf32, #tpu.memory_space<vmem>>, vector<8x32xf32>
      %91 = arith.maximumf %90, %82 : vector<8x32xf32>
      %c0_68 = arith.constant 0 : index
      %c32_69 = arith.constant 32 : index
      %92 = vector.load %arg14[%c0_68, %c32_69] : memref<8x64xf32, #tpu.memory_space<vmem>>, vector<8x32xf32>
      tpu.vector_store %arg14[%c0_68, %c32_69], %91 {strides = array<i32>} : memref<8x64xf32, #tpu.memory_space<vmem>>, vector<8x32xf32>,
      %c2_i32_70 = arith.constant 2 : i32
      %93 = arith.muli %arg15, %c2_i32_70 : i32
      %c1_i32_71 = arith.constant 1 : i32
      %94 = arith.addi %93, %c1_i32_71 : i32
      %c15_i32_72 = arith.constant 15 : i32
      %95 = arith.subi %c15_i32_72, %94 : i32
      %96 = arith.index_cast %94 : i32 to index
      %c0_73 = arith.constant 0 : index
      %c0_74 = arith.constant 0 : index
      %97 = vector.load %arg9[%96, %c0_73, %c0_74] : memref<16x8x256xf32, #tpu.memory_space<vmem>>, vector<1x8x128xf32>
      %98 = vector.shape_cast %97 : vector<1x8x128xf32> to vector<8x128xf32>
      %c0_75 = arith.constant 0 : index
      %c0_76 = arith.constant 0 : index
      %99 = vector.load %arg10[%c0_75, %c0_76] : memref<8x32xf32, #tpu.memory_space<vmem>>, vector<8x32xf32>
      %100 = arith.truncf %99 : vector<8x32xf32> to vector<8x32xbf16>
      %c0_77 = arith.constant 0 : index
      %c0_78 = arith.constant 0 : index
      %101 = vector.load %arg3[%c0_77, %c0_78] : memref<32x128xbf16, #tpu.memory_space<vmem>>, vector<32x128xbf16>
      %cst_79 = arith.constant dense<0.000000e+00> : vector<8x128xf32>
      %102 = tpu.matmul %100, %101, %cst_79 {dimension_numbers = #tpu.dot_dimension_numbers<[1], [0], [0], [1], [0, 0, 1, 1], [], []>} : vector<8x32xbf16>, vector<32x128xbf16>, vector<8x128xf32> -> vector<8x128xf32>
      %103 = arith.addf %98, %102 : vector<8x128xf32>
      %104 = arith.index_cast %95 : i32 to index
      %c0_80 = arith.constant 0 : index
      %c128_81 = arith.constant 128 : index
      %105 = vector.load %arg9[%104, %c0_80, %c128_81] : memref<16x8x256xf32, #tpu.memory_space<vmem>>, vector<1x8x128xf32>
      %106 = vector.shape_cast %105 : vector<1x8x128xf32> to vector<8x128xf32>
      %c0_82 = arith.constant 0 : index
      %c0_83 = arith.constant 0 : index
      %107 = vector.load %arg12[%c0_82, %c0_83] : memref<8x32xf32, #tpu.memory_space<vmem>>, vector<8x32xf32>
      %108 = arith.truncf %107 : vector<8x32xf32> to vector<8x32xbf16>
      %c0_84 = arith.constant 0 : index
      %c0_85 = arith.constant 0 : index
      %109 = vector.load %arg4[%c0_84, %c0_85] : memref<32x128xbf16, #tpu.memory_space<vmem>>, vector<32x128xbf16>
      %cst_86 = arith.constant dense<0.000000e+00> : vector<8x128xf32>
      %110 = tpu.matmul %108, %109, %cst_86 {dimension_numbers = #tpu.dot_dimension_numbers<[1], [0], [0], [1], [0, 0, 1, 1], [], []>} : vector<8x32xbf16>, vector<32x128xbf16>, vector<8x128xf32> -> vector<8x128xf32>
      %111 = arith.addf %106, %110 : vector<8x128xf32>
      %c0_87 = arith.constant 0 : index
      %c0_88 = arith.constant 0 : index
      %112 = vector.load %arg11[%c0_87, %c0_88] : memref<8x32xf32, #tpu.memory_space<vmem>>, vector<8x32xf32>
      %113 = vector.extract_strided_slice %103 {offsets = [0, 0], sizes = [8, 96], strides = [1, 1]} : vector<8x128xf32> to vector<8x96xf32>
      %114 = arith.negf %113 : vector<8x96xf32>
      %115 = math.exp %114 : vector<8x96xf32>
      %cst_89 = arith.constant 1.000000e+00 : f32
      %116 = vector.broadcast %cst_89 : f32 to vector<8x96xf32>
      %117 = arith.addf %116, %115 : vector<8x96xf32>
      %118 = arith.divf %116, %117 : vector<8x96xf32>
      %119 = vector.extract_strided_slice %118 {offsets = [0, 0], sizes = [8, 32], strides = [1, 1]} : vector<8x96xf32> to vector<8x32xf32>
      %120 = vector.extract_strided_slice %118 {offsets = [0, 32], sizes = [8, 32], strides = [1, 1]} : vector<8x96xf32> to vector<8x32xf32>
      %121 = vector.extract_strided_slice %118 {offsets = [0, 64], sizes = [8, 32], strides = [1, 1]} : vector<8x96xf32> to vector<8x32xf32>
      %122 = vector.extract_strided_slice %103 {offsets = [0, 96], sizes = [8, 32], strides = [1, 1]} : vector<8x128xf32> to vector<8x32xf32>
      %123 = math.tanh %122 : vector<8x32xf32>
      %124 = arith.mulf %120, %112 : vector<8x32xf32>
      %125 = arith.mulf %119, %123 : vector<8x32xf32>
      %126 = arith.addf %124, %125 : vector<8x32xf32>
      %127 = math.tanh %126 : vector<8x32xf32>
      %128 = arith.mulf %121, %127 : vector<8x32xf32>
      %c0_90 = arith.constant 0 : index
      %c0_91 = arith.constant 0 : index
      %129 = vector.load %arg13[%c0_90, %c0_91] : memref<8x32xf32, #tpu.memory_space<vmem>>, vector<8x32xf32>
      %130 = vector.extract_strided_slice %111 {offsets = [0, 0], sizes = [8, 96], strides = [1, 1]} : vector<8x128xf32> to vector<8x96xf32>
      %131 = arith.negf %130 : vector<8x96xf32>
      %132 = math.exp %131 : vector<8x96xf32>
      %cst_92 = arith.constant 1.000000e+00 : f32
      %133 = vector.broadcast %cst_92 : f32 to vector<8x96xf32>
      %134 = arith.addf %133, %132 : vector<8x96xf32>
      %135 = arith.divf %133, %134 : vector<8x96xf32>
      %136 = vector.extract_strided_slice %135 {offsets = [0, 0], sizes = [8, 32], strides = [1, 1]} : vector<8x96xf32> to vector<8x32xf32>
      %137 = vector.extract_strided_slice %135 {offsets = [0, 32], sizes = [8, 32], strides = [1, 1]} : vector<8x96xf32> to vector<8x32xf32>
      %138 = vector.extract_strided_slice %135 {offsets = [0, 64], sizes = [8, 32], strides = [1, 1]} : vector<8x96xf32> to vector<8x32xf32>
      %139 = vector.extract_strided_slice %111 {offsets = [0, 96], sizes = [8, 32], strides = [1, 1]} : vector<8x128xf32> to vector<8x32xf32>
      %140 = math.tanh %139 : vector<8x32xf32>
      %141 = arith.mulf %137, %129 : vector<8x32xf32>
      %142 = arith.mulf %136, %140 : vector<8x32xf32>
      %143 = arith.addf %141, %142 : vector<8x32xf32>
      %144 = math.tanh %143 : vector<8x32xf32>
      %145 = arith.mulf %138, %144 : vector<8x32xf32>
      %c0_93 = arith.constant 0 : index
      %c0_94 = arith.constant 0 : index
      %146 = vector.load %arg10[%c0_93, %c0_94] : memref<8x32xf32, #tpu.memory_space<vmem>>, vector<8x32xf32>
      tpu.vector_store %arg10[%c0_93, %c0_94], %128 {strides = array<i32>} : memref<8x32xf32, #tpu.memory_space<vmem>>, vector<8x32xf32>,
      %c0_95 = arith.constant 0 : index
      %c0_96 = arith.constant 0 : index
      %147 = vector.load %arg11[%c0_95, %c0_96] : memref<8x32xf32, #tpu.memory_space<vmem>>, vector<8x32xf32>
      tpu.vector_store %arg11[%c0_95, %c0_96], %126 {strides = array<i32>} : memref<8x32xf32, #tpu.memory_space<vmem>>, vector<8x32xf32>,
      %c0_97 = arith.constant 0 : index
      %c0_98 = arith.constant 0 : index
      %148 = vector.load %arg12[%c0_97, %c0_98] : memref<8x32xf32, #tpu.memory_space<vmem>>, vector<8x32xf32>
      tpu.vector_store %arg12[%c0_97, %c0_98], %145 {strides = array<i32>} : memref<8x32xf32, #tpu.memory_space<vmem>>, vector<8x32xf32>,
      %c0_99 = arith.constant 0 : index
      %c0_100 = arith.constant 0 : index
      %149 = vector.load %arg13[%c0_99, %c0_100] : memref<8x32xf32, #tpu.memory_space<vmem>>, vector<8x32xf32>
      tpu.vector_store %arg13[%c0_99, %c0_100], %143 {strides = array<i32>} : memref<8x32xf32, #tpu.memory_space<vmem>>, vector<8x32xf32>,
      %c0_101 = arith.constant 0 : index
      %c0_102 = arith.constant 0 : index
      %150 = vector.load %arg14[%c0_101, %c0_102] : memref<8x64xf32, #tpu.memory_space<vmem>>, vector<8x32xf32>
      %151 = arith.maximumf %150, %128 : vector<8x32xf32>
      %c0_103 = arith.constant 0 : index
      %c0_104 = arith.constant 0 : index
      %152 = vector.load %arg14[%c0_103, %c0_104] : memref<8x64xf32, #tpu.memory_space<vmem>>, vector<8x32xf32>
      tpu.vector_store %arg14[%c0_103, %c0_104], %151 {strides = array<i32>} : memref<8x64xf32, #tpu.memory_space<vmem>>, vector<8x32xf32>,
      %c0_105 = arith.constant 0 : index
      %c32_106 = arith.constant 32 : index
      %153 = vector.load %arg14[%c0_105, %c32_106] : memref<8x64xf32, #tpu.memory_space<vmem>>, vector<8x32xf32>
      %154 = arith.maximumf %153, %145 : vector<8x32xf32>
      %c0_107 = arith.constant 0 : index
      %c32_108 = arith.constant 32 : index
      %155 = vector.load %arg14[%c0_107, %c32_108] : memref<8x64xf32, #tpu.memory_space<vmem>>, vector<8x32xf32>
      tpu.vector_store %arg14[%c0_107, %c32_108], %154 {strides = array<i32>} : memref<8x64xf32, #tpu.memory_space<vmem>>, vector<8x32xf32>,
    }
    %c8_i32_24 = arith.constant 8 : i32
    %c0_25 = arith.constant 0 : index
    %c0_26 = arith.constant 0 : index
    %20 = vector.load %arg14[%c0_25, %c0_26] : memref<8x64xf32, #tpu.memory_space<vmem>>, vector<8x64xf32>
    %cst_27 = arith.constant 0.000000e+00 : f32
    %21 = vector.broadcast %cst_27 : f32 to vector<8x64xf32>
    %22 = arith.maximumf %20, %21 : vector<8x64xf32>
    %23 = arith.truncf %22 : vector<8x64xf32> to vector<8x64xbf16>
    %c0_28 = arith.constant 0 : index
    %c0_29 = arith.constant 0 : index
    %24 = vector.load %arg6[%c0_28, %c0_29] : memref<64x2xbf16, #tpu.memory_space<vmem>>, vector<64x2xbf16>
    %cst_30 = arith.constant dense<0.000000e+00> : vector<8x2xf32>
    %25 = tpu.matmul %23, %24, %cst_30 {dimension_numbers = #tpu.dot_dimension_numbers<[1], [0], [0], [1], [0, 0, 1, 1], [], []>} : vector<8x64xbf16>, vector<64x2xbf16>, vector<8x2xf32> -> vector<8x2xf32>
    %c0_31 = arith.constant 0 : index
    %c0_32 = arith.constant 0 : index
    %26 = vector.load %arg7[%c0_31, %c0_32] : memref<1x2xf32, #tpu.memory_space<vmem>>, vector<1x2xf32>
    %27 = vector.broadcast %26 : vector<1x2xf32> to vector<8x2xf32>
    %28 = arith.addf %25, %27 : vector<8x2xf32>
    %c0_33 = arith.constant 0 : index
    %c0_34 = arith.constant 0 : index
    %29 = vector.load %arg8[%c0_33, %c0_34] : memref<8x2xf32, #tpu.memory_space<vmem>>, vector<8x2xf32>
    tpu.vector_store %arg8[%c0_33, %c0_34], %28 {strides = array<i32>} : memref<8x2xf32, #tpu.memory_space<vmem>>, vector<8x2xf32>,
    return
  }
  func.func @transform_0(%arg0: i32) -> (i32, i32, i32) {
    %c0_i32 = arith.constant 0 : i32
    %c0_i32_0 = arith.constant 0 : i32
    %c0_i32_1 = arith.constant 0 : i32
    return %c0_i32, %arg0, %c0_i32_0 : i32, i32, i32
  }
  func.func @transform_1(%arg0: i32) -> (i32, i32) {
    %c0_i32 = arith.constant 0 : i32
    %c0_i32_0 = arith.constant 0 : i32
    %c0_i32_1 = arith.constant 0 : i32
    return %c0_i32, %c0_i32_0 : i32, i32
  }
  func.func @transform_2(%arg0: i32) -> (i32, i32) {
    %c0_i32 = arith.constant 0 : i32
    %c0_i32_0 = arith.constant 0 : i32
    %c0_i32_1 = arith.constant 0 : i32
    return %c0_i32, %c0_i32_0 : i32, i32
  }
  func.func @transform_3(%arg0: i32) -> (i32, i32) {
    %c0_i32 = arith.constant 0 : i32
    %c0_i32_0 = arith.constant 0 : i32
    %c0_i32_1 = arith.constant 0 : i32
    return %c0_i32, %c0_i32_0 : i32, i32
  }
  func.func @transform_4(%arg0: i32) -> (i32, i32) {
    %c0_i32 = arith.constant 0 : i32
    %c0_i32_0 = arith.constant 0 : i32
    %c0_i32_1 = arith.constant 0 : i32
    return %c0_i32, %c0_i32_0 : i32, i32
  }
  func.func @transform_5(%arg0: i32) -> (i32, i32) {
    %c0_i32 = arith.constant 0 : i32
    %c0_i32_0 = arith.constant 0 : i32
    %c0_i32_1 = arith.constant 0 : i32
    return %c0_i32, %c0_i32_0 : i32, i32
  }
  func.func @transform_6(%arg0: i32) -> (i32, i32) {
    %c0_i32 = arith.constant 0 : i32
    %c0_i32_0 = arith.constant 0 : i32
    %c0_i32_1 = arith.constant 0 : i32
    return %c0_i32, %c0_i32_0 : i32, i32
  }
  func.func @transform_7(%arg0: i32) -> (i32, i32) {
    %c0_i32 = arith.constant 0 : i32
    %c0_i32_0 = arith.constant 0 : i32
    return %arg0, %c0_i32 : i32, i32
  }
}

</mosaic_0001>

<llo_original>
// kernel: _lambda_.3
$region0: #{_lambda_.3}
  #allocation0 [shape = 'u32[]', space=smem, size = 0x4, offset = 0x4, fixed_abs, tag = 'smem constant byte address 0x4 - core index']
  #allocation1 [shape = 'u32[144,128]{1,0:T(1,128)}', space=vmem, size = 0x12000, scoped, tag = 'internal scratch']
  #allocation2 [shape = 'f32[16,8,256]{2,1,0:T(8,128)}', space=vmem, size = 0x20000, scoped, tag = 'scratch operand']
  #allocation3 [shape = 'f32[8,32]{1,0:T(8,128)}', space=vmem, size = 0x1000, scoped, tag = 'scratch operand']
  #allocation4 [shape = 'f32[8,32]{1,0:T(8,128)}', space=vmem, size = 0x1000, scoped, tag = 'scratch operand']
  #allocation5 [shape = 'f32[8,32]{1,0:T(8,128)}', space=vmem, size = 0x1000, scoped, tag = 'scratch operand']
  #allocation6 [shape = 'f32[8,32]{1,0:T(8,128)}', space=vmem, size = 0x1000, scoped, tag = 'scratch operand']
  #allocation7 [shape = 'f32[8,64]{1,0:T(8,128)}', space=vmem, size = 0x1000, scoped, tag = 'scratch operand']
  %s0 = inlined_call_operand.vmem [shape: bf16[16,16,64], index: 0, kind: input, shape index: {}]
  %s1 = inlined_call_operand.vmem [shape: bf16[64,256], index: 1, kind: input, shape index: {}]
  %s2 = inlined_call_operand.vmem [shape: bf16[32,128], index: 2, kind: input, shape index: {}]
  %s3 = inlined_call_operand.vmem [shape: bf16[32,128], index: 3, kind: input, shape index: {}]
  %s4 = inlined_call_operand.vmem [shape: f32[1,256], index: 4, kind: input, shape index: {}]
  %s5 = inlined_call_operand.vmem [shape: bf16[64,2], index: 5, kind: input, shape index: {}]
  %s6 = inlined_call_operand.vmem [shape: f32[1,2], index: 6, kind: input, shape index: {}]
  %s7 = inlined_call_operand.vmem [shape: f32[16,2], index: 7, kind: output, shape index: {}]
  %s8 = sld [smem:[#allocation0]]
  $region109: #{_lambda_.3} parent=0
    _
  %s10 = ssub.s32 1, %s8
  %s11 = scalar_select 0, %s10, %s8
  $region1: #{_lambda_.3} parent=0
    #allocation8 [shape = 'u8[65536]{0}', space=vmem, size = 0x10000, scoped, tag = 'input window, operand 0']
    loop: start=0, step=1, limit=4
    $region2: #{_lambda_.3} parent=1 // loop_pre_header
      _
    $region3: #{_lambda_.3} parent=1 // loop_header
      %s13 = sphi 0, %s17
      %p14 = scmp.ge.s32.totalorder %s13, 4
      %s23 = sphi 0, %s25
      %s26 = sphi 0, %s23
      %s27 = sphi 0, %s26
      %s43 = sphi 0, %s27
      %s47 = sphi 0, %s47
      %s49 = sphi 0, %s47
      %s50 = sphi 0, %s49
      %s64 = sphi 0, %s50
      %s68 = sphi 0, %s68
      %s70 = sphi 0, %s68
      %s71 = sphi 0, %s70
      %s85 = sphi 0, %s71
      %s89 = sphi 0, %s89
      %s91 = sphi 0, %s89
      %s92 = sphi 0, %s91
      %s106 = sphi 0, %s92
      %s110 = sphi 0, %s110
      %s112 = sphi 0, %s110
      %s113 = sphi 0, %s112
      %s127 = sphi 0, %s113
      %s131 = sphi 0, %s131
      %s133 = sphi 0, %s131
      %s134 = sphi 0, %s133
      %s148 = sphi 0, %s134
      %s152 = sphi 0, %s152
      %s154 = sphi 0, %s152
      %s155 = sphi 0, %s154
      %s169 = sphi 0, %s155
      %s175 = sphi 0, %s177
      %s178 = sphi 0, %s175
      %s179 = sphi 0, %s178
      %s195 = sphi 0, %s179
    $region4: #{_lambda_.3} parent=1 // loop_header_branch
      %16 = sbr.rel (%p14) target = $region8
    $region5: #{_lambda_.3} parent=1 // loop_body
      %s18 = ssub.s32 %s13, 1
      %s19 = ssub.s32 %s13, 2
      %s20 = sadd.s32 %s13, 1
      %s21 = ssub.s32 %s13, %s20
      %p22 = scmp.eq.s32.totalorder %s21, 0
      %s24 = sadd.s32 %s23, 1
      %s25 = scalar_select %p22, %s23, %s24
      %p28 = pneg %p22
      %p29 = scmp.eq.s32.totalorder %s13, 1
      %p30 = por %p28, %p29
      %p31 = scmp.ne.s32.totalorder %s23, %s26
      %p32 = scmp.eq.s32.totalorder %s13, 0
      %p33 = por %p31, %p32
      %p34 = scmp.ne.s32.totalorder %s23, %s26
      %p35 = scmp.eq.s32.totalorder %s18, 1
      %p36 = por %p34, %p35
      %p37 = scmp.ne.s32.totalorder %s26, %s27
      %p38 = scmp.eq.s32.totalorder %s18, 0
      %p39 = por %p37, %p38
      %p40 = scmp.ne.s32.totalorder %s26, %s27
      %p41 = scmp.eq.s32.totalorder %s19, 1
      %p42 = por %p40, %p41
      %p44 = scmp.ne.s32.totalorder %s27, %s43
      %p45 = scmp.eq.s32.totalorder %s19, 0
      %p46 = por %p44, %p45
      %s48 = sadd.s32 %s47, 1
      %p51 = scmp.eq.s32.totalorder %s13, 1
      %p52 = scmp.ne.s32.totalorder %s47, %s49
      %p53 = scmp.eq.s32.totalorder %s13, 0
      %p54 = por %p52, %p53
      %p55 = scmp.ne.s32.totalorder %s47, %s49
      %p56 = scmp.eq.s32.totalorder %s18, 1
      %p57 = por %p55, %p56
      %p58 = scmp.ne.s32.totalorder %s49, %s50
      %p59 = scmp.eq.s32.totalorder %s18, 0
      %p60 = por %p58, %p59
      %p61 = scmp.ne.s32.totalorder %s49, %s50
      %p62 = scmp.eq.s32.totalorder %s19, 1
      %p63 = por %p61, %p62
      %p65 = scmp.ne.s32.totalorder %s50, %s64
      %p66 = scmp.eq.s32.totalorder %s19, 0
      %p67 = por %p65, %p66
      %s69 = sadd.s32 %s68, 1
      %p72 = scmp.eq.s32.totalorder %s13, 1
      %p73 = scmp.ne.s32.totalorder %s68, %s70
      %p74 = scmp.eq.s32.totalorder %s13, 0
      %p75 = por %p73, %p74
      %p76 = scmp.ne.s32.totalorder %s68, %s70
      %p77 = scmp.eq.s32.totalorder %s18, 1
      %p78 = por %p76, %p77
      %p79 = scmp.ne.s32.totalorder %s70, %s71
      %p80 = scmp.eq.s32.totalorder %s18, 0
      %p81 = por %p79, %p80
      %p82 = scmp.ne.s32.totalorder %s70, %s71
      %p83 = scmp.eq.s32.totalorder %s19, 1
      %p84 = por %p82, %p83
      %p86 = scmp.ne.s32.totalorder %s71, %s85
      %p87 = scmp.eq.s32.totalorder %s19, 0
      %p88 = por %p86, %p87
      %s90 = sadd.s32 %s89, 1
      %p93 = scmp.eq.s32.totalorder %s13, 1
      %p94 = scmp.ne.s32.totalorder %s89, %s91
      %p95 = scmp.eq.s32.totalorder %s13, 0
      %p96 = por %p94, %p95
      %p97 = scmp.ne.s32.totalorder %s89, %s91
      %p98 = scmp.eq.s32.totalorder %s18, 1
      %p99 = por %p97, %p98
      %p100 = scmp.ne.s32.totalorder %s91, %s92
      %p101 = scmp.eq.s32.totalorder %s18, 0
      %p102 = por %p100, %p101
      %p103 = scmp.ne.s32.totalorder %s91, %s92
      %p104 = scmp.eq.s32.totalorder %s19, 1
      %p105 = por %p103, %p104
      %p107 = scmp.ne.s32.totalorder %s92, %s106
      %p108 = scmp.eq.s32.totalorder %s19, 0
      %p109 = por %p107, %p108
      %s111 = sadd.s32 %s110, 1
      %p114 = scmp.eq.s32.totalorder %s13, 1
      %p115 = scmp.ne.s32.totalorder %s110, %s112
      %p116 = scmp.eq.s32.totalorder %s13, 0
      %p117 = por %p115, %p116
      %p118 = scmp.ne.s32.totalorder %s110, %s112
      %p119 = scmp.eq.s32.totalorder %s18, 1
      %p120 = por %p118, %p119
      %p121 = scmp.ne.s32.totalorder %s112, %s113
      %p122 = scmp.eq.s32.totalorder %s18, 0
      %p123 = por %p121, %p122
      %p124 = scmp.ne.s32.totalorder %s112, %s113
      %p125 = scmp.eq.s32.totalorder %s19, 1
      %p126 = por %p124, %p125
      %p128 = scmp.ne.s32.totalorder %s113, %s127
      %p129 = scmp.eq.s32.totalorder %s19, 0
      %p130 = por %p128, %p129
      %s132 = sadd.s32 %s131, 1
      %p135 = scmp.eq.s32.totalorder %s13, 1
      %p136 = scmp.ne.s32.totalorder %s131, %s133
      %p137 = scmp.eq.s32.totalorder %s13, 0
      %p138 = por %p136, %p137
      %p139 = scmp.ne.s32.totalorder %s131, %s133
      %p140 = scmp.eq.s32.totalorder %s18, 1
      %p141 = por %p139, %p140
      %p142 = scmp.ne.s32.totalorder %s133, %s134
      %p143 = scmp.eq.s32.totalorder %s18, 0
      %p144 = por %p142, %p143
      %p145 = scmp.ne.s32.totalorder %s133, %s134
      %p146 = scmp.eq.s32.totalorder %s19, 1
      %p147 = por %p145, %p146
      %p149 = scmp.ne.s32.totalorder %s134, %s148
      %p150 = scmp.eq.s32.totalorder %s19, 0
      %p151 = por %p149, %p150
      %s153 = sadd.s32 %s152, 1
      %p156 = scmp.eq.s32.totalorder %s13, 1
      %p157 = scmp.ne.s32.totalorder %s152, %s154
      %p158 = scmp.eq.s32.totalorder %s13, 0
      %p159 = por %p157, %p158
      %p160 = scmp.ne.s32.totalorder %s152, %s154
      %p161 = scmp.eq.s32.totalorder %s18, 1
      %p162 = por %p160, %p161
      %p163 = scmp.ne.s32.totalorder %s154, %s155
      %p164 = scmp.eq.s32.totalorder %s18, 0
      %p165 = por %p163, %p164
      %p166 = scmp.ne.s32.totalorder %s154, %s155
      %p167 = scmp.eq.s32.totalorder %s19, 1
      %p168 = por %p166, %p167
      %p170 = scmp.ne.s32.totalorder %s155, %s169
      %p171 = scmp.eq.s32.totalorder %s19, 0
      %p172 = por %p170, %p171
      %s173 = ssub.s32 %s13, %s20
      %p174 = scmp.eq.s32.totalorder %s173, 0
      %s176 = sadd.s32 %s175, 1
      %s177 = scalar_select %p174, %s175, %s176
      %p180 = pneg %p174
      %p181 = scmp.eq.s32.totalorder %s13, 1
      %p182 = por %p180, %p181
      %p183 = scmp.ne.s32.totalorder %s175, %s178
      %p184 = scmp.eq.s32.totalorder %s13, 0
      %p185 = por %p183, %p184
      %p186 = scmp.ne.s32.totalorder %s175, %s178
      %p187 = scmp.eq.s32.totalorder %s18, 1
      %p188 = por %p186, %p187
      %p189 = scmp.ne.s32.totalorder %s178, %s179
      %p190 = scmp.eq.s32.totalorder %s18, 0
      %p191 = por %p189, %p190
      %p192 = scmp.ne.s32.totalorder %s178, %s179
      %p193 = scmp.eq.s32.totalorder %s19, 1
      %p194 = por %p192, %p193
      %p196 = scmp.ne.s32.totalorder %s179, %s195
      %p197 = scmp.eq.s32.totalorder %s19, 0
      %p198 = por %p196, %p197
      %p199 = scmp.le.s32.totalorder 1, %s13
      %p200 = scmp.lt.s32.totalorder %s13, 3
      %p201 = pnand %p199, %p200
      %p202 = pneg %p201
      // Predicated region
      $region9: #{_lambda_.3} parent=5 // pred_check
        _
      $region10: #{_lambda_.3} parent=5 // pred_check_branch
        %204 = sbr.rel (%p201) target = $region12
      $region11: #{_lambda_.3} parent=5 // pred_region
        %s205 = ssub.s32 %s13, 1
        // Predicated region
        $region13: #{_lambda_.3} parent=11 // pred_check
          %p206 = pneg %p60
        $region14: #{_lambda_.3} parent=11 // pred_check_branch
          %208 = sbr.rel (%p206) target = $region16
        $region15: #{_lambda_.3} parent=11 // pred_region
          _
        $region16: #{_lambda_.3} parent=11 // pred_fallthru
          _
        // Predicated region
        $region17: #{_lambda_.3} parent=11 // pred_check
          %p209 = pneg %p81
        $region18: #{_lambda_.3} parent=11 // pred_check_branch
          %211 = sbr.rel (%p209) target = $region20
        $region19: #{_lambda_.3} parent=11 // pred_region
          _
        $region20: #{_lambda_.3} parent=11 // pred_fallthru
          _
        // Predicated region
        $region21: #{_lambda_.3} parent=11 // pred_check
          %p212 = pneg %p102
        $region22: #{_lambda_.3} parent=11 // pred_check_branch
          %214 = sbr.rel (%p212) target = $region24
        $region23: #{_lambda_.3} parent=11 // pred_region
          _
        $region24: #{_lambda_.3} parent=11 // pred_fallthru
          _
        // Predicated region
        $region25: #{_lambda_.3} parent=11 // pred_check
          %p215 = pneg %p123
        $region26: #{_lambda_.3} parent=11 // pred_check_branch
          %217 = sbr.rel (%p215) target = $region28
        $region27: #{_lambda_.3} parent=11 // pred_region
          _
        $region28: #{_lambda_.3} parent=11 // pred_fallthru
          _
        // Predicated region
        $region29: #{_lambda_.3} parent=11 // pred_check
          %p218 = pneg %p144
        $region30: #{_lambda_.3} parent=11 // pred_check_branch
          %220 = sbr.rel (%p218) target = $region32
        $region31: #{_lambda_.3} parent=11 // pred_region
          _
        $region32: #{_lambda_.3} parent=11 // pred_fallthru
          _
        // Predicated region
        $region33: #{_lambda_.3} parent=11 // pred_check
          %p221 = pneg %p165
        $region34: #{_lambda_.3} parent=11 // pred_check_branch
          %223 = sbr.rel (%p221) target = $region36
        $region35: #{_lambda_.3} parent=11 // pred_region
          _
        $region36: #{_lambda_.3} parent=11 // pred_fallthru
          _
      $region12: #{_lambda_.3} parent=5 // pred_fallthru
        _
      %p224 = scmp.lt.s32.totalorder %s13, 2
      // Predicated region
      $region37: #{_lambda_.3} parent=5 // pred_check
        %p225 = pneg %p224
      $region38: #{_lambda_.3} parent=5 // pred_check_branch
        %227 = sbr.rel (%p225) target = $region40
      $region39: #{_lambda_.3} parent=5 // pred_region
        // Predicated region
        $region41: #{_lambda_.3} parent=39 // pred_check
          %p228 = pneg %p33
        $region42: #{_lambda_.3} parent=39 // pred_check_branch
          %230 = sbr.rel (%p228) target = $region44
        $region43: #{_lambda_.3} parent=39 // pred_region
          %s231 = sand.u32 %s23, 1
          %s232 = sand.u32 %s23, 1
          %s233 = smul.addr %s232, 64
          %s234 = scalar_lea.vmem [#allocation8], %s233
          %s235 = smul.addr %s13, 4
          %s236 = scalar_lea.vmem %s0, %s235
          // Predicated region
          $region45: #{_lambda_.3} parent=43 // pred_check
            _
          $region46: #{_lambda_.3} parent=43 // pred_check_branch
            %238 = sbr.rel (0) target = $region48
          $region47: #{_lambda_.3} parent=43 // pred_region
            // Predicated region
            $region49: #{_lambda_.3} parent=47 // pred_check
              _
            $region50: #{_lambda_.3} parent=47 // pred_check_branch
              %240 = sbr.rel target = $region52
            $region51: #{_lambda_.3} parent=47 // pred_region
              // Predicated region
              $region64: #{_lambda_.3} parent=51 // pred_check
                _
              $region65: #{_lambda_.3} parent=51 // pred_check_branch
                %285 = sbr.rel (0) target = $region67
              $region66: #{_lambda_.3} parent=51 // pred_region
                loop: start=0, step=1, limit=1
                $region68: #{_lambda_.3} parent=66 // loop_pre_header
                  _
                $region69: #{_lambda_.3} parent=66 // loop_header
                  %s287 = sphi 0, %s291
                  %p288 = scmp.ge.s32.totalorder %s287, 1
                  %s292 = sphi %s236, %s236
                  %s293 = sphi %s234, %s234
                $region70: #{_lambda_.3} parent=66 // loop_header_branch
                  %290 = sbr.rel (%p288) target = $region74
                $region71: #{_lambda_.3} parent=66 // loop_body
                  _
                $region72: #{_lambda_.3} parent=66 // loop_footer
                  %s291 = sadd.s32 1, %s287
                $region73: #{_lambda_.3} parent=66 // loop_footer_branch
                  %286 = sbr.rel target = $region69
                $region74: #{_lambda_.3} parent=66 // loop_exit
                  _
                loop: start=0, step=1, limit=1
                $region75: #{_lambda_.3} parent=66 // loop_pre_header
                  _
                $region76: #{_lambda_.3} parent=66 // loop_header
                  %s296 = sphi 0, %s300
                  %p297 = scmp.ge.s32.totalorder %s296, 1
                  %s301 = sphi %s236, %s236
                  %s302 = sphi %s234, %s234
                $region77: #{_lambda_.3} parent=66 // loop_header_branch
                  %299 = sbr.rel (%p297) target = $region81
                $region78: #{_lambda_.3} parent=66 // loop_body
                  %v303 = vld [vmem:[%s301] sm:$0xf]
                  %304 = vst [vmem:[%s302] sm:$0xf] %v303
                  %v305 = vld [vmem:[%s301 + $0x8] sm:$0xf]
                  %306 = vst [vmem:[%s302 + $0x4] sm:$0xf] %v305
                  %v307 = vld [vmem:[%s301 + $0x10] sm:$0xf]
                  %308 = vst [vmem:[%s302 + $0x8] sm:$0xf] %v307
                  %v309 = vld [vmem:[%s301 + $0x18] sm:$0xf]
                  %310 = vst [vmem:[%s302 + $0xc] sm:$0xf] %v309
                  %v311 = vld [vmem:[%s301 + $0x20] sm:$0xf]
                  %312 = vst [vmem:[%s302 + $0x10] sm:$0xf] %v311
                  %v313 = vld [vmem:[%s301 + $0x28] sm:$0xf]
                  %314 = vst [vmem:[%s302 + $0x14] sm:$0xf] %v313
                  %v315 = vld [vmem:[%s301 + $0x30] sm:$0xf]
                  %316 = vst [vmem:[%s302 + $0x18] sm:$0xf] %v315
                  %v317 = vld [vmem:[%s301 + $0x38] sm:$0xf]
                  %318 = vst [vmem:[%s302 + $0x1c] sm:$0xf] %v317
                  %v319 = vld [vmem:[%s301 + $0x40] sm:$0xf]
                  %320 = vst [vmem:[%s302 + $0x20] sm:$0xf] %v319
                  %v321 = vld [vmem:[%s301 + $0x48] sm:$0xf]
                  %322 = vst [vmem:[%s302 + $0x24] sm:$0xf] %v321
                  %v323 = vld [vmem:[%s301 + $0x50] sm:$0xf]
                  %324 = vst [vmem:[%s302 + $0x28] sm:$0xf] %v323
                  %v325 = vld [vmem:[%s301 + $0x58] sm:$0xf]
                  %326 = vst [vmem:[%s302 + $0x2c] sm:$0xf] %v325
                  %v327 = vld [vmem:[%s301 + $0x60] sm:$0xf]
                  %328 = vst [vmem:[%s302 + $0x30] sm:$0xf] %v327
                  %v329 = vld [vmem:[%s301 + $0x68] sm:$0xf]
                  %330 = vst [vmem:[%s302 + $0x34] sm:$0xf] %v329
                  %v331 = vld [vmem:[%s301 + $0x70] sm:$0xf]
                  %332 = vst [vmem:[%s302 + $0x38] sm:$0xf] %v331
                  %v333 = vld [vmem:[%s301 + $0x78] sm:$0xf]
                  %334 = vst [vmem:[%s302 + $0x3c] sm:$0xf] %v333
                $region79: #{_lambda_.3} parent=66 // loop_footer
                  %s300 = sadd.s32 1, %s296
                $region80: #{_lambda_.3} parent=66 // loop_footer_branch
                  %295 = sbr.rel target = $region76
                $region81: #{_lambda_.3} parent=66 // loop_exit
                  _
              $region67: #{_lambda_.3} parent=51 // pred_fallthru
                _
            $region52: #{_lambda_.3} parent=47 // pred_fallthru
              _
            // Predicated region
            $region53: #{_lambda_.3} parent=47 // pred_check
              _
            $region54: #{_lambda_.3} parent=47 // pred_check_branch
              %242 = sbr.rel (0) target = $region56
            $region55: #{_lambda_.3} parent=47 // pred_region
              loop: start=0, step=1, limit=1
              $region57: #{_lambda_.3} parent=55 // loop_pre_header
                _
              $region58: #{_lambda_.3} parent=55 // loop_header
                %s245 = sphi 0, %s249
                %p246 = scmp.ge.s32.totalorder %s245, 1
                %s250 = sphi %s236, %s236
                %s251 = sphi %s234, %s234
              $region59: #{_lambda_.3} parent=55 // loop_header_branch
                %248 = sbr.rel (%p246) target = $region63
              $region60: #{_lambda_.3} parent=55 // loop_body
                %v252 = vld [vmem:[%s250] sm:$0xf]
                %253 = vst [vmem:[%s251] sm:$0xf] %v252
                %v254 = vld [vmem:[%s250 + $0x8] sm:$0xf]
                %255 = vst [vmem:[%s251 + $0x4] sm:$0xf] %v254
                %v256 = vld [vmem:[%s250 + $0x10] sm:$0xf]
                %257 = vst [vmem:[%s251 + $0x8] sm:$0xf] %v256
                %v258 = vld [vmem:[%s250 + $0x18] sm:$0xf]
                %259 = vst [vmem:[%s251 + $0xc] sm:$0xf] %v258
                %v260 = vld [vmem:[%s250 + $0x20] sm:$0xf]
                %261 = vst [vmem:[%s251 + $0x10] sm:$0xf] %v260
                %v262 = vld [vmem:[%s250 + $0x28] sm:$0xf]
                %263 = vst [vmem:[%s251 + $0x14] sm:$0xf] %v262
                %v264 = vld [vmem:[%s250 + $0x30] sm:$0xf]
                %265 = vst [vmem:[%s251 + $0x18] sm:$0xf] %v264
                %v266 = vld [vmem:[%s250 + $0x38] sm:$0xf]
                %267 = vst [vmem:[%s251 + $0x1c] sm:$0xf] %v266
                %v268 = vld [vmem:[%s250 + $0x40] sm:$0xf]
                %269 = vst [vmem:[%s251 + $0x20] sm:$0xf] %v268
                %v270 = vld [vmem:[%s250 + $0x48] sm:$0xf]
                %271 = vst [vmem:[%s251 + $0x24] sm:$0xf] %v270
                %v272 = vld [vmem:[%s250 + $0x50] sm:$0xf]
                %273 = vst [vmem:[%s251 + $0x28] sm:$0xf] %v272
                %v274 = vld [vmem:[%s250 + $0x58] sm:$0xf]
                %275 = vst [vmem:[%s251 + $0x2c] sm:$0xf] %v274
                %v276 = vld [vmem:[%s250 + $0x60] sm:$0xf]
                %277 = vst [vmem:[%s251 + $0x30] sm:$0xf] %v276
                %v278 = vld [vmem:[%s250 + $0x68] sm:$0xf]
                %279 = vst [vmem:[%s251 + $0x34] sm:$0xf] %v278
                %v280 = vld [vmem:[%s250 + $0x70] sm:$0xf]
                %281 = vst [vmem:[%s251 + $0x38] sm:$0xf] %v280
                %v282 = vld [vmem:[%s250 + $0x78] sm:$0xf]
                %283 = vst [vmem:[%s251 + $0x3c] sm:$0xf] %v282
              $region61: #{_lambda_.3} parent=55 // loop_footer
                %s249 = sadd.s32 1, %s245
              $region62: #{_lambda_.3} parent=55 // loop_footer_branch
                %244 = sbr.rel target = $region58
              $region63: #{_lambda_.3} parent=55 // loop_exit
                _
            $region56: #{_lambda_.3} parent=47 // pred_fallthru
              _
          $region48: #{_lambda_.3} parent=43 // pred_fallthru
            _
          %335 = vnop
        $region44: #{_lambda_.3} parent=39 // pred_fallthru
          _
      $region40: #{_lambda_.3} parent=5 // pred_fallthru
        _
      %p336 = scmp.le.s32.totalorder 1, %s13
      %p337 = scmp.lt.s32.totalorder %s13, 3
      %p338 = pnand %p336, %p337
      %p339 = pneg %p338
      // Predicated region
      $region82: #{_lambda_.3} parent=5 // pred_check
        _
      $region83: #{_lambda_.3} parent=5 // pred_check_branch
        %341 = sbr.rel (%p338) target = $region85
      $region84: #{_lambda_.3} parent=5 // pred_region
        %s342 = ssub.s32 %s13, 1
        %s343 = sand.u32 %s26, 1
        %s344 = sand.u32 %s26, 1
        %s345 = smul.addr %s344, 64
        %s346 = scalar_lea.vmem [#allocation8], %s345
        // Predicated region
        $region86: #{_lambda_.3} parent=84 // pred_check
          %p347 = pneg %p39
        $region87: #{_lambda_.3} parent=84 // pred_check_branch
          %349 = sbr.rel (%p347) target = $region89
        $region88: #{_lambda_.3} parent=84 // pred_region
          _
        $region89: #{_lambda_.3} parent=84 // pred_fallthru
          _
        %s350 = sand.u32 %s26, 1
        %s351 = sand.u32 %s26, 1
        %s352 = smul.addr %s351, 64
        %s353 = scalar_lea.vmem [#allocation8], %s352
        %p354 = pneg %p39
        %p355 = pneg %p36
        %p356 = pneg %p60
        %p357 = pneg %p57
        %p358 = pneg %p81
        %p359 = pneg %p78
        %p360 = pneg %p102
        %p361 = pneg %p99
        %p362 = pneg %p123
        %p363 = pneg %p120
        %p364 = pneg %p144
        %p365 = pneg %p141
        %p366 = pneg %p165
        %p367 = pneg %p162
        %p368 = pneg %p191
        %p369 = pneg %p188
        %p370 = scmp.lt.s32.totalorder %s18, 1
        %s371 = scalar_select %p370, %s18, 1
        %s372 = smul.addr %s371, 8
        %s373 = scalar_lea.vmem %s7, %s372
        %p374 = scmp.lt.s32.totalorder %s18, 1
        %s375 = scalar_select %p374, %s18, 1
        %s376 = smul.addr %s375, 8
        %s377 = scalar_lea.vmem %s7, %s376
        %v379 = vld [vmem:[%s346] sm:$0xf]
        %v380 = vld [vmem:[%s346 + $0x4] sm:$0xf]
        %v381 = vld [vmem:[%s346 + $0x8] sm:$0xf]
        %v382 = vld [vmem:[%s346 + $0xc] sm:$0xf]
        %v383 = vld [vmem:[%s346 + $0x10] sm:$0xf]
        %v384 = vld [vmem:[%s346 + $0x14] sm:$0xf]
        %v385 = vld [vmem:[%s346 + $0x18] sm:$0xf]
        %v386 = vld [vmem:[%s346 + $0x1c] sm:$0xf]
        %v387 = vld [vmem:[%s346 + $0x20] sm:$0xf]
        %v388 = vld [vmem:[%s346 + $0x24] sm:$0xf]
        %v389 = vld [vmem:[%s346 + $0x28] sm:$0xf]
        %v390 = vld [vmem:[%s346 + $0x2c] sm:$0xf]
        %v391 = vld [vmem:[%s346 + $0x30] sm:$0xf]
        %v392 = vld [vmem:[%s346 + $0x34] sm:$0xf]
        %v393 = vld [vmem:[%s346 + $0x38] sm:$0xf]
        %v394 = vld [vmem:[%s346 + $0x3c] sm:$0xf]
        %v395 = vld [vmem:[%s1] sm:$0xff]
        %v396 = vld [vmem:[%s1 + $0x8] sm:$0xff]
        %v397 = vld [vmem:[%s1 + $0x10] sm:$0xff]
        %v398 = vld [vmem:[%s1 + $0x18] sm:$0xff]
        %v399 = vld [vmem:[%s1 + $0x20] sm:$0xff]
        %v400 = vld [vmem:[%s1 + $0x28] sm:$0xff]
        %v401 = vld [vmem:[%s1 + $0x30] sm:$0xff]
        %v402 = vld [vmem:[%s1 + $0x38] sm:$0xff]
        %v403 = vld [vmem:[%s4] sm:$0x3]
        %v405 = vlaneseq
        %v406 = vshrl.u32 %v405, 7
        %v407 = vsub.s32 0, %v406
        %v408 = vrot.slane %v403, %v407
        %v409 = vlaneseq
        %v410 = vshrl.u32 %v409, 7
        %v411 = vsub.s32 1, %v410
        %v412 = vrot.slane %v403, %v411
        %v431 = vunpack.c.l.b16 %v379
        %v432 = vunpack.c.l.b16 %v380
        %v433 = vunpack.c.l.b16 %v381
        %v434 = vunpack.c.l.b16 %v382
        %v435 = vunpack.c.l.b16 %v383
        %v436 = vunpack.c.l.b16 %v384
        %v437 = vunpack.c.l.b16 %v385
        %v438 = vunpack.c.l.b16 %v386
        %v439 = vunpack.c.l.b16 %v387
        %v440 = vunpack.c.l.b16 %v388
        %v441 = vunpack.c.l.b16 %v389
        %v442 = vunpack.c.l.b16 %v390
        %v443 = vunpack.c.l.b16 %v391
        %v444 = vunpack.c.l.b16 %v392
        %v445 = vunpack.c.l.b16 %v393
        %v446 = vunpack.c.l.b16 %v394
        %v447 = vpack.c.b16 %v432, %v431
        %v448 = vpack.c.b16 %v434, %v433
        %v449 = vpack.c.b16 %v436, %v435
        %v450 = vpack.c.b16 %v438, %v437
        %v451 = vpack.c.b16 %v440, %v439
        %v452 = vpack.c.b16 %v442, %v441
        %v453 = vpack.c.b16 %v444, %v443
        %v454 = vpack.c.b16 %v446, %v445
        %v463 = vunpack.c.l.b16 %v395
        %v464 = vunpack.c.h.b16 %v395
        %v465 = vunpack.c.l.b16 %v396
        %v466 = vunpack.c.h.b16 %v396
        %v467 = vunpack.c.l.b16 %v397
        %v468 = vunpack.c.h.b16 %v397
        %v469 = vunpack.c.l.b16 %v398
        %v470 = vunpack.c.h.b16 %v398
        %v471 = vunpack.c.l.b16 %v399
        %v472 = vunpack.c.h.b16 %v399
        %v473 = vunpack.c.l.b16 %v400
        %v474 = vunpack.c.h.b16 %v400
        %v475 = vunpack.c.l.b16 %v401
        %v476 = vunpack.c.h.b16 %v401
        %v477 = vunpack.c.l.b16 %v402
        %v478 = vunpack.c.h.b16 %v402
        %v479 = vpack.c.b16 %v465, %v463
        %v480 = vpack.c.b16 %v466, %v464
        %v481 = vpack.c.b16 %v469, %v467
        %v482 = vpack.c.b16 %v470, %v468
        %v483 = vpack.c.b16 %v473, %v471
        %v484 = vpack.c.b16 %v474, %v472
        %v485 = vpack.c.b16 %v477, %v475
        %v486 = vpack.c.b16 %v478, %v476
        %vm495 = vcmask 523264
        %v497 = vsel %vm495, %v447, 0
        %v500 = vsel %vm495, %v448, 0
        %v503 = vsel %vm495, %v449, 0
        %v506 = vsel %vm495, %v450, 0
        %v509 = vsel %vm495, %v451, 0
        %v512 = vsel %vm495, %v452, 0
        %v515 = vsel %vm495, %v453, 0
        %v518 = vsel %vm495, %v454, 0
        %520 = vmatprep.subr.bf16.mxu0 %v480
        %521 = vmatpush1.bf16.msra.mxu0 %v479
        %522 = vmatprep.subr.bf16.mxu0 %v482
        %523 = vmatpush1.bf16.msra.mxu0 %v481
        %524 = vmatprep.subr.bf16.mxu0 %v484
        %525 = vmatpush1.bf16.msra.mxu0 %v483
        %526 = vmatprep.subr.bf16.mxu0 %v486
        %527 = vmatpush1.bf16.msra.mxu0 %v485
        %528 = vmatprep.subr.bf16.mxu0 0
        %529 = vmatpush1.bf16.msra.mxu0 0
        %530 = vmatprep.subr.bf16.mxu0 0
        %531 = vmatpush1.bf16.msra.mxu0 0
        %532 = vmatprep.subr.bf16.mxu0 0
        %533 = vmatpush1.bf16.msra.mxu0 0
        %534 = vmatprep.subr.bf16.mxu0 0
        %535 = vmatpush1.bf16.msra.mxu0 0
        %536 = vmatprep.subr.bf16.mxu0 0
        %537 = vmatpush1.bf16.msra.mxu0 0
        %538 = vmatprep.subr.bf16.mxu0 0
        %539 = vmatpush1.bf16.msra.mxu0 0
        %540 = vmatprep.subr.bf16.mxu0 0
        %541 = vmatpush1.bf16.msra.mxu0 0
        %542 = vmatprep.subr.bf16.mxu0 0
        %543 = vmatpush1.bf16.msra.mxu0 0
        %544 = vmatprep.subr.bf16.mxu0 0
        %545 = vmatpush1.bf16.msra.mxu0 0
        %546 = vmatprep.subr.bf16.mxu0 0
        %547 = vmatpush1.bf16.msra.mxu0 0
        %548 = vmatprep.subr.bf16.mxu0 0
        %549 = vmatpush1.bf16.msra.mxu0 0
        %550 = vmatprep.subr.bf16.mxu0 0
        %551 = vmatpush1.bf16.msra.mxu0 0
        %552 = vmatprep.mubr.bf16.mxu0 0
        %553 = vmatmul.mubr.bf16.gmra.mrb[0].mxu0 %v497
        %v554 = vpop.f32.mrb[0].mxu0
        %v555 = vadd.f32 %v408, %v554
        %v556 = vpop.f32.mrb[0].mxu0
        %v557 = vadd.f32 %v412, %v556
        %v558 = vpop.f32.mrb[0].mxu0
        %v559 = vadd.f32 %v408, %v558
        %v560 = vpop.f32.mrb[0].mxu0
        %v561 = vadd.f32 %v412, %v560
        %562 = vmatprep.mubr.bf16.mxu0 0
        %563 = vmatmul.mubr.bf16.gmra.mrb[0].mxu0 %v500
        %v564 = vpop.f32.mrb[0].mxu0
        %v565 = vadd.f32 %v408, %v564
        %v566 = vpop.f32.mrb[0].mxu0
        %v567 = vadd.f32 %v412, %v566
        %v568 = vpop.f32.mrb[0].mxu0
        %v569 = vadd.f32 %v408, %v568
        %v570 = vpop.f32.mrb[0].mxu0
        %v571 = vadd.f32 %v412, %v570
        %572 = vmatprep.mubr.bf16.mxu0 0
        %573 = vmatmul.mubr.bf16.gmra.mrb[0].mxu0 %v503
        %v574 = vpop.f32.mrb[0].mxu0
        %v575 = vadd.f32 %v408, %v574
        %v576 = vpop.f32.mrb[0].mxu0
        %v577 = vadd.f32 %v412, %v576
        %v578 = vpop.f32.mrb[0].mxu0
        %v579 = vadd.f32 %v408, %v578
        %v580 = vpop.f32.mrb[0].mxu0
        %v581 = vadd.f32 %v412, %v580
        %582 = vmatprep.mubr.bf16.mxu0 0
        %583 = vmatmul.mubr.bf16.gmra.mrb[0].mxu0 %v506
        %v584 = vpop.f32.mrb[0].mxu0
        %v585 = vadd.f32 %v408, %v584
        %v586 = vpop.f32.mrb[0].mxu0
        %v587 = vadd.f32 %v412, %v586
        %v588 = vpop.f32.mrb[0].mxu0
        %v589 = vadd.f32 %v408, %v588
        %v590 = vpop.f32.mrb[0].mxu0
        %v591 = vadd.f32 %v412, %v590
        %592 = vmatprep.mubr.bf16.mxu0 0
        %593 = vmatmul.mubr.bf16.gmra.mrb[0].mxu0 %v509
        %v594 = vpop.f32.mrb[0].mxu0
        %v595 = vadd.f32 %v408, %v594
        %v596 = vpop.f32.mrb[0].mxu0
        %v597 = vadd.f32 %v412, %v596
        %v598 = vpop.f32.mrb[0].mxu0
        %v599 = vadd.f32 %v408, %v598
        %v600 = vpop.f32.mrb[0].mxu0
        %v601 = vadd.f32 %v412, %v600
        %602 = vmatprep.mubr.bf16.mxu0 0
        %603 = vmatmul.mubr.bf16.gmra.mrb[0].mxu0 %v512
        %v604 = vpop.f32.mrb[0].mxu0
        %v605 = vadd.f32 %v408, %v604
        %v606 = vpop.f32.mrb[0].mxu0
        %v607 = vadd.f32 %v412, %v606
        %v608 = vpop.f32.mrb[0].mxu0
        %v609 = vadd.f32 %v408, %v608
        %v610 = vpop.f32.mrb[0].mxu0
        %v611 = vadd.f32 %v412, %v610
        %612 = vmatprep.mubr.bf16.mxu0 0
        %613 = vmatmul.mubr.bf16.gmra.mrb[0].mxu0 %v515
        %v614 = vpop.f32.mrb[0].mxu0
        %v615 = vadd.f32 %v408, %v614
        %v616 = vpop.f32.mrb[0].mxu0
        %v617 = vadd.f32 %v412, %v616
        %v618 = vpop.f32.mrb[0].mxu0
        %v619 = vadd.f32 %v408, %v618
        %v620 = vpop.f32.mrb[0].mxu0
        %v621 = vadd.f32 %v412, %v620
        %622 = vmatprep.mubr.bf16.mxu0 0
        %623 = vmatmul.mubr.bf16.gmra.mrb[0].mxu0 %v518
        %v624 = vpop.f32.mrb[0].mxu0
        %v625 = vadd.f32 %v408, %v624
        %v626 = vpop.f32.mrb[0].mxu0
        %v627 = vadd.f32 %v412, %v626
        %v628 = vpop.f32.mrb[0].mxu0
        %v629 = vadd.f32 %v408, %v628
        %v630 = vpop.f32.mrb[0].mxu0
        %v631 = vadd.f32 %v412, %v630
        %632 = vdwg.mxu0
        %633 = vst [vmem:[#allocation2] sm:$0xff] %v555
        %634 = vst [vmem:[#allocation2 + $0x8] sm:$0xff] %v557
        %635 = vst [vmem:[#allocation2 + $0x10] sm:$0xff] %v559
        %636 = vst [vmem:[#allocation2 + $0x18] sm:$0xff] %v561
        %637 = vst [vmem:[#allocation2 + $0x20] sm:$0xff] %v565
        %638 = vst [vmem:[#allocation2 + $0x28] sm:$0xff] %v567
        %639 = vst [vmem:[#allocation2 + $0x30] sm:$0xff] %v569
        %640 = vst [vmem:[#allocation2 + $0x38] sm:$0xff] %v571
        %641 = vst [vmem:[#allocation2 + $0x40] sm:$0xff] %v575
        %642 = vst [vmem:[#allocation2 + $0x48] sm:$0xff] %v577
        %643 = vst [vmem:[#allocation2 + $0x50] sm:$0xff] %v579
        %644 = vst [vmem:[#allocation2 + $0x58] sm:$0xff] %v581
        %645 = vst [vmem:[#allocation2 + $0x60] sm:$0xff] %v585
        %646 = vst [vmem:[#allocation2 + $0x68] sm:$0xff] %v587
        %647 = vst [vmem:[#allocation2 + $0x70] sm:$0xff] %v589
        %648 = vst [vmem:[#allocation2 + $0x78] sm:$0xff] %v591
        %649 = vst [vmem:[#allocation2 + $0x80] sm:$0xff] %v595
        %650 = vst [vmem:[#allocation2 + $0x88] sm:$0xff] %v597
        %651 = vst [vmem:[#allocation2 + $0x90] sm:$0xff] %v599
        %652 = vst [vmem:[#allocation2 + $0x98] sm:$0xff] %v601
        %653 = vst [vmem:[#allocation2 + $0xa0] sm:$0xff] %v605
        %654 = vst [vmem:[#allocation2 + $0xa8] sm:$0xff] %v607
        %655 = vst [vmem:[#allocation2 + $0xb0] sm:$0xff] %v609
        %656 = vst [vmem:[#allocation2 + $0xb8] sm:$0xff] %v611
        %657 = vst [vmem:[#allocation2 + $0xc0] sm:$0xff] %v615
        %658 = vst [vmem:[#allocation2 + $0xc8] sm:$0xff] %v617
        %659 = vst [vmem:[#allocation2 + $0xd0] sm:$0xff] %v619
        %660 = vst [vmem:[#allocation2 + $0xd8] sm:$0xff] %v621
        %661 = vst [vmem:[#allocation2 + $0xe0] sm:$0xff] %v625
        %662 = vst [vmem:[#allocation2 + $0xe8] sm:$0xff] %v627
        %663 = vst [vmem:[#allocation2 + $0xf0] sm:$0xff] %v629
        %664 = vst [vmem:[#allocation2 + $0xf8] sm:$0xff] %v631
        %vm665 = vcmask 261120
        %666 = vst.msk [vmem:[#allocation3] sm:$0xff] %vm665, 0.0
        %667 = vst.msk [vmem:[#allocation4] sm:$0xff] %vm665, 0.0
        %668 = vst.msk [vmem:[#allocation5] sm:$0xff] %vm665, 0.0
        %669 = vst.msk [vmem:[#allocation6] sm:$0xff] %vm665, 0.0
        %670 = vst.msk [vmem:[#allocation7] sm:$0xff] %vm495, -inf
        loop: start=0, step=1, limit=8
        $region90: #{_lambda_.3} parent=84 // loop_pre_header
          _
        $region91: #{_lambda_.3} parent=84 // loop_header
          %s672 = sphi 0, %s676
          %p673 = scmp.ge.s32.totalorder %s672, 8
        $region92: #{_lambda_.3} parent=84 // loop_header_branch
          %675 = sbr.rel (%p673) target = $region96
        $region93: #{_lambda_.3} parent=84 // loop_body
          %s677 = smul.u32 %s672, 2
          %s678 = ssub.s32 15, %s677
          %s679 = smul.u32 %s677, 2
          %s680 = smul.addr %s679, 8
          %s681 = scalar_lea.vmem [#allocation2], %s680
          %v682 = vld [vmem:[%s681] sm:$0xff]
          %v683 = vld [vmem:[#allocation3] sm:$0xff]
          %v684 = vpack.c.bf16 %v683, %v683
          %v685 = vld [vmem:[%s2] sm:$0xf]
          %v686 = vld [vmem:[%s2 + $0x4] sm:$0xf]
          %v687 = vld [vmem:[%s2 + $0x8] sm:$0xf]
          %v688 = vld [vmem:[%s2 + $0xc] sm:$0xf]
          %v693 = vunpack.c.l.b16 %v685
          %v694 = vunpack.c.l.b16 %v686
          %v695 = vunpack.c.l.b16 %v687
          %v696 = vunpack.c.l.b16 %v688
          %v697 = vpack.c.b16 %v694, %v693
          %v698 = vpack.c.b16 %v696, %v695
          %v702 = vsel %vm665, %v684, 0
          %704 = vmatprep.subr.bf16.mxu0 0
          %705 = vmatpush1.bf16.msra.mxu0 %v697
          %706 = vmatprep.subr.bf16.mxu0 0
          %707 = vmatpush1.bf16.msra.mxu0 %v698
          %708 = vmatprep.subr.bf16.mxu0 0
          %709 = vmatpush1.bf16.msra.mxu0 0
          %710 = vmatprep.subr.bf16.mxu0 0
          %711 = vmatpush1.bf16.msra.mxu0 0
          %712 = vmatprep.subr.bf16.mxu0 0
          %713 = vmatpush1.bf16.msra.mxu0 0
          %714 = vmatprep.subr.bf16.mxu0 0
          %715 = vmatpush1.bf16.msra.mxu0 0
          %716 = vmatprep.subr.bf16.mxu0 0
          %717 = vmatpush1.bf16.msra.mxu0 0
          %718 = vmatprep.subr.bf16.mxu0 0
          %719 = vmatpush1.bf16.msra.mxu0 0
          %720 = vmatprep.subr.bf16.mxu0 0
          %721 = vmatpush1.bf16.msra.mxu0 0
          %722 = vmatprep.subr.bf16.mxu0 0
          %723 = vmatpush1.bf16.msra.mxu0 0
          %724 = vmatprep.subr.bf16.mxu0 0
          %725 = vmatpush1.bf16.msra.mxu0 0
          %726 = vmatprep.subr.bf16.mxu0 0
          %727 = vmatpush1.bf16.msra.mxu0 0
          %728 = vmatprep.subr.bf16.mxu0 0
          %729 = vmatpush1.bf16.msra.mxu0 0
          %730 = vmatprep.subr.bf16.mxu0 0
          %731 = vmatpush1.bf16.msra.mxu0 0
          %732 = vmatprep.subr.bf16.mxu0 0
          %733 = vmatpush1.bf16.msra.mxu0 0
          %734 = vmatprep.subr.bf16.mxu0 0
          %735 = vmatpush1.bf16.msra.mxu0 0
          %736 = vmatprep.mubr.bf16.mxu0 0
          %737 = vmatmul.mubr.bf16.gmra.mrb[0].mxu0 %v702
          %v738 = vpop.f32.mrb[0].mxu0
          %v739 = vadd.f32 0.0, %v738
          %v740 = vpop.f32.mrb[0].mxu0
          %v741 = vpop.f32.mrb[0].mxu0
          %v742 = vpop.f32.mrb[0].mxu0
          %743 = vdwg.mxu0
          %v744 = vadd.f32 %v682, %v739
          %s745 = smul.u32 %s678, 2
          %s746 = smul.addr %s745, 8
          %s747 = scalar_lea.vmem [#allocation2], %s746
          %v748 = vld [vmem:[%s747 + $0x8] sm:$0xff]
          %v749 = vld [vmem:[#allocation5] sm:$0xff]
          %v750 = vpack.c.bf16 %v749, %v749
          %v751 = vld [vmem:[%s3] sm:$0xf]
          %v752 = vld [vmem:[%s3 + $0x4] sm:$0xf]
          %v753 = vld [vmem:[%s3 + $0x8] sm:$0xf]
          %v754 = vld [vmem:[%s3 + $0xc] sm:$0xf]
          %v759 = vunpack.c.l.b16 %v751
          %v760 = vunpack.c.l.b16 %v752
          %v761 = vunpack.c.l.b16 %v753
          %v762 = vunpack.c.l.b16 %v754
          %v763 = vpack.c.b16 %v760, %v759
          %v764 = vpack.c.b16 %v762, %v761
          %v768 = vsel %vm665, %v750, 0
          %770 = vmatprep.subr.bf16.mxu0 0
          %771 = vmatpush1.bf16.msra.mxu0 %v763
          %772 = vmatprep.subr.bf16.mxu0 0
          %773 = vmatpush1.bf16.msra.mxu0 %v764
          %774 = vmatprep.subr.bf16.mxu0 0
          %775 = vmatpush1.bf16.msra.mxu0 0
          %776 = vmatprep.subr.bf16.mxu0 0
          %777 = vmatpush1.bf16.msra.mxu0 0
          %778 = vmatprep.subr.bf16.mxu0 0
          %779 = vmatpush1.bf16.msra.mxu0 0
          %780 = vmatprep.subr.bf16.mxu0 0
          %781 = vmatpush1.bf16.msra.mxu0 0
          %782 = vmatprep.subr.bf16.mxu0 0
          %783 = vmatpush1.bf16.msra.mxu0 0
          %784 = vmatprep.subr.bf16.mxu0 0
          %785 = vmatpush1.bf16.msra.mxu0 0
          %786 = vmatprep.subr.bf16.mxu0 0
          %787 = vmatpush1.bf16.msra.mxu0 0
          %788 = vmatprep.subr.bf16.mxu0 0
          %789 = vmatpush1.bf16.msra.mxu0 0
          %790 = vmatprep.subr.bf16.mxu0 0
          %791 = vmatpush1.bf16.msra.mxu0 0
          %792 = vmatprep.subr.bf16.mxu0 0
          %793 = vmatpush1.bf16.msra.mxu0 0
          %794 = vmatprep.subr.bf16.mxu0 0
          %795 = vmatpush1.bf16.msra.mxu0 0
          %796 = vmatprep.subr.bf16.mxu0 0
          %797 = vmatpush1.bf16.msra.mxu0 0
          %798 = vmatprep.subr.bf16.mxu0 0
          %799 = vmatpush1.bf16.msra.mxu0 0
          %800 = vmatprep.subr.bf16.mxu0 0
          %801 = vmatpush1.bf16.msra.mxu0 0
          %802 = vmatprep.mubr.bf16.mxu0 0
          %803 = vmatmul.mubr.bf16.gmra.mrb[0].mxu0 %v768
          %v804 = vpop.f32.mrb[0].mxu0
          %v805 = vadd.f32 0.0, %v804
          %v806 = vpop.f32.mrb[0].mxu0
          %v807 = vpop.f32.mrb[0].mxu0
          %v808 = vpop.f32.mrb[0].mxu0
          %809 = vdwg.mxu0
          %v810 = vadd.f32 %v748, %v805
          %v811 = vld [vmem:[#allocation4] sm:$0xff]
          %v812 = vxor.u32 %v744, 2147483648
          %v813 = vmul.f32 %v812, 1.442695
          %v814 = vpow.pop %v813
          %v815 = vadd.f32 %v814, 1.0
          %v816 = vrcp.pop %v815
          %v817 = vmul.f32 1.0, %v816
          %v818 = vtanh.pop %v744
          %820 = vrot.lane.b32.xlu0 %v811, 32
          %v821 = vpop.permute.xlu0 %820
          %v823 = vmul.f32 %v817, %v821
          %825 = vrot.lane.b32.xlu0 %v818, 32
          %v826 = vpop.permute.xlu0 %825
          %v828 = vmul.f32 %v817, %v826
          %830 = vrot.lane.b32.xlu0 %v828, 32
          %v831 = vpop.permute.xlu0 %830
          %v833 = vadd.f32 %v823, %v831
          %v834 = vtanh.pop %v833
          %836 = vrot.lane.b32.xlu0 %v834, 32
          %v837 = vpop.permute.xlu0 %836
          %v839 = vmul.f32 %v817, %v837
          %v840 = vld [vmem:[#allocation6] sm:$0xff]
          %v841 = vxor.u32 %v810, 2147483648
          %v842 = vmul.f32 %v841, 1.442695
          %v843 = vpow.pop %v842
          %v844 = vadd.f32 %v843, 1.0
          %v845 = vrcp.pop %v844
          %v846 = vmul.f32 1.0, %v845
          %v847 = vtanh.pop %v810
          %849 = vrot.lane.b32.xlu0 %v840, 32
          %v850 = vpop.permute.xlu0 %849
          %v852 = vmul.f32 %v846, %v850
          %854 = vrot.lane.b32.xlu0 %v847, 32
          %v855 = vpop.permute.xlu0 %854
          %v857 = vmul.f32 %v846, %v855
          %859 = vrot.lane.b32.xlu0 %v857, 32
          %v860 = vpop.permute.xlu0 %859
          %v862 = vadd.f32 %v852, %v860
          %v863 = vtanh.pop %v862
          %865 = vrot.lane.b32.xlu0 %v863, 32
          %v866 = vpop.permute.xlu0 %865
          %v868 = vmul.f32 %v846, %v866
          %870 = vrot.lane.b32.xlu0 %v839, 64
          %v871 = vpop.permute.xlu0 %870
          %873 = vst.msk [vmem:[#allocation3] sm:$0xff] %vm665, %v871
          %875 = vrot.lane.b32.xlu0 %v833, 96
          %v876 = vpop.permute.xlu0 %875
          %878 = vst.msk [vmem:[#allocation4] sm:$0xff] %vm665, %v876
          %880 = vrot.lane.b32.xlu0 %v868, 64
          %v881 = vpop.permute.xlu0 %880
          %883 = vst.msk [vmem:[#allocation5] sm:$0xff] %vm665, %v881
          %885 = vrot.lane.b32.xlu0 %v862, 96
          %v886 = vpop.permute.xlu0 %885
          %888 = vst.msk [vmem:[#allocation6] sm:$0xff] %vm665, %v886
          %v889 = vld [vmem:[#allocation7] sm:$0xff]
          %v890 = vmax.f32 %v889, %v871
          %891 = vst.msk [vmem:[#allocation7] sm:$0xff] %vm665, %v890
          %v892 = vld [vmem:[#allocation7] sm:$0xff]
          %893 = vrot.lane.b32.xlu0 %v868, 96
          %v894 = vpop.permute.xlu0 %893
          %v896 = vmax.f32 %v892, %v894
          %vm897 = vcmask 523520
          %898 = vst.msk [vmem:[#allocation7] sm:$0xff] %vm897, %v896
          %s899 = sadd.s32 %s677, 1
          %s900 = ssub.s32 14, %s677
          %s901 = smul.u32 %s899, 2
          %s902 = smul.addr %s901, 8
          %s903 = scalar_lea.vmem [#allocation2], %s902
          %v904 = vld [vmem:[%s903] sm:$0xff]
          %v905 = vld [vmem:[#allocation3] sm:$0xff]
          %v906 = vpack.c.bf16 %v905, %v905
          %v907 = vld [vmem:[%s2] sm:$0xf]
          %v908 = vld [vmem:[%s2 + $0x4] sm:$0xf]
          %v909 = vld [vmem:[%s2 + $0x8] sm:$0xf]
          %v910 = vld [vmem:[%s2 + $0xc] sm:$0xf]
          %v915 = vunpack.c.l.b16 %v907
          %v916 = vunpack.c.l.b16 %v908
          %v917 = vunpack.c.l.b16 %v909
          %v918 = vunpack.c.l.b16 %v910
          %v919 = vpack.c.b16 %v916, %v915
          %v920 = vpack.c.b16 %v918, %v917
          %v924 = vsel %vm665, %v906, 0
          %926 = vmatprep.subr.bf16.mxu0 0
          %927 = vmatpush1.bf16.msra.mxu0 %v919
          %928 = vmatprep.subr.bf16.mxu0 0
          %929 = vmatpush1.bf16.msra.mxu0 %v920
          %930 = vmatprep.subr.bf16.mxu0 0
          %931 = vmatpush1.bf16.msra.mxu0 0
          %932 = vmatprep.subr.bf16.mxu0 0
          %933 = vmatpush1.bf16.msra.mxu0 0
          %934 = vmatprep.subr.bf16.mxu0 0
          %935 = vmatpush1.bf16.msra.mxu0 0
          %936 = vmatprep.subr.bf16.mxu0 0
          %937 = vmatpush1.bf16.msra.mxu0 0
          %938 = vmatprep.subr.bf16.mxu0 0
          %939 = vmatpush1.bf16.msra.mxu0 0
          %940 = vmatprep.subr.bf16.mxu0 0
          %941 = vmatpush1.bf16.msra.mxu0 0
          %942 = vmatprep.subr.bf16.mxu0 0
          %943 = vmatpush1.bf16.msra.mxu0 0
          %944 = vmatprep.subr.bf16.mxu0 0
          %945 = vmatpush1.bf16.msra.mxu0 0
          %946 = vmatprep.subr.bf16.mxu0 0
          %947 = vmatpush1.bf16.msra.mxu0 0
          %948 = vmatprep.subr.bf16.mxu0 0
          %949 = vmatpush1.bf16.msra.mxu0 0
          %950 = vmatprep.subr.bf16.mxu0 0
          %951 = vmatpush1.bf16.msra.mxu0 0
          %952 = vmatprep.subr.bf16.mxu0 0
          %953 = vmatpush1.bf16.msra.mxu0 0
          %954 = vmatprep.subr.bf16.mxu0 0
          %955 = vmatpush1.bf16.msra.mxu0 0
          %956 = vmatprep.subr.bf16.mxu0 0
          %957 = vmatpush1.bf16.msra.mxu0 0
          %958 = vmatprep.mubr.bf16.mxu0 0
          %959 = vmatmul.mubr.bf16.gmra.mrb[0].mxu0 %v924
          %v960 = vpop.f32.mrb[0].mxu0
          %v961 = vadd.f32 0.0, %v960
          %v962 = vpop.f32.mrb[0].mxu0
          %v963 = vpop.f32.mrb[0].mxu0
          %v964 = vpop.f32.mrb[0].mxu0
          %965 = vdwg.mxu0
          %v966 = vadd.f32 %v904, %v961
          %s967 = smul.u32 %s900, 2
          %s968 = smul.addr %s967, 8
          %s969 = scalar_lea.vmem [#allocation2], %s968
          %v970 = vld [vmem:[%s969 + $0x8] sm:$0xff]
          %v971 = vld [vmem:[#allocation5] sm:$0xff]
          %v972 = vpack.c.bf16 %v971, %v971
          %v973 = vld [vmem:[%s3] sm:$0xf]
          %v974 = vld [vmem:[%s3 + $0x4] sm:$0xf]
          %v975 = vld [vmem:[%s3 + $0x8] sm:$0xf]
          %v976 = vld [vmem:[%s3 + $0xc] sm:$0xf]
          %v981 = vunpack.c.l.b16 %v973
          %v982 = vunpack.c.l.b16 %v974
          %v983 = vunpack.c.l.b16 %v975
          %v984 = vunpack.c.l.b16 %v976
          %v985 = vpack.c.b16 %v982, %v981
          %v986 = vpack.c.b16 %v984, %v983
          %v990 = vsel %vm665, %v972, 0
          %992 = vmatprep.subr.bf16.mxu0 0
          %993 = vmatpush1.bf16.msra.mxu0 %v985
          %994 = vmatprep.subr.bf16.mxu0 0
          %995 = vmatpush1.bf16.msra.mxu0 %v986
          %996 = vmatprep.subr.bf16.mxu0 0
          %997 = vmatpush1.bf16.msra.mxu0 0
          %998 = vmatprep.subr.bf16.mxu0 0
          %999 = vmatpush1.bf16.msra.mxu0 0
          %1000 = vmatprep.subr.bf16.mxu0 0
          %1001 = vmatpush1.bf16.msra.mxu0 0
          %1002 = vmatprep.subr.bf16.mxu0 0
          %1003 = vmatpush1.bf16.msra.mxu0 0
          %1004 = vmatprep.subr.bf16.mxu0 0
          %1005 = vmatpush1.bf16.msra.mxu0 0
          %1006 = vmatprep.subr.bf16.mxu0 0
          %1007 = vmatpush1.bf16.msra.mxu0 0
          %1008 = vmatprep.subr.bf16.mxu0 0
          %1009 = vmatpush1.bf16.msra.mxu0 0
          %1010 = vmatprep.subr.bf16.mxu0 0
          %1011 = vmatpush1.bf16.msra.mxu0 0
          %1012 = vmatprep.subr.bf16.mxu0 0
          %1013 = vmatpush1.bf16.msra.mxu0 0
          %1014 = vmatprep.subr.bf16.mxu0 0
          %1015 = vmatpush1.bf16.msra.mxu0 0
          %1016 = vmatprep.subr.bf16.mxu0 0
          %1017 = vmatpush1.bf16.msra.mxu0 0
          %1018 = vmatprep.subr.bf16.mxu0 0
          %1019 = vmatpush1.bf16.msra.mxu0 0
          %1020 = vmatprep.subr.bf16.mxu0 0
          %1021 = vmatpush1.bf16.msra.mxu0 0
          %1022 = vmatprep.subr.bf16.mxu0 0
          %1023 = vmatpush1.bf16.msra.mxu0 0
          %1024 = vmatprep.mubr.bf16.mxu0 0
          %1025 = vmatmul.mubr.bf16.gmra.mrb[0].mxu0 %v990
          %v1026 = vpop.f32.mrb[0].mxu0
          %v1027 = vadd.f32 0.0, %v1026
          %v1028 = vpop.f32.mrb[0].mxu0
          %v1029 = vpop.f32.mrb[0].mxu0
          %v1030 = vpop.f32.mrb[0].mxu0
          %1031 = vdwg.mxu0
          %v1032 = vadd.f32 %v970, %v1027
          %v1033 = vld [vmem:[#allocation4] sm:$0xff]
          %v1034 = vxor.u32 %v966, 2147483648
          %v1035 = vmul.f32 %v1034, 1.442695
          %v1036 = vpow.pop %v1035
          %v1037 = vadd.f32 %v1036, 1.0
          %v1038 = vrcp.pop %v1037
          %v1039 = vmul.f32 1.0, %v1038
          %v1040 = vtanh.pop %v966
          %1042 = vrot.lane.b32.xlu0 %v1033, 32
          %v1043 = vpop.permute.xlu0 %1042
          %v1045 = vmul.f32 %v1039, %v1043
          %1047 = vrot.lane.b32.xlu0 %v1040, 32
          %v1048 = vpop.permute.xlu0 %1047
          %v1050 = vmul.f32 %v1039, %v1048
          %1052 = vrot.lane.b32.xlu0 %v1050, 32
          %v1053 = vpop.permute.xlu0 %1052
          %v1055 = vadd.f32 %v1045, %v1053
          %v1056 = vtanh.pop %v1055
          %1058 = vrot.lane.b32.xlu0 %v1056, 32
          %v1059 = vpop.permute.xlu0 %1058
          %v1061 = vmul.f32 %v1039, %v1059
          %v1062 = vld [vmem:[#allocation6] sm:$0xff]
          %v1063 = vxor.u32 %v1032, 2147483648
          %v1064 = vmul.f32 %v1063, 1.442695
          %v1065 = vpow.pop %v1064
          %v1066 = vadd.f32 %v1065, 1.0
          %v1067 = vrcp.pop %v1066
          %v1068 = vmul.f32 1.0, %v1067
          %v1069 = vtanh.pop %v1032
          %1071 = vrot.lane.b32.xlu0 %v1062, 32
          %v1072 = vpop.permute.xlu0 %1071
          %v1074 = vmul.f32 %v1068, %v1072
          %1076 = vrot.lane.b32.xlu0 %v1069, 32
          %v1077 = vpop.permute.xlu0 %1076
          %v1079 = vmul.f32 %v1068, %v1077
          %1081 = vrot.lane.b32.xlu0 %v1079, 32
          %v1082 = vpop.permute.xlu0 %1081
          %v1084 = vadd.f32 %v1074, %v1082
          %v1085 = vtanh.pop %v1084
          %1087 = vrot.lane.b32.xlu0 %v1085, 32
          %v1088 = vpop.permute.xlu0 %1087
          %v1090 = vmul.f32 %v1068, %v1088
          %1092 = vrot.lane.b32.xlu0 %v1061, 64
          %v1093 = vpop.permute.xlu0 %1092
          %1095 = vst.msk [vmem:[#allocation3] sm:$0xff] %vm665, %v1093
          %1097 = vrot.lane.b32.xlu0 %v1055, 96
          %v1098 = vpop.permute.xlu0 %1097
          %1100 = vst.msk [vmem:[#allocation4] sm:$0xff] %vm665, %v1098
          %1102 = vrot.lane.b32.xlu0 %v1090, 64
          %v1103 = vpop.permute.xlu0 %1102
          %1105 = vst.msk [vmem:[#allocation5] sm:$0xff] %vm665, %v1103
          %1107 = vrot.lane.b32.xlu0 %v1084, 96
          %v1108 = vpop.permute.xlu0 %1107
          %1110 = vst.msk [vmem:[#allocation6] sm:$0xff] %vm665, %v1108
          %v1111 = vld [vmem:[#allocation7] sm:$0xff]
          %v1112 = vmax.f32 %v1111, %v1093
          %1113 = vst.msk [vmem:[#allocation7] sm:$0xff] %vm665, %v1112
          %v1114 = vld [vmem:[#allocation7] sm:$0xff]
          %1115 = vrot.lane.b32.xlu0 %v1090, 96
          %v1116 = vpop.permute.xlu0 %1115
          %v1118 = vmax.f32 %v1114, %v1116
          %1119 = vst.msk [vmem:[#allocation7] sm:$0xff] %vm897, %v1118
        $region94: #{_lambda_.3} parent=84 // loop_footer
          %s676 = sadd.s32 1, %s672
        $region95: #{_lambda_.3} parent=84 // loop_footer_branch
          %671 = sbr.rel target = $region91
        $region96: #{_lambda_.3} parent=84 // loop_exit
          _
        %v1120 = vld [vmem:[#allocation7] sm:$0xff]
        %v1121 = vmax.f32 %v1120, 0.0
        %v1122 = vpack.c.bf16 %v1121, %v1121
        %v1123 = vld [vmem:[%s5] sm:$0xf]
        %v1124 = vld [vmem:[%s5 + $0x4] sm:$0xf]
        %v1125 = vld [vmem:[%s5 + $0x8] sm:$0xf]
        %v1126 = vld [vmem:[%s5 + $0xc] sm:$0xf]
        %v1127 = vld [vmem:[%s5 + $0x10] sm:$0xf]
        %v1128 = vld [vmem:[%s5 + $0x14] sm:$0xf]
        %v1129 = vld [vmem:[%s5 + $0x18] sm:$0xf]
        %v1130 = vld [vmem:[%s5 + $0x1c] sm:$0xf]
        %v1131 = vld [vmem:[%s6] sm:$0x1]
        %v1133 = vlaneseq
        %v1134 = vshrl.u32 %v1133, 7
        %v1135 = vsub.s32 0, %v1134
        %v1136 = vrot.slane %v1131, %v1135
        %v1146 = vunpack.c.l.b16 %v1123
        %v1147 = vunpack.c.l.b16 %v1124
        %v1148 = vunpack.c.l.b16 %v1125
        %v1149 = vunpack.c.l.b16 %v1126
        %v1150 = vunpack.c.l.b16 %v1127
        %v1151 = vunpack.c.l.b16 %v1128
        %v1152 = vunpack.c.l.b16 %v1129
        %v1153 = vunpack.c.l.b16 %v1130
        %v1154 = vpack.c.b16 %v1147, %v1146
        %v1155 = vpack.c.b16 %v1149, %v1148
        %v1156 = vpack.c.b16 %v1151, %v1150
        %v1157 = vpack.c.b16 %v1153, %v1152
        %v1163 = vsel %vm495, %v1122, 0
        %1165 = vmatprep.subr.bf16.mxu0 0
        %1166 = vmatpush1.bf16.msra.mxu0 %v1154
        %1167 = vmatprep.subr.bf16.mxu0 0
        %1168 = vmatpush1.bf16.msra.mxu0 %v1155
        %1169 = vmatprep.subr.bf16.mxu0 0
        %1170 = vmatpush1.bf16.msra.mxu0 %v1156
        %1171 = vmatprep.subr.bf16.mxu0 0
        %1172 = vmatpush1.bf16.msra.mxu0 %v1157
        %1173 = vmatprep.subr.bf16.mxu0 0
        %1174 = vmatpush1.bf16.msra.mxu0 0
        %1175 = vmatprep.subr.bf16.mxu0 0
        %1176 = vmatpush1.bf16.msra.mxu0 0
        %1177 = vmatprep.subr.bf16.mxu0 0
        %1178 = vmatpush1.bf16.msra.mxu0 0
        %1179 = vmatprep.subr.bf16.mxu0 0
        %1180 = vmatpush1.bf16.msra.mxu0 0
        %1181 = vmatprep.subr.bf16.mxu0 0
        %1182 = vmatpush1.bf16.msra.mxu0 0
        %1183 = vmatprep.subr.bf16.mxu0 0
        %1184 = vmatpush1.bf16.msra.mxu0 0
        %1185 = vmatprep.subr.bf16.mxu0 0
        %1186 = vmatpush1.bf16.msra.mxu0 0
        %1187 = vmatprep.subr.bf16.mxu0 0
        %1188 = vmatpush1.bf16.msra.mxu0 0
        %1189 = vmatprep.subr.bf16.mxu0 0
        %1190 = vmatpush1.bf16.msra.mxu0 0
        %1191 = vmatprep.subr.bf16.mxu0 0
        %1192 = vmatpush1.bf16.msra.mxu0 0
        %1193 = vmatprep.subr.bf16.mxu0 0
        %1194 = vmatpush1.bf16.msra.mxu0 0
        %1195 = vmatprep.subr.bf16.mxu0 0
        %1196 = vmatpush1.bf16.msra.mxu0 0
        %1197 = vmatprep.mubr.bf16.mxu0 0
        %1198 = vmatmul.mubr.bf16.gmra.mrb[0].mxu0 %v1163
        %v1199 = vpop.f32.mrb[0].mxu0
        %v1200 = vadd.f32 %v1136, %v1199
        %v1201 = vpop.f32.mrb[0].mxu0
        %v1202 = vpop.f32.mrb[0].mxu0
        %v1203 = vpop.f32.mrb[0].mxu0
        %1204 = vdwg.mxu0
        %vm1205 = vcmask 15360
        %1206 = vst.msk [vmem:[%s377] sm:$0xff] %vm1205, %v1200
        %p1207 = scmp.lt.s32.totalorder %s18, 1
        %s1208 = scalar_select %p1207, %s18, 1
        %s1209 = smul.addr %s1208, 8
        %s1210 = scalar_lea.vmem %s7, %s1209
        // Predicated region
        $region97: #{_lambda_.3} parent=84 // pred_check
          %p1211 = pneg %p188
        $region98: #{_lambda_.3} parent=84 // pred_check_branch
          %1213 = sbr.rel (%p1211) target = $region100
        $region99: #{_lambda_.3} parent=84 // pred_region
          _
        $region100: #{_lambda_.3} parent=84 // pred_fallthru
          _
      $region85: #{_lambda_.3} parent=5 // pred_fallthru
        _
      %p1214 = scmp.le.s32.totalorder 2, %s13
      // Predicated region
      $region101: #{_lambda_.3} parent=5 // pred_check
        %p1215 = pneg %p1214
      $region102: #{_lambda_.3} parent=5 // pred_check_branch
        %1217 = sbr.rel (%p1215) target = $region104
      $region103: #{_lambda_.3} parent=5 // pred_region
        %s1218 = ssub.s32 %s13, 2
        // Predicated region
        $region105: #{_lambda_.3} parent=103 // pred_check
          %p1219 = pneg %p194
        $region106: #{_lambda_.3} parent=103 // pred_check_branch
          %1221 = sbr.rel (%p1219) target = $region108
        $region107: #{_lambda_.3} parent=103 // pred_region
          %p1222 = scmp.lt.s32.totalorder %s19, 1
          %s1223 = scalar_select %p1222, %s19, 1
          %s1224 = smul.addr %s1223, 8
          %s1225 = scalar_lea.vmem %s7, %s1224
        $region108: #{_lambda_.3} parent=103 // pred_fallthru
          _
      $region104: #{_lambda_.3} parent=5 // pred_fallthru
        _
    $region6: #{_lambda_.3} parent=1 // loop_footer
      %s17 = sadd.s32 1, %s13
    $region7: #{_lambda_.3} parent=1 // loop_footer_branch
      %12 = sbr.rel target = $region3
    $region8: #{_lambda_.3} parent=1 // loop_exit
      _

// kernel: _lambda_.2
$region0: #{_lambda_.2}
  #allocation0 [shape = 'u32[]', space=smem, size = 0x4, offset = 0x4, fixed_abs, tag = 'smem constant byte address 0x4 - core index']
  #allocation1 [shape = 'u32[144,128]{1,0:T(1,128)}', space=vmem, size = 0x12000, scoped, tag = 'internal scratch']
  #allocation2 [shape = 'f32[16,8,256]{2,1,0:T(8,128)}', space=vmem, size = 0x20000, scoped, tag = 'scratch operand']
  #allocation3 [shape = 'f32[8,32]{1,0:T(8,128)}', space=vmem, size = 0x1000, scoped, tag = 'scratch operand']
  #allocation4 [shape = 'f32[8,32]{1,0:T(8,128)}', space=vmem, size = 0x1000, scoped, tag = 'scratch operand']
  #allocation5 [shape = 'f32[8,32]{1,0:T(8,128)}', space=vmem, size = 0x1000, scoped, tag = 'scratch operand']
  #allocation6 [shape = 'f32[8,32]{1,0:T(8,128)}', space=vmem, size = 0x1000, scoped, tag = 'scratch operand']
  %s0 = inlined_call_operand.vmem [shape: bf16[16,16,64], index: 0, kind: input, shape index: {}]
  %s1 = inlined_call_operand.vmem [shape: bf16[64,256], index: 1, kind: input, shape index: {}]
  %s2 = inlined_call_operand.vmem [shape: bf16[32,128], index: 2, kind: input, shape index: {}]
  %s3 = inlined_call_operand.vmem [shape: bf16[32,128], index: 3, kind: input, shape index: {}]
  %s4 = inlined_call_operand.vmem [shape: f32[1,256], index: 4, kind: input, shape index: {}]
  %s5 = inlined_call_operand.vmem [shape: bf16[16,16,64], index: 5, kind: output, shape index: {}]
  %s6 = sld [smem:[#allocation0]]
  $region138: #{_lambda_.2} parent=0
    _
  %s8 = ssub.s32 1, %s6
  %s9 = scalar_select 0, %s8, %s6
  $region1: #{_lambda_.2} parent=0
    #allocation7 [shape = 'u8[65536]{0}', space=vmem, size = 0x10000, scoped, tag = 'input window, operand 0']
    #allocation8 [shape = 'u8[65536]{0}', space=vmem, size = 0x10000, scoped, tag = 'output window, operand 0']
    loop: start=0, step=1, limit=4
    $region2: #{_lambda_.2} parent=1 // loop_pre_header
      _
    $region3: #{_lambda_.2} parent=1 // loop_header
      %s11 = sphi 0, %s15
      %p12 = scmp.ge.s32.totalorder %s11, 4
      %s21 = sphi 0, %s23
      %s24 = sphi 0, %s21
      %s25 = sphi 0, %s24
      %s41 = sphi 0, %s25
      %s45 = sphi 0, %s45
      %s47 = sphi 0, %s45
      %s48 = sphi 0, %s47
      %s62 = sphi 0, %s48
      %s66 = sphi 0, %s66
      %s68 = sphi 0, %s66
      %s69 = sphi 0, %s68
      %s83 = sphi 0, %s69
      %s87 = sphi 0, %s87
      %s89 = sphi 0, %s87
      %s90 = sphi 0, %s89
      %s104 = sphi 0, %s90
      %s108 = sphi 0, %s108
      %s110 = sphi 0, %s108
      %s111 = sphi 0, %s110
      %s125 = sphi 0, %s111
      %s131 = sphi 0, %s133
      %s134 = sphi 0, %s131
      %s135 = sphi 0, %s134
      %s151 = sphi 0, %s135
    $region4: #{_lambda_.2} parent=1 // loop_header_branch
      %14 = sbr.rel (%p12) target = $region8
    $region5: #{_lambda_.2} parent=1 // loop_body
      %s16 = ssub.s32 %s11, 1
      %s17 = ssub.s32 %s11, 2
      %s18 = sadd.s32 %s11, 1
      %s19 = ssub.s32 %s11, %s18
      %p20 = scmp.eq.s32.totalorder %s19, 0
      %s22 = sadd.s32 %s21, 1
      %s23 = scalar_select %p20, %s21, %s22
      %p26 = pneg %p20
      %p27 = scmp.eq.s32.totalorder %s11, 1
      %p28 = por %p26, %p27
      %p29 = scmp.ne.s32.totalorder %s21, %s24
      %p30 = scmp.eq.s32.totalorder %s11, 0
      %p31 = por %p29, %p30
      %p32 = scmp.ne.s32.totalorder %s21, %s24
      %p33 = scmp.eq.s32.totalorder %s16, 1
      %p34 = por %p32, %p33
      %p35 = scmp.ne.s32.totalorder %s24, %s25
      %p36 = scmp.eq.s32.totalorder %s16, 0
      %p37 = por %p35, %p36
      %p38 = scmp.ne.s32.totalorder %s24, %s25
      %p39 = scmp.eq.s32.totalorder %s17, 1
      %p40 = por %p38, %p39
      %p42 = scmp.ne.s32.totalorder %s25, %s41
      %p43 = scmp.eq.s32.totalorder %s17, 0
      %p44 = por %p42, %p43
      %s46 = sadd.s32 %s45, 1
      %p49 = scmp.eq.s32.totalorder %s11, 1
      %p50 = scmp.ne.s32.totalorder %s45, %s47
      %p51 = scmp.eq.s32.totalorder %s11, 0
      %p52 = por %p50, %p51
      %p53 = scmp.ne.s32.totalorder %s45, %s47
      %p54 = scmp.eq.s32.totalorder %s16, 1
      %p55 = por %p53, %p54
      %p56 = scmp.ne.s32.totalorder %s47, %s48
      %p57 = scmp.eq.s32.totalorder %s16, 0
      %p58 = por %p56, %p57
      %p59 = scmp.ne.s32.totalorder %s47, %s48
      %p60 = scmp.eq.s32.totalorder %s17, 1
      %p61 = por %p59, %p60
      %p63 = scmp.ne.s32.totalorder %s48, %s62
      %p64 = scmp.eq.s32.totalorder %s17, 0
      %p65 = por %p63, %p64
      %s67 = sadd.s32 %s66, 1
      %p70 = scmp.eq.s32.totalorder %s11, 1
      %p71 = scmp.ne.s32.totalorder %s66, %s68
      %p72 = scmp.eq.s32.totalorder %s11, 0
      %p73 = por %p71, %p72
      %p74 = scmp.ne.s32.totalorder %s66, %s68
      %p75 = scmp.eq.s32.totalorder %s16, 1
      %p76 = por %p74, %p75
      %p77 = scmp.ne.s32.totalorder %s68, %s69
      %p78 = scmp.eq.s32.totalorder %s16, 0
      %p79 = por %p77, %p78
      %p80 = scmp.ne.s32.totalorder %s68, %s69
      %p81 = scmp.eq.s32.totalorder %s17, 1
      %p82 = por %p80, %p81
      %p84 = scmp.ne.s32.totalorder %s69, %s83
      %p85 = scmp.eq.s32.totalorder %s17, 0
      %p86 = por %p84, %p85
      %s88 = sadd.s32 %s87, 1
      %p91 = scmp.eq.s32.totalorder %s11, 1
      %p92 = scmp.ne.s32.totalorder %s87, %s89
      %p93 = scmp.eq.s32.totalorder %s11, 0
      %p94 = por %p92, %p93
      %p95 = scmp.ne.s32.totalorder %s87, %s89
      %p96 = scmp.eq.s32.totalorder %s16, 1
      %p97 = por %p95, %p96
      %p98 = scmp.ne.s32.totalorder %s89, %s90
      %p99 = scmp.eq.s32.totalorder %s16, 0
      %p100 = por %p98, %p99
      %p101 = scmp.ne.s32.totalorder %s89, %s90
      %p102 = scmp.eq.s32.totalorder %s17, 1
      %p103 = por %p101, %p102
      %p105 = scmp.ne.s32.totalorder %s90, %s104
      %p106 = scmp.eq.s32.totalorder %s17, 0
      %p107 = por %p105, %p106
      %s109 = sadd.s32 %s108, 1
      %p112 = scmp.eq.s32.totalorder %s11, 1
      %p113 = scmp.ne.s32.totalorder %s108, %s110
      %p114 = scmp.eq.s32.totalorder %s11, 0
      %p115 = por %p113, %p114
      %p116 = scmp.ne.s32.totalorder %s108, %s110
      %p117 = scmp.eq.s32.totalorder %s16, 1
      %p118 = por %p116, %p117
      %p119 = scmp.ne.s32.totalorder %s110, %s111
      %p120 = scmp.eq.s32.totalorder %s16, 0
      %p121 = por %p119, %p120
      %p122 = scmp.ne.s32.totalorder %s110, %s111
      %p123 = scmp.eq.s32.totalorder %s17, 1
      %p124 = por %p122, %p123
      %p126 = scmp.ne.s32.totalorder %s111, %s125
      %p127 = scmp.eq.s32.totalorder %s17, 0
      %p128 = por %p126, %p127
      %s129 = ssub.s32 %s11, %s18
      %p130 = scmp.eq.s32.totalorder %s129, 0
      %s132 = sadd.s32 %s131, 1
      %s133 = scalar_select %p130, %s131, %s132
      %p136 = pneg %p130
      %p137 = scmp.eq.s32.totalorder %s11, 1
      %p138 = por %p136, %p137
      %p139 = scmp.ne.s32.totalorder %s131, %s134
      %p140 = scmp.eq.s32.totalorder %s11, 0
      %p141 = por %p139, %p140
      %p142 = scmp.ne.s32.totalorder %s131, %s134
      %p143 = scmp.eq.s32.totalorder %s16, 1
      %p144 = por %p142, %p143
      %p145 = scmp.ne.s32.totalorder %s134, %s135
      %p146 = scmp.eq.s32.totalorder %s16, 0
      %p147 = por %p145, %p146
      %p148 = scmp.ne.s32.totalorder %s134, %s135
      %p149 = scmp.eq.s32.totalorder %s17, 1
      %p150 = por %p148, %p149
      %p152 = scmp.ne.s32.totalorder %s135, %s151
      %p153 = scmp.eq.s32.totalorder %s17, 0
      %p154 = por %p152, %p153
      %p155 = scmp.le.s32.totalorder 1, %s11
      %p156 = scmp.lt.s32.totalorder %s11, 3
      %p157 = pnand %p155, %p156
      %p158 = pneg %p157
      // Predicated region
      $region9: #{_lambda_.2} parent=5 // pred_check
        _
      $region10: #{_lambda_.2} parent=5 // pred_check_branch
        %160 = sbr.rel (%p157) target = $region12
      $region11: #{_lambda_.2} parent=5 // pred_region
        %s161 = ssub.s32 %s11, 1
        // Predicated region
        $region13: #{_lambda_.2} parent=11 // pred_check
          %p162 = pneg %p58
        $region14: #{_lambda_.2} parent=11 // pred_check_branch
          %164 = sbr.rel (%p162) target = $region16
        $region15: #{_lambda_.2} parent=11 // pred_region
          _
        $region16: #{_lambda_.2} parent=11 // pred_fallthru
          _
        // Predicated region
        $region17: #{_lambda_.2} parent=11 // pred_check
          %p165 = pneg %p79
        $region18: #{_lambda_.2} parent=11 // pred_check_branch
          %167 = sbr.rel (%p165) target = $region20
        $region19: #{_lambda_.2} parent=11 // pred_region
          _
        $region20: #{_lambda_.2} parent=11 // pred_fallthru
          _
        // Predicated region
        $region21: #{_lambda_.2} parent=11 // pred_check
          %p168 = pneg %p100
        $region22: #{_lambda_.2} parent=11 // pred_check_branch
          %170 = sbr.rel (%p168) target = $region24
        $region23: #{_lambda_.2} parent=11 // pred_region
          _
        $region24: #{_lambda_.2} parent=11 // pred_fallthru
          _
        // Predicated region
        $region25: #{_lambda_.2} parent=11 // pred_check
          %p171 = pneg %p121
        $region26: #{_lambda_.2} parent=11 // pred_check_branch
          %173 = sbr.rel (%p171) target = $region28
        $region27: #{_lambda_.2} parent=11 // pred_region
          _
        $region28: #{_lambda_.2} parent=11 // pred_fallthru
          _
      $region12: #{_lambda_.2} parent=5 // pred_fallthru
        _
      %p174 = scmp.lt.s32.totalorder %s11, 2
      // Predicated region
      $region29: #{_lambda_.2} parent=5 // pred_check
        %p175 = pneg %p174
      $region30: #{_lambda_.2} parent=5 // pred_check_branch
        %177 = sbr.rel (%p175) target = $region32
      $region31: #{_lambda_.2} parent=5 // pred_region
        // Predicated region
        $region33: #{_lambda_.2} parent=31 // pred_check
          %p178 = pneg %p31
        $region34: #{_lambda_.2} parent=31 // pred_check_branch
          %180 = sbr.rel (%p178) target = $region36
        $region35: #{_lambda_.2} parent=31 // pred_region
          %s181 = sand.u32 %s21, 1
          %s182 = sand.u32 %s21, 1
          %s183 = smul.addr %s182, 64
          %s184 = scalar_lea.vmem [#allocation7], %s183
          %s185 = smul.addr %s11, 4
          %s186 = scalar_lea.vmem %s0, %s185
          // Predicated region
          $region37: #{_lambda_.2} parent=35 // pred_check
            _
          $region38: #{_lambda_.2} parent=35 // pred_check_branch
            %188 = sbr.rel (0) target = $region40
          $region39: #{_lambda_.2} parent=35 // pred_region
            // Predicated region
            $region41: #{_lambda_.2} parent=39 // pred_check
              _
            $region42: #{_lambda_.2} parent=39 // pred_check_branch
              %190 = sbr.rel target = $region44
            $region43: #{_lambda_.2} parent=39 // pred_region
              // Predicated region
              $region56: #{_lambda_.2} parent=43 // pred_check
                _
              $region57: #{_lambda_.2} parent=43 // pred_check_branch
                %235 = sbr.rel (0) target = $region59
              $region58: #{_lambda_.2} parent=43 // pred_region
                loop: start=0, step=1, limit=1
                $region60: #{_lambda_.2} parent=58 // loop_pre_header
                  _
                $region61: #{_lambda_.2} parent=58 // loop_header
                  %s237 = sphi 0, %s241
                  %p238 = scmp.ge.s32.totalorder %s237, 1
                  %s242 = sphi %s186, %s186
                  %s243 = sphi %s184, %s184
                $region62: #{_lambda_.2} parent=58 // loop_header_branch
                  %240 = sbr.rel (%p238) target = $region66
                $region63: #{_lambda_.2} parent=58 // loop_body
                  _
                $region64: #{_lambda_.2} parent=58 // loop_footer
                  %s241 = sadd.s32 1, %s237
                $region65: #{_lambda_.2} parent=58 // loop_footer_branch
                  %236 = sbr.rel target = $region61
                $region66: #{_lambda_.2} parent=58 // loop_exit
                  _
                loop: start=0, step=1, limit=1
                $region67: #{_lambda_.2} parent=58 // loop_pre_header
                  _
                $region68: #{_lambda_.2} parent=58 // loop_header
                  %s246 = sphi 0, %s250
                  %p247 = scmp.ge.s32.totalorder %s246, 1
                  %s251 = sphi %s186, %s186
                  %s252 = sphi %s184, %s184
                $region69: #{_lambda_.2} parent=58 // loop_header_branch
                  %249 = sbr.rel (%p247) target = $region73
                $region70: #{_lambda_.2} parent=58 // loop_body
                  %v253 = vld [vmem:[%s251] sm:$0xf]
                  %254 = vst [vmem:[%s252] sm:$0xf] %v253
                  %v255 = vld [vmem:[%s251 + $0x8] sm:$0xf]
                  %256 = vst [vmem:[%s252 + $0x4] sm:$0xf] %v255
                  %v257 = vld [vmem:[%s251 + $0x10] sm:$0xf]
                  %258 = vst [vmem:[%s252 + $0x8] sm:$0xf] %v257
                  %v259 = vld [vmem:[%s251 + $0x18] sm:$0xf]
                  %260 = vst [vmem:[%s252 + $0xc] sm:$0xf] %v259
                  %v261 = vld [vmem:[%s251 + $0x20] sm:$0xf]
                  %262 = vst [vmem:[%s252 + $0x10] sm:$0xf] %v261
                  %v263 = vld [vmem:[%s251 + $0x28] sm:$0xf]
                  %264 = vst [vmem:[%s252 + $0x14] sm:$0xf] %v263
                  %v265 = vld [vmem:[%s251 + $0x30] sm:$0xf]
                  %266 = vst [vmem:[%s252 + $0x18] sm:$0xf] %v265
                  %v267 = vld [vmem:[%s251 + $0x38] sm:$0xf]
                  %268 = vst [vmem:[%s252 + $0x1c] sm:$0xf] %v267
                  %v269 = vld [vmem:[%s251 + $0x40] sm:$0xf]
                  %270 = vst [vmem:[%s252 + $0x20] sm:$0xf] %v269
                  %v271 = vld [vmem:[%s251 + $0x48] sm:$0xf]
                  %272 = vst [vmem:[%s252 + $0x24] sm:$0xf] %v271
                  %v273 = vld [vmem:[%s251 + $0x50] sm:$0xf]
                  %274 = vst [vmem:[%s252 + $0x28] sm:$0xf] %v273
                  %v275 = vld [vmem:[%s251 + $0x58] sm:$0xf]
                  %276 = vst [vmem:[%s252 + $0x2c] sm:$0xf] %v275
                  %v277 = vld [vmem:[%s251 + $0x60] sm:$0xf]
                  %278 = vst [vmem:[%s252 + $0x30] sm:$0xf] %v277
                  %v279 = vld [vmem:[%s251 + $0x68] sm:$0xf]
                  %280 = vst [vmem:[%s252 + $0x34] sm:$0xf] %v279
                  %v281 = vld [vmem:[%s251 + $0x70] sm:$0xf]
                  %282 = vst [vmem:[%s252 + $0x38] sm:$0xf] %v281
                  %v283 = vld [vmem:[%s251 + $0x78] sm:$0xf]
                  %284 = vst [vmem:[%s252 + $0x3c] sm:$0xf] %v283
                $region71: #{_lambda_.2} parent=58 // loop_footer
                  %s250 = sadd.s32 1, %s246
                $region72: #{_lambda_.2} parent=58 // loop_footer_branch
                  %245 = sbr.rel target = $region68
                $region73: #{_lambda_.2} parent=58 // loop_exit
                  _
              $region59: #{_lambda_.2} parent=43 // pred_fallthru
                _
            $region44: #{_lambda_.2} parent=39 // pred_fallthru
              _
            // Predicated region
            $region45: #{_lambda_.2} parent=39 // pred_check
              _
            $region46: #{_lambda_.2} parent=39 // pred_check_branch
              %192 = sbr.rel (0) target = $region48
            $region47: #{_lambda_.2} parent=39 // pred_region
              loop: start=0, step=1, limit=1
              $region49: #{_lambda_.2} parent=47 // loop_pre_header
                _
              $region50: #{_lambda_.2} parent=47 // loop_header
                %s195 = sphi 0, %s199
                %p196 = scmp.ge.s32.totalorder %s195, 1
                %s200 = sphi %s186, %s186
                %s201 = sphi %s184, %s184
              $region51: #{_lambda_.2} parent=47 // loop_header_branch
                %198 = sbr.rel (%p196) target = $region55
              $region52: #{_lambda_.2} parent=47 // loop_body
                %v202 = vld [vmem:[%s200] sm:$0xf]
                %203 = vst [vmem:[%s201] sm:$0xf] %v202
                %v204 = vld [vmem:[%s200 + $0x8] sm:$0xf]
                %205 = vst [vmem:[%s201 + $0x4] sm:$0xf] %v204
                %v206 = vld [vmem:[%s200 + $0x10] sm:$0xf]
                %207 = vst [vmem:[%s201 + $0x8] sm:$0xf] %v206
                %v208 = vld [vmem:[%s200 + $0x18] sm:$0xf]
                %209 = vst [vmem:[%s201 + $0xc] sm:$0xf] %v208
                %v210 = vld [vmem:[%s200 + $0x20] sm:$0xf]
                %211 = vst [vmem:[%s201 + $0x10] sm:$0xf] %v210
                %v212 = vld [vmem:[%s200 + $0x28] sm:$0xf]
                %213 = vst [vmem:[%s201 + $0x14] sm:$0xf] %v212
                %v214 = vld [vmem:[%s200 + $0x30] sm:$0xf]
                %215 = vst [vmem:[%s201 + $0x18] sm:$0xf] %v214
                %v216 = vld [vmem:[%s200 + $0x38] sm:$0xf]
                %217 = vst [vmem:[%s201 + $0x1c] sm:$0xf] %v216
                %v218 = vld [vmem:[%s200 + $0x40] sm:$0xf]
                %219 = vst [vmem:[%s201 + $0x20] sm:$0xf] %v218
                %v220 = vld [vmem:[%s200 + $0x48] sm:$0xf]
                %221 = vst [vmem:[%s201 + $0x24] sm:$0xf] %v220
                %v222 = vld [vmem:[%s200 + $0x50] sm:$0xf]
                %223 = vst [vmem:[%s201 + $0x28] sm:$0xf] %v222
                %v224 = vld [vmem:[%s200 + $0x58] sm:$0xf]
                %225 = vst [vmem:[%s201 + $0x2c] sm:$0xf] %v224
                %v226 = vld [vmem:[%s200 + $0x60] sm:$0xf]
                %227 = vst [vmem:[%s201 + $0x30] sm:$0xf] %v226
                %v228 = vld [vmem:[%s200 + $0x68] sm:$0xf]
                %229 = vst [vmem:[%s201 + $0x34] sm:$0xf] %v228
                %v230 = vld [vmem:[%s200 + $0x70] sm:$0xf]
                %231 = vst [vmem:[%s201 + $0x38] sm:$0xf] %v230
                %v232 = vld [vmem:[%s200 + $0x78] sm:$0xf]
                %233 = vst [vmem:[%s201 + $0x3c] sm:$0xf] %v232
              $region53: #{_lambda_.2} parent=47 // loop_footer
                %s199 = sadd.s32 1, %s195
              $region54: #{_lambda_.2} parent=47 // loop_footer_branch
                %194 = sbr.rel target = $region50
              $region55: #{_lambda_.2} parent=47 // loop_exit
                _
            $region48: #{_lambda_.2} parent=39 // pred_fallthru
              _
          $region40: #{_lambda_.2} parent=35 // pred_fallthru
            _
          %285 = vnop
        $region36: #{_lambda_.2} parent=31 // pred_fallthru
          _
      $region32: #{_lambda_.2} parent=5 // pred_fallthru
        _
      %p286 = scmp.le.s32.totalorder 1, %s11
      %p287 = scmp.lt.s32.totalorder %s11, 3
      %p288 = pnand %p286, %p287
      %p289 = pneg %p288
      // Predicated region
      $region74: #{_lambda_.2} parent=5 // pred_check
        _
      $region75: #{_lambda_.2} parent=5 // pred_check_branch
        %291 = sbr.rel (%p288) target = $region77
      $region76: #{_lambda_.2} parent=5 // pred_region
        %s292 = ssub.s32 %s11, 1
        %s293 = sand.u32 %s24, 1
        %s294 = sand.u32 %s24, 1
        %s295 = smul.addr %s294, 64
        %s296 = scalar_lea.vmem [#allocation7], %s295
        // Predicated region
        $region78: #{_lambda_.2} parent=76 // pred_check
          %p297 = pneg %p37
        $region79: #{_lambda_.2} parent=76 // pred_check_branch
          %299 = sbr.rel (%p297) target = $region81
        $region80: #{_lambda_.2} parent=76 // pred_region
          _
        $region81: #{_lambda_.2} parent=76 // pred_fallthru
          _
        %s300 = sand.u32 %s24, 1
        %s301 = sand.u32 %s24, 1
        %s302 = smul.addr %s301, 64
        %s303 = scalar_lea.vmem [#allocation7], %s302
        %p304 = pneg %p37
        %p305 = pneg %p34
        %p306 = pneg %p58
        %p307 = pneg %p55
        %p308 = pneg %p79
        %p309 = pneg %p76
        %p310 = pneg %p100
        %p311 = pneg %p97
        %p312 = pneg %p121
        %p313 = pneg %p118
        %p314 = pneg %p147
        %p315 = pneg %p144
        %s316 = sand.u32 %s134, 1
        %s317 = sand.u32 %s134, 1
        %s318 = smul.addr %s317, 64
        %s319 = scalar_lea.vmem [#allocation8], %s318
        %v321 = vld [vmem:[%s296] sm:$0xf]
        %v322 = vld [vmem:[%s296 + $0x4] sm:$0xf]
        %v323 = vld [vmem:[%s296 + $0x8] sm:$0xf]
        %v324 = vld [vmem:[%s296 + $0xc] sm:$0xf]
        %v325 = vld [vmem:[%s296 + $0x10] sm:$0xf]
        %v326 = vld [vmem:[%s296 + $0x14] sm:$0xf]
        %v327 = vld [vmem:[%s296 + $0x18] sm:$0xf]
        %v328 = vld [vmem:[%s296 + $0x1c] sm:$0xf]
        %v329 = vld [vmem:[%s296 + $0x20] sm:$0xf]
        %v330 = vld [vmem:[%s296 + $0x24] sm:$0xf]
        %v331 = vld [vmem:[%s296 + $0x28] sm:$0xf]
        %v332 = vld [vmem:[%s296 + $0x2c] sm:$0xf]
        %v333 = vld [vmem:[%s296 + $0x30] sm:$0xf]
        %v334 = vld [vmem:[%s296 + $0x34] sm:$0xf]
        %v335 = vld [vmem:[%s296 + $0x38] sm:$0xf]
        %v336 = vld [vmem:[%s296 + $0x3c] sm:$0xf]
        %v337 = vld [vmem:[%s1] sm:$0xff]
        %v338 = vld [vmem:[%s1 + $0x8] sm:$0xff]
        %v339 = vld [vmem:[%s1 + $0x10] sm:$0xff]
        %v340 = vld [vmem:[%s1 + $0x18] sm:$0xff]
        %v341 = vld [vmem:[%s1 + $0x20] sm:$0xff]
        %v342 = vld [vmem:[%s1 + $0x28] sm:$0xff]
        %v343 = vld [vmem:[%s1 + $0x30] sm:$0xff]
        %v344 = vld [vmem:[%s1 + $0x38] sm:$0xff]
        %v345 = vld [vmem:[%s4] sm:$0x3]
        %v347 = vlaneseq
        %v348 = vshrl.u32 %v347, 7
        %v349 = vsub.s32 0, %v348
        %v350 = vrot.slane %v345, %v349
        %v351 = vlaneseq
        %v352 = vshrl.u32 %v351, 7
        %v353 = vsub.s32 1, %v352
        %v354 = vrot.slane %v345, %v353
        %v373 = vunpack.c.l.b16 %v321
        %v374 = vunpack.c.l.b16 %v322
        %v375 = vunpack.c.l.b16 %v323
        %v376 = vunpack.c.l.b16 %v324
        %v377 = vunpack.c.l.b16 %v325
        %v378 = vunpack.c.l.b16 %v326
        %v379 = vunpack.c.l.b16 %v327
        %v380 = vunpack.c.l.b16 %v328
        %v381 = vunpack.c.l.b16 %v329
        %v382 = vunpack.c.l.b16 %v330
        %v383 = vunpack.c.l.b16 %v331
        %v384 = vunpack.c.l.b16 %v332
        %v385 = vunpack.c.l.b16 %v333
        %v386 = vunpack.c.l.b16 %v334
        %v387 = vunpack.c.l.b16 %v335
        %v388 = vunpack.c.l.b16 %v336
        %v389 = vpack.c.b16 %v374, %v373
        %v390 = vpack.c.b16 %v376, %v375
        %v391 = vpack.c.b16 %v378, %v377
        %v392 = vpack.c.b16 %v380, %v379
        %v393 = vpack.c.b16 %v382, %v381
        %v394 = vpack.c.b16 %v384, %v383
        %v395 = vpack.c.b16 %v386, %v385
        %v396 = vpack.c.b16 %v388, %v387
        %v405 = vunpack.c.l.b16 %v337
        %v406 = vunpack.c.h.b16 %v337
        %v407 = vunpack.c.l.b16 %v338
        %v408 = vunpack.c.h.b16 %v338
        %v409 = vunpack.c.l.b16 %v339
        %v410 = vunpack.c.h.b16 %v339
        %v411 = vunpack.c.l.b16 %v340
        %v412 = vunpack.c.h.b16 %v340
        %v413 = vunpack.c.l.b16 %v341
        %v414 = vunpack.c.h.b16 %v341
        %v415 = vunpack.c.l.b16 %v342
        %v416 = vunpack.c.h.b16 %v342
        %v417 = vunpack.c.l.b16 %v343
        %v418 = vunpack.c.h.b16 %v343
        %v419 = vunpack.c.l.b16 %v344
        %v420 = vunpack.c.h.b16 %v344
        %v421 = vpack.c.b16 %v407, %v405
        %v422 = vpack.c.b16 %v408, %v406
        %v423 = vpack.c.b16 %v411, %v409
        %v424 = vpack.c.b16 %v412, %v410
        %v425 = vpack.c.b16 %v415, %v413
        %v426 = vpack.c.b16 %v416, %v414
        %v427 = vpack.c.b16 %v419, %v417
        %v428 = vpack.c.b16 %v420, %v418
        %vm437 = vcmask 523264
        %v439 = vsel %vm437, %v389, 0
        %v442 = vsel %vm437, %v390, 0
        %v445 = vsel %vm437, %v391, 0
        %v448 = vsel %vm437, %v392, 0
        %v451 = vsel %vm437, %v393, 0
        %v454 = vsel %vm437, %v394, 0
        %v457 = vsel %vm437, %v395, 0
        %v460 = vsel %vm437, %v396, 0
        %462 = vmatprep.subr.bf16.mxu0 %v422
        %463 = vmatpush1.bf16.msra.mxu0 %v421
        %464 = vmatprep.subr.bf16.mxu0 %v424
        %465 = vmatpush1.bf16.msra.mxu0 %v423
        %466 = vmatprep.subr.bf16.mxu0 %v426
        %467 = vmatpush1.bf16.msra.mxu0 %v425
        %468 = vmatprep.subr.bf16.mxu0 %v428
        %469 = vmatpush1.bf16.msra.mxu0 %v427
        %470 = vmatprep.subr.bf16.mxu0 0
        %471 = vmatpush1.bf16.msra.mxu0 0
        %472 = vmatprep.subr.bf16.mxu0 0
        %473 = vmatpush1.bf16.msra.mxu0 0
        %474 = vmatprep.subr.bf16.mxu0 0
        %475 = vmatpush1.bf16.msra.mxu0 0
        %476 = vmatprep.subr.bf16.mxu0 0
        %477 = vmatpush1.bf16.msra.mxu0 0
        %478 = vmatprep.subr.bf16.mxu0 0
        %479 = vmatpush1.bf16.msra.mxu0 0
        %480 = vmatprep.subr.bf16.mxu0 0
        %481 = vmatpush1.bf16.msra.mxu0 0
        %482 = vmatprep.subr.bf16.mxu0 0
        %483 = vmatpush1.bf16.msra.mxu0 0
        %484 = vmatprep.subr.bf16.mxu0 0
        %485 = vmatpush1.bf16.msra.mxu0 0
        %486 = vmatprep.subr.bf16.mxu0 0
        %487 = vmatpush1.bf16.msra.mxu0 0
        %488 = vmatprep.subr.bf16.mxu0 0
        %489 = vmatpush1.bf16.msra.mxu0 0
        %490 = vmatprep.subr.bf16.mxu0 0
        %491 = vmatpush1.bf16.msra.mxu0 0
        %492 = vmatprep.subr.bf16.mxu0 0
        %493 = vmatpush1.bf16.msra.mxu0 0
        %494 = vmatprep.mubr.bf16.mxu0 0
        %495 = vmatmul.mubr.bf16.gmra.mrb[0].mxu0 %v439
        %v496 = vpop.f32.mrb[0].mxu0
        %v497 = vadd.f32 %v350, %v496
        %v498 = vpop.f32.mrb[0].mxu0
        %v499 = vadd.f32 %v354, %v498
        %v500 = vpop.f32.mrb[0].mxu0
        %v501 = vadd.f32 %v350, %v500
        %v502 = vpop.f32.mrb[0].mxu0
        %v503 = vadd.f32 %v354, %v502
        %504 = vmatprep.mubr.bf16.mxu0 0
        %505 = vmatmul.mubr.bf16.gmra.mrb[0].mxu0 %v442
        %v506 = vpop.f32.mrb[0].mxu0
        %v507 = vadd.f32 %v350, %v506
        %v508 = vpop.f32.mrb[0].mxu0
        %v509 = vadd.f32 %v354, %v508
        %v510 = vpop.f32.mrb[0].mxu0
        %v511 = vadd.f32 %v350, %v510
        %v512 = vpop.f32.mrb[0].mxu0
        %v513 = vadd.f32 %v354, %v512
        %514 = vmatprep.mubr.bf16.mxu0 0
        %515 = vmatmul.mubr.bf16.gmra.mrb[0].mxu0 %v445
        %v516 = vpop.f32.mrb[0].mxu0
        %v517 = vadd.f32 %v350, %v516
        %v518 = vpop.f32.mrb[0].mxu0
        %v519 = vadd.f32 %v354, %v518
        %v520 = vpop.f32.mrb[0].mxu0
        %v521 = vadd.f32 %v350, %v520
        %v522 = vpop.f32.mrb[0].mxu0
        %v523 = vadd.f32 %v354, %v522
        %524 = vmatprep.mubr.bf16.mxu0 0
        %525 = vmatmul.mubr.bf16.gmra.mrb[0].mxu0 %v448
        %v526 = vpop.f32.mrb[0].mxu0
        %v527 = vadd.f32 %v350, %v526
        %v528 = vpop.f32.mrb[0].mxu0
        %v529 = vadd.f32 %v354, %v528
        %v530 = vpop.f32.mrb[0].mxu0
        %v531 = vadd.f32 %v350, %v530
        %v532 = vpop.f32.mrb[0].mxu0
        %v533 = vadd.f32 %v354, %v532
        %534 = vmatprep.mubr.bf16.mxu0 0
        %535 = vmatmul.mubr.bf16.gmra.mrb[0].mxu0 %v451
        %v536 = vpop.f32.mrb[0].mxu0
        %v537 = vadd.f32 %v350, %v536
        %v538 = vpop.f32.mrb[0].mxu0
        %v539 = vadd.f32 %v354, %v538
        %v540 = vpop.f32.mrb[0].mxu0
        %v541 = vadd.f32 %v350, %v540
        %v542 = vpop.f32.mrb[0].mxu0
        %v543 = vadd.f32 %v354, %v542
        %544 = vmatprep.mubr.bf16.mxu0 0
        %545 = vmatmul.mubr.bf16.gmra.mrb[0].mxu0 %v454
        %v546 = vpop.f32.mrb[0].mxu0
        %v547 = vadd.f32 %v350, %v546
        %v548 = vpop.f32.mrb[0].mxu0
        %v549 = vadd.f32 %v354, %v548
        %v550 = vpop.f32.mrb[0].mxu0
        %v551 = vadd.f32 %v350, %v550
        %v552 = vpop.f32.mrb[0].mxu0
        %v553 = vadd.f32 %v354, %v552
        %554 = vmatprep.mubr.bf16.mxu0 0
        %555 = vmatmul.mubr.bf16.gmra.mrb[0].mxu0 %v457
        %v556 = vpop.f32.mrb[0].mxu0
        %v557 = vadd.f32 %v350, %v556
        %v558 = vpop.f32.mrb[0].mxu0
        %v559 = vadd.f32 %v354, %v558
        %v560 = vpop.f32.mrb[0].mxu0
        %v561 = vadd.f32 %v350, %v560
        %v562 = vpop.f32.mrb[0].mxu0
        %v563 = vadd.f32 %v354, %v562
        %564 = vmatprep.mubr.bf16.mxu0 0
        %565 = vmatmul.mubr.bf16.gmra.mrb[0].mxu0 %v460
        %v566 = vpop.f32.mrb[0].mxu0
        %v567 = vadd.f32 %v350, %v566
        %v568 = vpop.f32.mrb[0].mxu0
        %v569 = vadd.f32 %v354, %v568
        %v570 = vpop.f32.mrb[0].mxu0
        %v571 = vadd.f32 %v350, %v570
        %v572 = vpop.f32.mrb[0].mxu0
        %v573 = vadd.f32 %v354, %v572
        %574 = vdwg.mxu0
        %575 = vst [vmem:[#allocation2] sm:$0xff] %v497
        %576 = vst [vmem:[#allocation2 + $0x8] sm:$0xff] %v499
        %577 = vst [vmem:[#allocation2 + $0x10] sm:$0xff] %v501
        %578 = vst [vmem:[#allocation2 + $0x18] sm:$0xff] %v503
        %579 = vst [vmem:[#allocation2 + $0x20] sm:$0xff] %v507
        %580 = vst [vmem:[#allocation2 + $0x28] sm:$0xff] %v509
        %581 = vst [vmem:[#allocation2 + $0x30] sm:$0xff] %v511
        %582 = vst [vmem:[#allocation2 + $0x38] sm:$0xff] %v513
        %583 = vst [vmem:[#allocation2 + $0x40] sm:$0xff] %v517
        %584 = vst [vmem:[#allocation2 + $0x48] sm:$0xff] %v519
        %585 = vst [vmem:[#allocation2 + $0x50] sm:$0xff] %v521
        %586 = vst [vmem:[#allocation2 + $0x58] sm:$0xff] %v523
        %587 = vst [vmem:[#allocation2 + $0x60] sm:$0xff] %v527
        %588 = vst [vmem:[#allocation2 + $0x68] sm:$0xff] %v529
        %589 = vst [vmem:[#allocation2 + $0x70] sm:$0xff] %v531
        %590 = vst [vmem:[#allocation2 + $0x78] sm:$0xff] %v533
        %591 = vst [vmem:[#allocation2 + $0x80] sm:$0xff] %v537
        %592 = vst [vmem:[#allocation2 + $0x88] sm:$0xff] %v539
        %593 = vst [vmem:[#allocation2 + $0x90] sm:$0xff] %v541
        %594 = vst [vmem:[#allocation2 + $0x98] sm:$0xff] %v543
        %595 = vst [vmem:[#allocation2 + $0xa0] sm:$0xff] %v547
        %596 = vst [vmem:[#allocation2 + $0xa8] sm:$0xff] %v549
        %597 = vst [vmem:[#allocation2 + $0xb0] sm:$0xff] %v551
        %598 = vst [vmem:[#allocation2 + $0xb8] sm:$0xff] %v553
        %599 = vst [vmem:[#allocation2 + $0xc0] sm:$0xff] %v557
        %600 = vst [vmem:[#allocation2 + $0xc8] sm:$0xff] %v559
        %601 = vst [vmem:[#allocation2 + $0xd0] sm:$0xff] %v561
        %602 = vst [vmem:[#allocation2 + $0xd8] sm:$0xff] %v563
        %603 = vst [vmem:[#allocation2 + $0xe0] sm:$0xff] %v567
        %604 = vst [vmem:[#allocation2 + $0xe8] sm:$0xff] %v569
        %605 = vst [vmem:[#allocation2 + $0xf0] sm:$0xff] %v571
        %606 = vst [vmem:[#allocation2 + $0xf8] sm:$0xff] %v573
        %vm607 = vcmask 261120
        %608 = vst.msk [vmem:[#allocation3] sm:$0xff] %vm607, 0.0
        %609 = vst.msk [vmem:[#allocation4] sm:$0xff] %vm607, 0.0
        %610 = vst.msk [vmem:[#allocation5] sm:$0xff] %vm607, 0.0
        %611 = vst.msk [vmem:[#allocation6] sm:$0xff] %vm607, 0.0
        loop: start=0, step=1, limit=8
        $region82: #{_lambda_.2} parent=76 // loop_pre_header
          _
        $region83: #{_lambda_.2} parent=76 // loop_header
          %s613 = sphi 0, %s617
          %p614 = scmp.ge.s32.totalorder %s613, 8
        $region84: #{_lambda_.2} parent=76 // loop_header_branch
          %616 = sbr.rel (%p614) target = $region88
        $region85: #{_lambda_.2} parent=76 // loop_body
          %s618 = smul.u32 %s613, 2
          %s619 = ssub.s32 15, %s618
          %s620 = smul.u32 %s618, 2
          %s621 = smul.addr %s620, 8
          %s622 = scalar_lea.vmem [#allocation2], %s621
          %v623 = vld [vmem:[%s622] sm:$0xff]
          %v624 = vld [vmem:[#allocation3] sm:$0xff]
          %v625 = vpack.c.bf16 %v624, %v624
          %v626 = vld [vmem:[%s2] sm:$0xf]
          %v627 = vld [vmem:[%s2 + $0x4] sm:$0xf]
          %v628 = vld [vmem:[%s2 + $0x8] sm:$0xf]
          %v629 = vld [vmem:[%s2 + $0xc] sm:$0xf]
          %v634 = vunpack.c.l.b16 %v626
          %v635 = vunpack.c.l.b16 %v627
          %v636 = vunpack.c.l.b16 %v628
          %v637 = vunpack.c.l.b16 %v629
          %v638 = vpack.c.b16 %v635, %v634
          %v639 = vpack.c.b16 %v637, %v636
          %v643 = vsel %vm607, %v625, 0
          %645 = vmatprep.subr.bf16.mxu0 0
          %646 = vmatpush1.bf16.msra.mxu0 %v638
          %647 = vmatprep.subr.bf16.mxu0 0
          %648 = vmatpush1.bf16.msra.mxu0 %v639
          %649 = vmatprep.subr.bf16.mxu0 0
          %650 = vmatpush1.bf16.msra.mxu0 0
          %651 = vmatprep.subr.bf16.mxu0 0
          %652 = vmatpush1.bf16.msra.mxu0 0
          %653 = vmatprep.subr.bf16.mxu0 0
          %654 = vmatpush1.bf16.msra.mxu0 0
          %655 = vmatprep.subr.bf16.mxu0 0
          %656 = vmatpush1.bf16.msra.mxu0 0
          %657 = vmatprep.subr.bf16.mxu0 0
          %658 = vmatpush1.bf16.msra.mxu0 0
          %659 = vmatprep.subr.bf16.mxu0 0
          %660 = vmatpush1.bf16.msra.mxu0 0
          %661 = vmatprep.subr.bf16.mxu0 0
          %662 = vmatpush1.bf16.msra.mxu0 0
          %663 = vmatprep.subr.bf16.mxu0 0
          %664 = vmatpush1.bf16.msra.mxu0 0
          %665 = vmatprep.subr.bf16.mxu0 0
          %666 = vmatpush1.bf16.msra.mxu0 0
          %667 = vmatprep.subr.bf16.mxu0 0
          %668 = vmatpush1.bf16.msra.mxu0 0
          %669 = vmatprep.subr.bf16.mxu0 0
          %670 = vmatpush1.bf16.msra.mxu0 0
          %671 = vmatprep.subr.bf16.mxu0 0
          %672 = vmatpush1.bf16.msra.mxu0 0
          %673 = vmatprep.subr.bf16.mxu0 0
          %674 = vmatpush1.bf16.msra.mxu0 0
          %675 = vmatprep.subr.bf16.mxu0 0
          %676 = vmatpush1.bf16.msra.mxu0 0
          %677 = vmatprep.mubr.bf16.mxu0 0
          %678 = vmatmul.mubr.bf16.gmra.mrb[0].mxu0 %v643
          %v679 = vpop.f32.mrb[0].mxu0
          %v680 = vadd.f32 0.0, %v679
          %v681 = vpop.f32.mrb[0].mxu0
          %v682 = vpop.f32.mrb[0].mxu0
          %v683 = vpop.f32.mrb[0].mxu0
          %684 = vdwg.mxu0
          %v685 = vadd.f32 %v623, %v680
          %s686 = smul.u32 %s619, 2
          %s687 = smul.addr %s686, 8
          %s688 = scalar_lea.vmem [#allocation2], %s687
          %v689 = vld [vmem:[%s688 + $0x8] sm:$0xff]
          %v690 = vld [vmem:[#allocation5] sm:$0xff]
          %v691 = vpack.c.bf16 %v690, %v690
          %v692 = vld [vmem:[%s3] sm:$0xf]
          %v693 = vld [vmem:[%s3 + $0x4] sm:$0xf]
          %v694 = vld [vmem:[%s3 + $0x8] sm:$0xf]
          %v695 = vld [vmem:[%s3 + $0xc] sm:$0xf]
          %v700 = vunpack.c.l.b16 %v692
          %v701 = vunpack.c.l.b16 %v693
          %v702 = vunpack.c.l.b16 %v694
          %v703 = vunpack.c.l.b16 %v695
          %v704 = vpack.c.b16 %v701, %v700
          %v705 = vpack.c.b16 %v703, %v702
          %v709 = vsel %vm607, %v691, 0
          %711 = vmatprep.subr.bf16.mxu0 0
          %712 = vmatpush1.bf16.msra.mxu0 %v704
          %713 = vmatprep.subr.bf16.mxu0 0
          %714 = vmatpush1.bf16.msra.mxu0 %v705
          %715 = vmatprep.subr.bf16.mxu0 0
          %716 = vmatpush1.bf16.msra.mxu0 0
          %717 = vmatprep.subr.bf16.mxu0 0
          %718 = vmatpush1.bf16.msra.mxu0 0
          %719 = vmatprep.subr.bf16.mxu0 0
          %720 = vmatpush1.bf16.msra.mxu0 0
          %721 = vmatprep.subr.bf16.mxu0 0
          %722 = vmatpush1.bf16.msra.mxu0 0
          %723 = vmatprep.subr.bf16.mxu0 0
          %724 = vmatpush1.bf16.msra.mxu0 0
          %725 = vmatprep.subr.bf16.mxu0 0
          %726 = vmatpush1.bf16.msra.mxu0 0
          %727 = vmatprep.subr.bf16.mxu0 0
          %728 = vmatpush1.bf16.msra.mxu0 0
          %729 = vmatprep.subr.bf16.mxu0 0
          %730 = vmatpush1.bf16.msra.mxu0 0
          %731 = vmatprep.subr.bf16.mxu0 0
          %732 = vmatpush1.bf16.msra.mxu0 0
          %733 = vmatprep.subr.bf16.mxu0 0
          %734 = vmatpush1.bf16.msra.mxu0 0
          %735 = vmatprep.subr.bf16.mxu0 0
          %736 = vmatpush1.bf16.msra.mxu0 0
          %737 = vmatprep.subr.bf16.mxu0 0
          %738 = vmatpush1.bf16.msra.mxu0 0
          %739 = vmatprep.subr.bf16.mxu0 0
          %740 = vmatpush1.bf16.msra.mxu0 0
          %741 = vmatprep.subr.bf16.mxu0 0
          %742 = vmatpush1.bf16.msra.mxu0 0
          %743 = vmatprep.mubr.bf16.mxu0 0
          %744 = vmatmul.mubr.bf16.gmra.mrb[0].mxu0 %v709
          %v745 = vpop.f32.mrb[0].mxu0
          %v746 = vadd.f32 0.0, %v745
          %v747 = vpop.f32.mrb[0].mxu0
          %v748 = vpop.f32.mrb[0].mxu0
          %v749 = vpop.f32.mrb[0].mxu0
          %750 = vdwg.mxu0
          %v751 = vadd.f32 %v689, %v746
          %v752 = vld [vmem:[#allocation4] sm:$0xff]
          %v753 = vxor.u32 %v685, 2147483648
          %v754 = vmul.f32 %v753, 1.442695
          %v755 = vpow.pop %v754
          %v756 = vadd.f32 %v755, 1.0
          %v757 = vrcp.pop %v756
          %v758 = vmul.f32 1.0, %v757
          %v759 = vtanh.pop %v685
          %761 = vrot.lane.b32.xlu0 %v752, 32
          %v762 = vpop.permute.xlu0 %761
          %v764 = vmul.f32 %v758, %v762
          %766 = vrot.lane.b32.xlu0 %v759, 32
          %v767 = vpop.permute.xlu0 %766
          %v769 = vmul.f32 %v758, %v767
          %771 = vrot.lane.b32.xlu0 %v769, 32
          %v772 = vpop.permute.xlu0 %771
          %v774 = vadd.f32 %v764, %v772
          %v775 = vtanh.pop %v774
          %777 = vrot.lane.b32.xlu0 %v775, 32
          %v778 = vpop.permute.xlu0 %777
          %v780 = vmul.f32 %v758, %v778
          %v781 = vld [vmem:[#allocation6] sm:$0xff]
          %v782 = vxor.u32 %v751, 2147483648
          %v783 = vmul.f32 %v782, 1.442695
          %v784 = vpow.pop %v783
          %v785 = vadd.f32 %v784, 1.0
          %v786 = vrcp.pop %v785
          %v787 = vmul.f32 1.0, %v786
          %v788 = vtanh.pop %v751
          %790 = vrot.lane.b32.xlu0 %v781, 32
          %v791 = vpop.permute.xlu0 %790
          %v793 = vmul.f32 %v787, %v791
          %795 = vrot.lane.b32.xlu0 %v788, 32
          %v796 = vpop.permute.xlu0 %795
          %v798 = vmul.f32 %v787, %v796
          %800 = vrot.lane.b32.xlu0 %v798, 32
          %v801 = vpop.permute.xlu0 %800
          %v803 = vadd.f32 %v793, %v801
          %v804 = vtanh.pop %v803
          %806 = vrot.lane.b32.xlu0 %v804, 32
          %v807 = vpop.permute.xlu0 %806
          %v809 = vmul.f32 %v787, %v807
          %811 = vrot.lane.b32.xlu0 %v780, 64
          %v812 = vpop.permute.xlu0 %811
          %814 = vst.msk [vmem:[#allocation3] sm:$0xff] %vm607, %v812
          %816 = vrot.lane.b32.xlu0 %v774, 96
          %v817 = vpop.permute.xlu0 %816
          %819 = vst.msk [vmem:[#allocation4] sm:$0xff] %vm607, %v817
          %821 = vrot.lane.b32.xlu0 %v809, 64
          %v822 = vpop.permute.xlu0 %821
          %824 = vst.msk [vmem:[#allocation5] sm:$0xff] %vm607, %v822
          %826 = vrot.lane.b32.xlu0 %v803, 96
          %v827 = vpop.permute.xlu0 %826
          %829 = vst.msk [vmem:[#allocation6] sm:$0xff] %vm607, %v827
          %v830 = vpack.c.bf16 %v780, %v780
          %v832 = vunpack.c.l.b16 %v830
          %v833 = vpack.c.b16 %v832, %v832
          %834 = vrot.lane.b32.xlu0 %v833, 64
          %v835 = vpop.permute.xlu0 %834
          %s837 = smul.addr %s618, 4
          %s838 = scalar_lea.vmem %s319, %s837 [#allocation8]
          %vm839 = vcmask 257024
          %840 = vst.msk [vmem:[%s838] sm:$0xf] %vm839, %v835
          %v841 = vpack.c.bf16 %v809, %v809
          %v843 = vunpack.c.l.b16 %v841
          %v844 = vpack.c.b16 %v843, %v843
          %845 = vrot.lane.b32.xlu0 %v844, 96
          %v846 = vpop.permute.xlu0 %845
          %s848 = smul.addr %s619, 4
          %s849 = scalar_lea.vmem %s319, %s848 [#allocation8]
          %vm850 = vcmask 519424
          %851 = vst.msk [vmem:[%s849] sm:$0xf] %vm850, %v846
          %s852 = sadd.s32 %s618, 1
          %s853 = ssub.s32 14, %s618
          %s854 = smul.u32 %s852, 2
          %s855 = smul.addr %s854, 8
          %s856 = scalar_lea.vmem [#allocation2], %s855
          %v857 = vld [vmem:[%s856] sm:$0xff]
          %v858 = vld [vmem:[#allocation3] sm:$0xff]
          %v859 = vpack.c.bf16 %v858, %v858
          %v860 = vld [vmem:[%s2] sm:$0xf]
          %v861 = vld [vmem:[%s2 + $0x4] sm:$0xf]
          %v862 = vld [vmem:[%s2 + $0x8] sm:$0xf]
          %v863 = vld [vmem:[%s2 + $0xc] sm:$0xf]
          %v868 = vunpack.c.l.b16 %v860
          %v869 = vunpack.c.l.b16 %v861
          %v870 = vunpack.c.l.b16 %v862
          %v871 = vunpack.c.l.b16 %v863
          %v872 = vpack.c.b16 %v869, %v868
          %v873 = vpack.c.b16 %v871, %v870
          %v877 = vsel %vm607, %v859, 0
          %879 = vmatprep.subr.bf16.mxu0 0
          %880 = vmatpush1.bf16.msra.mxu0 %v872
          %881 = vmatprep.subr.bf16.mxu0 0
          %882 = vmatpush1.bf16.msra.mxu0 %v873
          %883 = vmatprep.subr.bf16.mxu0 0
          %884 = vmatpush1.bf16.msra.mxu0 0
          %885 = vmatprep.subr.bf16.mxu0 0
          %886 = vmatpush1.bf16.msra.mxu0 0
          %887 = vmatprep.subr.bf16.mxu0 0
          %888 = vmatpush1.bf16.msra.mxu0 0
          %889 = vmatprep.subr.bf16.mxu0 0
          %890 = vmatpush1.bf16.msra.mxu0 0
          %891 = vmatprep.subr.bf16.mxu0 0
          %892 = vmatpush1.bf16.msra.mxu0 0
          %893 = vmatprep.subr.bf16.mxu0 0
          %894 = vmatpush1.bf16.msra.mxu0 0
          %895 = vmatprep.subr.bf16.mxu0 0
          %896 = vmatpush1.bf16.msra.mxu0 0
          %897 = vmatprep.subr.bf16.mxu0 0
          %898 = vmatpush1.bf16.msra.mxu0 0
          %899 = vmatprep.subr.bf16.mxu0 0
          %900 = vmatpush1.bf16.msra.mxu0 0
          %901 = vmatprep.subr.bf16.mxu0 0
          %902 = vmatpush1.bf16.msra.mxu0 0
          %903 = vmatprep.subr.bf16.mxu0 0
          %904 = vmatpush1.bf16.msra.mxu0 0
          %905 = vmatprep.subr.bf16.mxu0 0
          %906 = vmatpush1.bf16.msra.mxu0 0
          %907 = vmatprep.subr.bf16.mxu0 0
          %908 = vmatpush1.bf16.msra.mxu0 0
          %909 = vmatprep.subr.bf16.mxu0 0
          %910 = vmatpush1.bf16.msra.mxu0 0
          %911 = vmatprep.mubr.bf16.mxu0 0
          %912 = vmatmul.mubr.bf16.gmra.mrb[0].mxu0 %v877
          %v913 = vpop.f32.mrb[0].mxu0
          %v914 = vadd.f32 0.0, %v913
          %v915 = vpop.f32.mrb[0].mxu0
          %v916 = vpop.f32.mrb[0].mxu0
          %v917 = vpop.f32.mrb[0].mxu0
          %918 = vdwg.mxu0
          %v919 = vadd.f32 %v857, %v914
          %s920 = smul.u32 %s853, 2
          %s921 = smul.addr %s920, 8
          %s922 = scalar_lea.vmem [#allocation2], %s921
          %v923 = vld [vmem:[%s922 + $0x8] sm:$0xff]
          %v924 = vld [vmem:[#allocation5] sm:$0xff]
          %v925 = vpack.c.bf16 %v924, %v924
          %v926 = vld [vmem:[%s3] sm:$0xf]
          %v927 = vld [vmem:[%s3 + $0x4] sm:$0xf]
          %v928 = vld [vmem:[%s3 + $0x8] sm:$0xf]
          %v929 = vld [vmem:[%s3 + $0xc] sm:$0xf]
          %v934 = vunpack.c.l.b16 %v926
          %v935 = vunpack.c.l.b16 %v927
          %v936 = vunpack.c.l.b16 %v928
          %v937 = vunpack.c.l.b16 %v929
          %v938 = vpack.c.b16 %v935, %v934
          %v939 = vpack.c.b16 %v937, %v936
          %v943 = vsel %vm607, %v925, 0
          %945 = vmatprep.subr.bf16.mxu0 0
          %946 = vmatpush1.bf16.msra.mxu0 %v938
          %947 = vmatprep.subr.bf16.mxu0 0
          %948 = vmatpush1.bf16.msra.mxu0 %v939
          %949 = vmatprep.subr.bf16.mxu0 0
          %950 = vmatpush1.bf16.msra.mxu0 0
          %951 = vmatprep.subr.bf16.mxu0 0
          %952 = vmatpush1.bf16.msra.mxu0 0
          %953 = vmatprep.subr.bf16.mxu0 0
          %954 = vmatpush1.bf16.msra.mxu0 0
          %955 = vmatprep.subr.bf16.mxu0 0
          %956 = vmatpush1.bf16.msra.mxu0 0
          %957 = vmatprep.subr.bf16.mxu0 0
          %958 = vmatpush1.bf16.msra.mxu0 0
          %959 = vmatprep.subr.bf16.mxu0 0
          %960 = vmatpush1.bf16.msra.mxu0 0
          %961 = vmatprep.subr.bf16.mxu0 0
          %962 = vmatpush1.bf16.msra.mxu0 0
          %963 = vmatprep.subr.bf16.mxu0 0
          %964 = vmatpush1.bf16.msra.mxu0 0
          %965 = vmatprep.subr.bf16.mxu0 0
          %966 = vmatpush1.bf16.msra.mxu0 0
          %967 = vmatprep.subr.bf16.mxu0 0
          %968 = vmatpush1.bf16.msra.mxu0 0
          %969 = vmatprep.subr.bf16.mxu0 0
          %970 = vmatpush1.bf16.msra.mxu0 0
          %971 = vmatprep.subr.bf16.mxu0 0
          %972 = vmatpush1.bf16.msra.mxu0 0
          %973 = vmatprep.subr.bf16.mxu0 0
          %974 = vmatpush1.bf16.msra.mxu0 0
          %975 = vmatprep.subr.bf16.mxu0 0
          %976 = vmatpush1.bf16.msra.mxu0 0
          %977 = vmatprep.mubr.bf16.mxu0 0
          %978 = vmatmul.mubr.bf16.gmra.mrb[0].mxu0 %v943
          %v979 = vpop.f32.mrb[0].mxu0
          %v980 = vadd.f32 0.0, %v979
          %v981 = vpop.f32.mrb[0].mxu0
          %v982 = vpop.f32.mrb[0].mxu0
          %v983 = vpop.f32.mrb[0].mxu0
          %984 = vdwg.mxu0
          %v985 = vadd.f32 %v923, %v980
          %v986 = vld [vmem:[#allocation4] sm:$0xff]
          %v987 = vxor.u32 %v919, 2147483648
          %v988 = vmul.f32 %v987, 1.442695
          %v989 = vpow.pop %v988
          %v990 = vadd.f32 %v989, 1.0
          %v991 = vrcp.pop %v990
          %v992 = vmul.f32 1.0, %v991
          %v993 = vtanh.pop %v919
          %995 = vrot.lane.b32.xlu0 %v986, 32
          %v996 = vpop.permute.xlu0 %995
          %v998 = vmul.f32 %v992, %v996
          %1000 = vrot.lane.b32.xlu0 %v993, 32
          %v1001 = vpop.permute.xlu0 %1000
          %v1003 = vmul.f32 %v992, %v1001
          %1005 = vrot.lane.b32.xlu0 %v1003, 32
          %v1006 = vpop.permute.xlu0 %1005
          %v1008 = vadd.f32 %v998, %v1006
          %v1009 = vtanh.pop %v1008
          %1011 = vrot.lane.b32.xlu0 %v1009, 32
          %v1012 = vpop.permute.xlu0 %1011
          %v1014 = vmul.f32 %v992, %v1012
          %v1015 = vld [vmem:[#allocation6] sm:$0xff]
          %v1016 = vxor.u32 %v985, 2147483648
          %v1017 = vmul.f32 %v1016, 1.442695
          %v1018 = vpow.pop %v1017
          %v1019 = vadd.f32 %v1018, 1.0
          %v1020 = vrcp.pop %v1019
          %v1021 = vmul.f32 1.0, %v1020
          %v1022 = vtanh.pop %v985
          %1024 = vrot.lane.b32.xlu0 %v1015, 32
          %v1025 = vpop.permute.xlu0 %1024
          %v1027 = vmul.f32 %v1021, %v1025
          %1029 = vrot.lane.b32.xlu0 %v1022, 32
          %v1030 = vpop.permute.xlu0 %1029
          %v1032 = vmul.f32 %v1021, %v1030
          %1034 = vrot.lane.b32.xlu0 %v1032, 32
          %v1035 = vpop.permute.xlu0 %1034
          %v1037 = vadd.f32 %v1027, %v1035
          %v1038 = vtanh.pop %v1037
          %1040 = vrot.lane.b32.xlu0 %v1038, 32
          %v1041 = vpop.permute.xlu0 %1040
          %v1043 = vmul.f32 %v1021, %v1041
          %1045 = vrot.lane.b32.xlu0 %v1014, 64
          %v1046 = vpop.permute.xlu0 %1045
          %1048 = vst.msk [vmem:[#allocation3] sm:$0xff] %vm607, %v1046
          %1050 = vrot.lane.b32.xlu0 %v1008, 96
          %v1051 = vpop.permute.xlu0 %1050
          %1053 = vst.msk [vmem:[#allocation4] sm:$0xff] %vm607, %v1051
          %1055 = vrot.lane.b32.xlu0 %v1043, 64
          %v1056 = vpop.permute.xlu0 %1055
          %1058 = vst.msk [vmem:[#allocation5] sm:$0xff] %vm607, %v1056
          %1060 = vrot.lane.b32.xlu0 %v1037, 96
          %v1061 = vpop.permute.xlu0 %1060
          %1063 = vst.msk [vmem:[#allocation6] sm:$0xff] %vm607, %v1061
          %v1064 = vpack.c.bf16 %v1014, %v1014
          %v1066 = vunpack.c.l.b16 %v1064
          %v1067 = vpack.c.b16 %v1066, %v1066
          %1068 = vrot.lane.b32.xlu0 %v1067, 64
          %v1069 = vpop.permute.xlu0 %1068
          %s1071 = smul.addr %s852, 4
          %s1072 = scalar_lea.vmem %s319, %s1071 [#allocation8]
          %1073 = vst.msk [vmem:[%s1072] sm:$0xf] %vm839, %v1069
          %v1074 = vpack.c.bf16 %v1043, %v1043
          %v1076 = vunpack.c.l.b16 %v1074
          %v1077 = vpack.c.b16 %v1076, %v1076
          %1078 = vrot.lane.b32.xlu0 %v1077, 96
          %v1079 = vpop.permute.xlu0 %1078
          %s1081 = smul.addr %s853, 4
          %s1082 = scalar_lea.vmem %s319, %s1081 [#allocation8]
          %1083 = vst.msk [vmem:[%s1082] sm:$0xf] %vm850, %v1079
        $region86: #{_lambda_.2} parent=76 // loop_footer
          %s617 = sadd.s32 1, %s613
        $region87: #{_lambda_.2} parent=76 // loop_footer_branch
          %612 = sbr.rel target = $region83
        $region88: #{_lambda_.2} parent=76 // loop_exit
          _
        %s1084 = sand.u32 %s134, 1
        %s1085 = sand.u32 %s134, 1
        %s1086 = smul.addr %s1085, 64
        %s1087 = scalar_lea.vmem [#allocation8], %s1086
        // Predicated region
        $region89: #{_lambda_.2} parent=76 // pred_check
          %p1088 = pneg %p144
        $region90: #{_lambda_.2} parent=76 // pred_check_branch
          %1090 = sbr.rel (%p1088) target = $region92
        $region91: #{_lambda_.2} parent=76 // pred_region
          %s1091 = smul.addr %s16, 4
          %s1092 = scalar_lea.vmem %s5, %s1091
          // Predicated region
          $region93: #{_lambda_.2} parent=91 // pred_check
            _
          $region94: #{_lambda_.2} parent=91 // pred_check_branch
            %1094 = sbr.rel (0) target = $region96
          $region95: #{_lambda_.2} parent=91 // pred_region
            // Predicated region
            $region97: #{_lambda_.2} parent=95 // pred_check
              _
            $region98: #{_lambda_.2} parent=95 // pred_check_branch
              %1096 = sbr.rel target = $region100
            $region99: #{_lambda_.2} parent=95 // pred_region
              // Predicated region
              $region112: #{_lambda_.2} parent=99 // pred_check
                _
              $region113: #{_lambda_.2} parent=99 // pred_check_branch
                %1141 = sbr.rel (0) target = $region115
              $region114: #{_lambda_.2} parent=99 // pred_region
                loop: start=0, step=1, limit=1
                $region116: #{_lambda_.2} parent=114 // loop_pre_header
                  _
                $region117: #{_lambda_.2} parent=114 // loop_header
                  %s1143 = sphi 0, %s1147
                  %p1144 = scmp.ge.s32.totalorder %s1143, 1
                  %s1148 = sphi %s1087, %s1087
                  %s1149 = sphi %s1092, %s1092
                $region118: #{_lambda_.2} parent=114 // loop_header_branch
                  %1146 = sbr.rel (%p1144) target = $region122
                $region119: #{_lambda_.2} parent=114 // loop_body
                  _
                $region120: #{_lambda_.2} parent=114 // loop_footer
                  %s1147 = sadd.s32 1, %s1143
                $region121: #{_lambda_.2} parent=114 // loop_footer_branch
                  %1142 = sbr.rel target = $region117
                $region122: #{_lambda_.2} parent=114 // loop_exit
                  _
                loop: start=0, step=1, limit=1
                $region123: #{_lambda_.2} parent=114 // loop_pre_header
                  _
                $region124: #{_lambda_.2} parent=114 // loop_header
                  %s1152 = sphi 0, %s1156
                  %p1153 = scmp.ge.s32.totalorder %s1152, 1
                  %s1157 = sphi %s1087, %s1087
                  %s1158 = sphi %s1092, %s1092
                $region125: #{_lambda_.2} parent=114 // loop_header_branch
                  %1155 = sbr.rel (%p1153) target = $region129
                $region126: #{_lambda_.2} parent=114 // loop_body
                  %v1159 = vld [vmem:[%s1157] sm:$0xf]
                  %1160 = vst [vmem:[%s1158] sm:$0xf] %v1159
                  %v1161 = vld [vmem:[%s1157 + $0x4] sm:$0xf]
                  %1162 = vst [vmem:[%s1158 + $0x8] sm:$0xf] %v1161
                  %v1163 = vld [vmem:[%s1157 + $0x8] sm:$0xf]
                  %1164 = vst [vmem:[%s1158 + $0x10] sm:$0xf] %v1163
                  %v1165 = vld [vmem:[%s1157 + $0xc] sm:$0xf]
                  %1166 = vst [vmem:[%s1158 + $0x18] sm:$0xf] %v1165
                  %v1167 = vld [vmem:[%s1157 + $0x10] sm:$0xf]
                  %1168 = vst [vmem:[%s1158 + $0x20] sm:$0xf] %v1167
                  %v1169 = vld [vmem:[%s1157 + $0x14] sm:$0xf]
                  %1170 = vst [vmem:[%s1158 + $0x28] sm:$0xf] %v1169
                  %v1171 = vld [vmem:[%s1157 + $0x18] sm:$0xf]
                  %1172 = vst [vmem:[%s1158 + $0x30] sm:$0xf] %v1171
                  %v1173 = vld [vmem:[%s1157 + $0x1c] sm:$0xf]
                  %1174 = vst [vmem:[%s1158 + $0x38] sm:$0xf] %v1173
                  %v1175 = vld [vmem:[%s1157 + $0x20] sm:$0xf]
                  %1176 = vst [vmem:[%s1158 + $0x40] sm:$0xf] %v1175
                  %v1177 = vld [vmem:[%s1157 + $0x24] sm:$0xf]
                  %1178 = vst [vmem:[%s1158 + $0x48] sm:$0xf] %v1177
                  %v1179 = vld [vmem:[%s1157 + $0x28] sm:$0xf]
                  %1180 = vst [vmem:[%s1158 + $0x50] sm:$0xf] %v1179
                  %v1181 = vld [vmem:[%s1157 + $0x2c] sm:$0xf]
                  %1182 = vst [vmem:[%s1158 + $0x58] sm:$0xf] %v1181
                  %v1183 = vld [vmem:[%s1157 + $0x30] sm:$0xf]
                  %1184 = vst [vmem:[%s1158 + $0x60] sm:$0xf] %v1183
                  %v1185 = vld [vmem:[%s1157 + $0x34] sm:$0xf]
                  %1186 = vst [vmem:[%s1158 + $0x68] sm:$0xf] %v1185
                  %v1187 = vld [vmem:[%s1157 + $0x38] sm:$0xf]
                  %1188 = vst [vmem:[%s1158 + $0x70] sm:$0xf] %v1187
                  %v1189 = vld [vmem:[%s1157 + $0x3c] sm:$0xf]
                  %1190 = vst [vmem:[%s1158 + $0x78] sm:$0xf] %v1189
                $region127: #{_lambda_.2} parent=114 // loop_footer
                  %s1156 = sadd.s32 1, %s1152
                $region128: #{_lambda_.2} parent=114 // loop_footer_branch
                  %1151 = sbr.rel target = $region124
                $region129: #{_lambda_.2} parent=114 // loop_exit
                  _
              $region115: #{_lambda_.2} parent=99 // pred_fallthru
                _
            $region100: #{_lambda_.2} parent=95 // pred_fallthru
              _
            // Predicated region
            $region101: #{_lambda_.2} parent=95 // pred_check
              _
            $region102: #{_lambda_.2} parent=95 // pred_check_branch
              %1098 = sbr.rel (0) target = $region104
            $region103: #{_lambda_.2} parent=95 // pred_region
              loop: start=0, step=1, limit=1
              $region105: #{_lambda_.2} parent=103 // loop_pre_header
                _
              $region106: #{_lambda_.2} parent=103 // loop_header
                %s1101 = sphi 0, %s1105
                %p1102 = scmp.ge.s32.totalorder %s1101, 1
                %s1106 = sphi %s1087, %s1087
                %s1107 = sphi %s1092, %s1092
              $region107: #{_lambda_.2} parent=103 // loop_header_branch
                %1104 = sbr.rel (%p1102) target = $region111
              $region108: #{_lambda_.2} parent=103 // loop_body
                %v1108 = vld [vmem:[%s1106] sm:$0xf]
                %1109 = vst [vmem:[%s1107] sm:$0xf] %v1108
                %v1110 = vld [vmem:[%s1106 + $0x4] sm:$0xf]
                %1111 = vst [vmem:[%s1107 + $0x8] sm:$0xf] %v1110
                %v1112 = vld [vmem:[%s1106 + $0x8] sm:$0xf]
                %1113 = vst [vmem:[%s1107 + $0x10] sm:$0xf] %v1112
                %v1114 = vld [vmem:[%s1106 + $0xc] sm:$0xf]
                %1115 = vst [vmem:[%s1107 + $0x18] sm:$0xf] %v1114
                %v1116 = vld [vmem:[%s1106 + $0x10] sm:$0xf]
                %1117 = vst [vmem:[%s1107 + $0x20] sm:$0xf] %v1116
                %v1118 = vld [vmem:[%s1106 + $0x14] sm:$0xf]
                %1119 = vst [vmem:[%s1107 + $0x28] sm:$0xf] %v1118
                %v1120 = vld [vmem:[%s1106 + $0x18] sm:$0xf]
                %1121 = vst [vmem:[%s1107 + $0x30] sm:$0xf] %v1120
                %v1122 = vld [vmem:[%s1106 + $0x1c] sm:$0xf]
                %1123 = vst [vmem:[%s1107 + $0x38] sm:$0xf] %v1122
                %v1124 = vld [vmem:[%s1106 + $0x20] sm:$0xf]
                %1125 = vst [vmem:[%s1107 + $0x40] sm:$0xf] %v1124
                %v1126 = vld [vmem:[%s1106 + $0x24] sm:$0xf]
                %1127 = vst [vmem:[%s1107 + $0x48] sm:$0xf] %v1126
                %v1128 = vld [vmem:[%s1106 + $0x28] sm:$0xf]
                %1129 = vst [vmem:[%s1107 + $0x50] sm:$0xf] %v1128
                %v1130 = vld [vmem:[%s1106 + $0x2c] sm:$0xf]
                %1131 = vst [vmem:[%s1107 + $0x58] sm:$0xf] %v1130
                %v1132 = vld [vmem:[%s1106 + $0x30] sm:$0xf]
                %1133 = vst [vmem:[%s1107 + $0x60] sm:$0xf] %v1132
                %v1134 = vld [vmem:[%s1106 + $0x34] sm:$0xf]
                %1135 = vst [vmem:[%s1107 + $0x68] sm:$0xf] %v1134
                %v1136 = vld [vmem:[%s1106 + $0x38] sm:$0xf]
                %1137 = vst [vmem:[%s1107 + $0x70] sm:$0xf] %v1136
                %v1138 = vld [vmem:[%s1106 + $0x3c] sm:$0xf]
                %1139 = vst [vmem:[%s1107 + $0x78] sm:$0xf] %v1138
              $region109: #{_lambda_.2} parent=103 // loop_footer
                %s1105 = sadd.s32 1, %s1101
              $region110: #{_lambda_.2} parent=103 // loop_footer_branch
                %1100 = sbr.rel target = $region106
              $region111: #{_lambda_.2} parent=103 // loop_exit
                _
            $region104: #{_lambda_.2} parent=95 // pred_fallthru
              _
          $region96: #{_lambda_.2} parent=91 // pred_fallthru
            _
          %1191 = vnop
        $region92: #{_lambda_.2} parent=76 // pred_fallthru
          _
      $region77: #{_lambda_.2} parent=5 // pred_fallthru
        _
      %p1192 = scmp.le.s32.totalorder 2, %s11
      // Predicated region
      $region130: #{_lambda_.2} parent=5 // pred_check
        %p1193 = pneg %p1192
      $region131: #{_lambda_.2} parent=5 // pred_check_branch
        %1195 = sbr.rel (%p1193) target = $region133
      $region132: #{_lambda_.2} parent=5 // pred_region
        %s1196 = ssub.s32 %s11, 2
        // Predicated region
        $region134: #{_lambda_.2} parent=132 // pred_check
          %p1197 = pneg %p150
        $region135: #{_lambda_.2} parent=132 // pred_check_branch
          %1199 = sbr.rel (%p1197) target = $region137
        $region136: #{_lambda_.2} parent=132 // pred_region
          %s1200 = sand.u32 %s135, 1
          %s1201 = sand.u32 %s135, 1
          %s1202 = smul.addr %s1201, 64
          %s1203 = scalar_lea.vmem [#allocation8], %s1202
        $region137: #{_lambda_.2} parent=132 // pred_fallthru
          _
      $region133: #{_lambda_.2} parent=5 // pred_fallthru
        _
    $region6: #{_lambda_.2} parent=1 // loop_footer
      %s15 = sadd.s32 1, %s11
    $region7: #{_lambda_.2} parent=1 // loop_footer_branch
      %10 = sbr.rel target = $region3
    $region8: #{_lambda_.2} parent=1 // loop_exit
      _

</llo_original>
